<compile_context>
chip_gen: v5e
topology: v5e:2x2
jax: 0.10.0
libtpu: 0.0.40
codegen_flags: <defaults>
</compile_context>

<pallas_src>
import jax
import jax.numpy as jnp
from jax.experimental import pallas as pl
from jax.experimental.pallas import tpu as pltpu

IN_DIM = 11
HIDDEN = 1500
HIDDEN_PAD = 1536      # 1500 padded up to a multiple of 128/256
OUT_DIM = 1
TILE_N = 768           # layer-2 output-column tile: 2 grid steps (1 per v7x core)


def mlp_kernel(x_ref, w1_ref, b1_ref, w2_ref, s2_ref, b2_ref, w3_ref, o_ref):
    # layer_1: Linear(11 -> H) + ReLU.  Tiny (~0.3 MFLOP at B=8), so it is
    # recomputed per column tile; this lets the grid axis be "parallel"
    # (both v7x TensorCores) with no cross-step state.
    h1 = jnp.dot(x_ref[...], w1_ref[...], preferred_element_type=jnp.float32)
    h1 = jnp.maximum(h1 + b1_ref[...], 0.0).astype(jnp.bfloat16)

    # layer_2 column tile: int8 weights cast to bf16 on the VPU (exact values),
    # bf16 x bf16 matmul with f32 accumulation on the MXU, per-column dequant
    # scale applied afterwards.
    z = jnp.dot(h1, w2_ref[...].astype(jnp.bfloat16),
                preferred_element_type=jnp.float32)
    z = z * s2_ref[...] + b2_ref[...]
    h2 = 1.0 / (1.0 + jnp.exp(-z))      # exp on EUP; fully hidden under the w2 DMA

    # output_layer partial sum for this tile: w3 passed as a (1, H) row, so this
    # is a VPU multiply + lane reduction (no degenerate (TILE_N, 1) MXU op).
    o_ref[0] = jnp.sum(h2 * w3_ref[...], axis=-1, keepdims=True)


@jax.jit
def net_forward(x, params):
    w1, b1, w2_q, s2, b2, w3_row, b3 = params
    B = x.shape[0]
    H = w1.shape[1]                      # HIDDEN_PAD
    n_tiles = H // TILE_N

    cost = pl.CostEstimate(
        flops=2 * B * (IN_DIM * H + H * H + H * OUT_DIM),
        transcendentals=B * H,
        bytes_accessed=(x.size * 4 + w1.size * 4 + b1.size * 4
                        + w2_q.size * 1 + s2.size * 4 + b2.size * 4
                        + w3_row.size * 4 + n_tiles * B * OUT_DIM * 4),
    )

    grid_spec = pltpu.PrefetchScalarGridSpec(
        num_scalar_prefetch=0,
        grid=(n_tiles,),
        in_specs=[
            pl.BlockSpec((B, IN_DIM), lambda j: (0, 0)),            # x       (resident)
            pl.BlockSpec((IN_DIM, H), lambda j: (0, 0)),            # w1      (resident)
            pl.BlockSpec((1, H), lambda j: (0, 0)),                 # b1      (resident)
            pl.BlockSpec((None, H, TILE_N), lambda j: (j, 0, 0)),   # w2 tile (contiguous DMA)
            pl.BlockSpec((1, TILE_N), lambda j: (0, j)),            # s2 tile (dequant scale)
            pl.BlockSpec((1, TILE_N), lambda j: (0, j)),            # b2 tile
            pl.BlockSpec((1, TILE_N), lambda j: (0, j)),            # w3 row tile
        ],
        out_specs=pl.BlockSpec((1, B, OUT_DIM), lambda j: (j, 0, 0)),
    )

    partials = pl.pallas_call(
        mlp_kernel,
        out_shape=jax.ShapeDtypeStruct((n_tiles, B, OUT_DIM), jnp.float32),
        grid_spec=grid_spec,
        compiler_params=pltpu.CompilerParams(
            # Column tiles are independent partial sums -> parallel (uses both
            # TensorCores on v7x; plain sequential steps on v5e/v6e).
            dimension_semantics=("parallel",),
        ),
        cost_estimate=cost,
    )(x, w1, b1, w2_q, s2, b2, w3_row)

    return jnp.sum(partials, axis=0) + b3


def init_params(key):
    """nn.Linear-style U(-1/sqrt(fan_in), 1/sqrt(fan_in)) init, zero-padded
    1500 -> 1536, with w2 int8-quantized (per-output-column scale) and
    pre-tiled as (n_tiles, H, TILE_N) for contiguous per-tile DMAs."""
    def linear(key, fan_in, fan_out):
        kw, kb = jax.random.split(key)
        bound = 1.0 / jnp.sqrt(jnp.float32(fan_in))
        w = jax.random.uniform(kw, (fan_in, fan_out), jnp.float32, -bound, bound)
        b = jax.random.uniform(kb, (1, fan_out), jnp.float32, -bound, bound)
        return w, b

    k1, k2, k3 = jax.random.split(key, 3)
    w1, b1 = linear(k1, IN_DIM, HIDDEN)
    w2, b2 = linear(k2, HIDDEN, HIDDEN)
    w3, b3 = linear(k3, HIDDEN, OUT_DIM)

    pad = HIDDEN_PAD - HIDDEN
    w1 = jnp.pad(w1, ((0, 0), (0, pad)))
    b1 = jnp.pad(b1, ((0, 0), (0, pad)))
    w2 = jnp.pad(w2, ((0, pad), (0, pad)))
    b2 = jnp.pad(b2, ((0, 0), (0, pad)))
    w3 = jnp.pad(w3, ((0, pad), (0, 0)))

    # Symmetric int8 quantization of w2 with a per-output-column scale.
    amax = jnp.max(jnp.abs(w2), axis=0, keepdims=True)          # (1, H)
    s2 = jnp.maximum(amax, 1e-8) / 127.0                        # (1, H) f32
    w2_q = jnp.clip(jnp.round(w2 / s2), -127.0, 127.0).astype(jnp.int8)

    # Pre-tile: (H, H) -> (n_tiles, H, TILE_N), tile j == w2[:, j*TN:(j+1)*TN].
    n_tiles = HIDDEN_PAD // TILE_N
    w2_q = w2_q.reshape(HIDDEN_PAD, n_tiles, TILE_N).transpose(1, 0, 2)

    w3_row = w3.T                                                # (1, H)
    params = (w1, b1, w2_q, s2, b2, w3_row, b3)
    return params, w2                                            # keep f32 w2 for error bound


def reference_forward_quantized(x, params):
    """Pure-JAX reference using exactly the kernel's quantized math."""
    w1, b1, w2_q, s2, b2, w3_row, b3 = params
    H = w1.shape[1]
    w2_q2d = w2_q.transpose(1, 0, 2).reshape(H, H)
    h1 = jnp.maximum(jnp.dot(x, w1) + b1, 0.0).astype(jnp.bfloat16)
    z = jnp.dot(h1, w2_q2d.astype(jnp.bfloat16),
                preferred_element_type=jnp.float32) * s2 + b2
    h2 = 1.0 / (1.0 + jnp.exp(-z))
    return jnp.dot(h2, w3_row.T, preferred_element_type=jnp.float32) + b3


def reference_forward_f32(x, w2_f32, params):
    """Pure-f32 reference (PyTorch-equivalent math) to bound the int8/bf16 error."""
    w1, b1, _, _, b2, w3_row, b3 = params
    h1 = jnp.maximum(jnp.dot(x, w1) + b1, 0.0)
    z = jnp.dot(h1, w2_f32) + b2
    h2 = 1.0 / (1.0 + jnp.exp(-z))
    return jnp.dot(h2, w3_row.T) + b3


if __name__ == "__main__":
    key = jax.random.PRNGKey(0)
    kp, kx = jax.random.split(key)

    params, w2_f32 = init_params(kp)
    B = 8
    x = jax.random.normal(kx, (B, IN_DIM), jnp.float32)

    out = jax.block_until_ready(net_forward(x, params))
    assert out.shape == (B, OUT_DIM)

    # Tight check: kernel vs. pure-JAX reference using the same quantized math.
    ref_q = reference_forward_quantized(x, params)
    assert jnp.allclose(out, ref_q, atol=2e-3, rtol=2e-3), "mismatch vs quantized reference"

    # Explicit precision decision: bound the int8-w2 / bf16-h1 deviation from
    # the full-f32 PyTorch-equivalent forward (expected O(1e-3)).
    ref_f = reference_forward_f32(x, w2_f32, params)
    assert jnp.allclose(out, ref_f, atol=2e-2), "quantization error larger than expected"

    print("KERNEL_OK")
</pallas_src>

<mosaic_0001>
module attributes {stable_mosaic.version = 11 : i64} {
  func.func @mlp_kernel(%arg0: i32, %arg1: memref<8x11xf32, #tpu.memory_space<vmem>>, %arg2: memref<11x1536xf32, #tpu.memory_space<vmem>>, %arg3: memref<1x1536xf32, #tpu.memory_space<vmem>>, %arg4: memref<1x1536x768xi8, #tpu.memory_space<vmem>>, %arg5: memref<1x768xf32, #tpu.memory_space<vmem>>, %arg6: memref<1x768xf32, #tpu.memory_space<vmem>>, %arg7: memref<1x768xf32, #tpu.memory_space<vmem>>, %arg8: memref<1x8x1xf32, #tpu.memory_space<vmem>>) attributes {dimension_semantics = [#tpu.dimension_semantics<parallel>], iteration_bounds = array<i64: 2>, scalar_prefetch = 0 : i64, scratch_operands = 0 : i64, tpu.core_type = #tpu.core_type<tc>, window_params = [{pipeline_mode = #tpu.pipeline_mode<synchronous>, transform_indices = @transform_0, window_bounds = array<i64: 8, 11>}, {pipeline_mode = #tpu.pipeline_mode<synchronous>, transform_indices = @transform_1, window_bounds = array<i64: 11, 1536>}, {pipeline_mode = #tpu.pipeline_mode<synchronous>, transform_indices = @transform_2, window_bounds = array<i64: 1, 1536>}, {transform_indices = @transform_3, window_bounds = array<i64: 1, 1536, 768>}, {transform_indices = @transform_4, window_bounds = array<i64: 1, 768>}, {transform_indices = @transform_5, window_bounds = array<i64: 1, 768>}, {transform_indices = @transform_6, window_bounds = array<i64: 1, 768>}, {transform_indices = @transform_7, window_bounds = array<i64: 1, 8, 1>}]} {
    %c0 = arith.constant 0 : index
    %c0_0 = arith.constant 0 : index
    %0 = vector.load %arg1[%c0, %c0_0] : memref<8x11xf32, #tpu.memory_space<vmem>>, vector<8x11xf32>
    %c0_1 = arith.constant 0 : index
    %c0_2 = arith.constant 0 : index
    %1 = vector.load %arg2[%c0_1, %c0_2] : memref<11x1536xf32, #tpu.memory_space<vmem>>, vector<11x1536xf32>
    %cst = arith.constant dense<0.000000e+00> : vector<8x1536xf32>
    %2 = tpu.matmul %0, %1, %cst {dimension_numbers = #tpu.dot_dimension_numbers<[1], [0], [0], [1], [0, 0, 1, 1], [], []>} : vector<8x11xf32>, vector<11x1536xf32>, vector<8x1536xf32> -> vector<8x1536xf32>
    %c0_3 = arith.constant 0 : index
    %c0_4 = arith.constant 0 : index
    %3 = vector.load %arg3[%c0_3, %c0_4] : memref<1x1536xf32, #tpu.memory_space<vmem>>, vector<1x1536xf32>
    %4 = vector.broadcast %3 : vector<1x1536xf32> to vector<8x1536xf32>
    %5 = arith.addf %2, %4 : vector<8x1536xf32>
    %cst_5 = arith.constant 0.000000e+00 : f32
    %6 = vector.broadcast %cst_5 : f32 to vector<8x1536xf32>
    %7 = arith.maximumf %5, %6 : vector<8x1536xf32>
    %8 = arith.truncf %7 : vector<8x1536xf32> to vector<8x1536xbf16>
    %c0_6 = arith.constant 0 : index
    %c0_7 = arith.constant 0 : index
    %c0_8 = arith.constant 0 : index
    %9 = vector.load %arg4[%c0_6, %c0_7, %c0_8] : memref<1x1536x768xi8, #tpu.memory_space<vmem>>, vector<1x1536x768xi8>
    %10 = vector.shape_cast %9 : vector<1x1536x768xi8> to vector<1536x768xi8>
    %11 = arith.sitofp %10 : vector<1536x768xi8> to vector<1536x768xbf16>
    %cst_9 = arith.constant dense<0.000000e+00> : vector<8x768xf32>
    %12 = tpu.matmul %8, %11, %cst_9 {dimension_numbers = #tpu.dot_dimension_numbers<[1], [0], [0], [1], [0, 0, 1, 1], [], []>} : vector<8x1536xbf16>, vector<1536x768xbf16>, vector<8x768xf32> -> vector<8x768xf32>
    %c0_10 = arith.constant 0 : index
    %c0_11 = arith.constant 0 : index
    %13 = vector.load %arg5[%c0_10, %c0_11] : memref<1x768xf32, #tpu.memory_space<vmem>>, vector<1x768xf32>
    %14 = vector.broadcast %13 : vector<1x768xf32> to vector<8x768xf32>
    %15 = arith.mulf %12, %14 : vector<8x768xf32>
    %c0_12 = arith.constant 0 : index
    %c0_13 = arith.constant 0 : index
    %16 = vector.load %arg6[%c0_12, %c0_13] : memref<1x768xf32, #tpu.memory_space<vmem>>, vector<1x768xf32>
    %17 = vector.broadcast %16 : vector<1x768xf32> to vector<8x768xf32>
    %18 = arith.addf %15, %17 : vector<8x768xf32>
    %cst_14 = arith.constant 0.000000e+00 : f32
    %19 = vector.broadcast %cst_14 : f32 to vector<8x768xf32>
    %20 = arith.subf %19, %18 : vector<8x768xf32>
    %21 = math.exp %20 : vector<8x768xf32>
    %cst_15 = arith.constant 1.000000e+00 : f32
    %22 = vector.broadcast %cst_15 : f32 to vector<8x768xf32>
    %23 = arith.addf %22, %21 : vector<8x768xf32>
    %cst_16 = arith.constant 1.000000e+00 : f32
    %24 = vector.broadcast %cst_16 : f32 to vector<8x768xf32>
    %25 = arith.divf %24, %23 : vector<8x768xf32>
    %c0_17 = arith.constant 0 : index
    %c0_18 = arith.constant 0 : index
    %26 = vector.load %arg7[%c0_17, %c0_18] : memref<1x768xf32, #tpu.memory_space<vmem>>, vector<1x768xf32>
    %27 = vector.broadcast %26 : vector<1x768xf32> to vector<8x768xf32>
    %28 = arith.mulf %25, %27 : vector<8x768xf32>
    %cst_19 = arith.constant dense<0.000000e+00> : vector<8xf32>
    %29 = vector.multi_reduction <add>, %28, %cst_19 [1] : vector<8x768xf32> to vector<8xf32>
    %30 = vector.shape_cast %29 : vector<8xf32> to vector<8x1xf32>
    %c0_20 = arith.constant 0 : index
    %c0_21 = arith.constant 0 : index
    %c0_22 = arith.constant 0 : index
    %31 = vector.load %arg8[%c0_20, %c0_21, %c0_22] : memref<1x8x1xf32, #tpu.memory_space<vmem>>, vector<1x8x1xf32>
    %32 = vector.shape_cast %31 : vector<1x8x1xf32> to vector<8x1xf32>
    %33 = vector.shape_cast %30 : vector<8x1xf32> to vector<1x8x1xf32>
    tpu.vector_store %arg8[%c0_20, %c0_21, %c0_22], %33 {strides = array<i32>} : memref<1x8x1xf32, #tpu.memory_space<vmem>>, vector<1x8x1xf32>,
    return
  }
  func.func @transform_0(%arg0: i32) -> (i32, i32) {
    %c0_i32 = arith.constant 0 : i32
    %c0_i32_0 = arith.constant 0 : i32
    %c0_i32_1 = arith.constant 0 : i32
    return %c0_i32, %c0_i32_0 : i32, i32
  }
  func.func @transform_1(%arg0: i32) -> (i32, i32) {
    %c0_i32 = arith.constant 0 : i32
    %c0_i32_0 = arith.constant 0 : i32
    %c0_i32_1 = arith.constant 0 : i32
    return %c0_i32, %c0_i32_0 : i32, i32
  }
  func.func @transform_2(%arg0: i32) -> (i32, i32) {
    %c0_i32 = arith.constant 0 : i32
    %c0_i32_0 = arith.constant 0 : i32
    %c0_i32_1 = arith.constant 0 : i32
    return %c0_i32, %c0_i32_0 : i32, i32
  }
  func.func @transform_3(%arg0: i32) -> (i32, i32, i32) {
    %c0_i32 = arith.constant 0 : i32
    %c0_i32_0 = arith.constant 0 : i32
    %c0_i32_1 = arith.constant 0 : i32
    return %arg0, %c0_i32, %c0_i32_0 : i32, i32, i32
  }
  func.func @transform_4(%arg0: i32) -> (i32, i32) {
    %c0_i32 = arith.constant 0 : i32
    %c0_i32_0 = arith.constant 0 : i32
    return %c0_i32, %arg0 : i32, i32
  }
  func.func @transform_5(%arg0: i32) -> (i32, i32) {
    %c0_i32 = arith.constant 0 : i32
    %c0_i32_0 = arith.constant 0 : i32
    return %c0_i32, %arg0 : i32, i32
  }
  func.func @transform_6(%arg0: i32) -> (i32, i32) {
    %c0_i32 = arith.constant 0 : i32
    %c0_i32_0 = arith.constant 0 : i32
    return %c0_i32, %arg0 : i32, i32
  }
  func.func @transform_7(%arg0: i32) -> (i32, i32, i32) {
    %c0_i32 = arith.constant 0 : i32
    %c0_i32_0 = arith.constant 0 : i32
    %c0_i32_1 = arith.constant 0 : i32
    return %arg0, %c0_i32, %c0_i32_0 : i32, i32, i32
  }
}

</mosaic_0001>

<llo_original>
// kernel: net_forward.1
$region0: #{net_forward.1}
  #allocation0 [shape = 'u32[]', space=smem, size = 0x4, offset = 0x4, fixed_abs, tag = 'smem constant byte address 0x4 - core index']
  #allocation1 [shape = 'u32[72,128]{1,0:T(1,128)}', space=vmem, size = 0x9000, scoped, tag = 'internal scratch']
  %s0 = inlined_call_operand.hbm [shape: f32[8,11], index: 0, kind: input, shape index: {}]
  %s1 = inlined_call_operand.hbm [shape: f32[11,1536], index: 1, kind: input, shape index: {}]
  %s2 = inlined_call_operand.hbm [shape: f32[1,1536], index: 2, kind: input, shape index: {}]
  %s3 = inlined_call_operand.hbm [shape: s8[2,1536,768], index: 3, kind: input, shape index: {}]
  %s4 = inlined_call_operand.hbm [shape: f32[1,1536], index: 4, kind: input, shape index: {}]
  %s5 = inlined_call_operand.hbm [shape: f32[1,1536], index: 5, kind: input, shape index: {}]
  %s6 = inlined_call_operand.hbm [shape: f32[1,1536], index: 6, kind: input, shape index: {}]
  %s7 = inlined_call_operand.vmem [shape: f32[2,8,1], index: 7, kind: output, shape index: {}]
  %s8 = sld [smem:[#allocation0]]
  $region89: #{net_forward.1} parent=0
    _
  %s10 = ssub.s32 1, %s8
  %s11 = scalar_select 0, %s10, %s8
  $region1: #{net_forward.1} parent=0
    #allocation2 [shape = 'u8[4096]{0}', space=vmem, size = 0x1000, scoped, tag = 'input window, operand 0, single buffered']
    #allocation3 [shape = 's32[2]{0}', space=sflag, size = 0x8, scoped, tag = 'scoped memory for net_forward.1']
    #allocation4 [shape = 'u8[98304]{0}', space=vmem, size = 0x18000, scoped, tag = 'input window, operand 1, single buffered']
    #allocation5 [shape = 's32[1]{0}', space=sflag, size = 0x4, scoped, tag = 'scoped memory for net_forward.1']
    #allocation6 [shape = 'u8[6144]{0}', space=vmem, size = 0x1800, scoped, tag = 'input window, operand 2, single buffered']
    #allocation7 [shape = 'u8[2359296]{0}', space=vmem, size = 0x240000, scoped, tag = 'input window, operand 3']
    #allocation8 [shape = 's32[2]{0}', space=sflag, size = 0x8, scoped, tag = 'scoped memory for net_forward.1']
    #allocation9 [shape = 'u8[6144]{0}', space=vmem, size = 0x1800, scoped, tag = 'input window, operand 4']
    #allocation10 [shape = 'u8[6144]{0}', space=vmem, size = 0x1800, scoped, tag = 'input window, operand 5']
    #allocation11 [shape = 's32[2]{0}', space=sflag, size = 0x8, scoped, tag = 'scoped memory for net_forward.1']
    #allocation12 [shape = 'u8[6144]{0}', space=vmem, size = 0x1800, scoped, tag = 'input window, operand 6']
    %12 = vsyncpa [#allocation3], 0
    %13 = vsyncpa [#allocation5], 0
    %14 = vsyncpa [#allocation8], 0
    %s15 = scalar_lea.sflag [#allocation8], 1
    %16 = vsyncpa %s15, 0
    %17 = vsyncpa [#allocation11], 0
    %s18 = scalar_lea.sflag [#allocation11], 1
    %19 = vsyncpa %s18, 0
    loop: start=0, step=1, limit=4
    $region2: #{net_forward.1} parent=1 // loop_pre_header
      _
    $region3: #{net_forward.1} parent=1 // loop_header
      %s21 = sphi 0, %s25
      %p22 = scmp.ge.s32.totalorder %s21, 4
      %s29 = sphi 0, %s29
      %s31 = sphi 0, %s29
      %s32 = sphi 0, %s31
      %s46 = sphi 0, %s32
      %s50 = sphi 0, %s50
      %s52 = sphi 0, %s50
      %s53 = sphi 0, %s52
      %s67 = sphi 0, %s53
      %s71 = sphi 0, %s71
      %s73 = sphi 0, %s71
      %s74 = sphi 0, %s73
      %s88 = sphi 0, %s74
      %s94 = sphi 0, %s96
      %s97 = sphi 0, %s94
      %s98 = sphi 0, %s97
      %s114 = sphi 0, %s98
      %s120 = sphi 0, %s122
      %s123 = sphi 0, %s120
      %s124 = sphi 0, %s123
      %s140 = sphi 0, %s124
      %s146 = sphi 0, %s148
      %s149 = sphi 0, %s146
      %s150 = sphi 0, %s149
      %s166 = sphi 0, %s150
      %s172 = sphi 0, %s174
      %s175 = sphi 0, %s172
      %s176 = sphi 0, %s175
      %s192 = sphi 0, %s176
      %s198 = sphi 0, %s200
      %s201 = sphi 0, %s198
      %s202 = sphi 0, %s201
      %s218 = sphi 0, %s202
    $region4: #{net_forward.1} parent=1 // loop_header_branch
      %24 = sbr.rel (%p22) target = $region8
    $region5: #{net_forward.1} parent=1 // loop_body
      %s26 = ssub.s32 %s21, 1
      %s27 = ssub.s32 %s21, 2
      %s28 = sadd.s32 %s21, 1
      %s30 = sadd.s32 %s29, 1
      %p33 = scmp.eq.s32.totalorder %s21, 1
      %p34 = scmp.ne.s32.totalorder %s29, %s31
      %p35 = scmp.eq.s32.totalorder %s21, 0
      %p36 = por %p34, %p35
      %p37 = scmp.ne.s32.totalorder %s29, %s31
      %p38 = scmp.eq.s32.totalorder %s26, 1
      %p39 = por %p37, %p38
      %p40 = scmp.ne.s32.totalorder %s31, %s32
      %p41 = scmp.eq.s32.totalorder %s26, 0
      %p42 = por %p40, %p41
      %p43 = scmp.ne.s32.totalorder %s31, %s32
      %p44 = scmp.eq.s32.totalorder %s27, 1
      %p45 = por %p43, %p44
      %p47 = scmp.ne.s32.totalorder %s32, %s46
      %p48 = scmp.eq.s32.totalorder %s27, 0
      %p49 = por %p47, %p48
      %s51 = sadd.s32 %s50, 1
      %p54 = scmp.eq.s32.totalorder %s21, 1
      %p55 = scmp.ne.s32.totalorder %s50, %s52
      %p56 = scmp.eq.s32.totalorder %s21, 0
      %p57 = por %p55, %p56
      %p58 = scmp.ne.s32.totalorder %s50, %s52
      %p59 = scmp.eq.s32.totalorder %s26, 1
      %p60 = por %p58, %p59
      %p61 = scmp.ne.s32.totalorder %s52, %s53
      %p62 = scmp.eq.s32.totalorder %s26, 0
      %p63 = por %p61, %p62
      %p64 = scmp.ne.s32.totalorder %s52, %s53
      %p65 = scmp.eq.s32.totalorder %s27, 1
      %p66 = por %p64, %p65
      %p68 = scmp.ne.s32.totalorder %s53, %s67
      %p69 = scmp.eq.s32.totalorder %s27, 0
      %p70 = por %p68, %p69
      %s72 = sadd.s32 %s71, 1
      %p75 = scmp.eq.s32.totalorder %s21, 1
      %p76 = scmp.ne.s32.totalorder %s71, %s73
      %p77 = scmp.eq.s32.totalorder %s21, 0
      %p78 = por %p76, %p77
      %p79 = scmp.ne.s32.totalorder %s71, %s73
      %p80 = scmp.eq.s32.totalorder %s26, 1
      %p81 = por %p79, %p80
      %p82 = scmp.ne.s32.totalorder %s73, %s74
      %p83 = scmp.eq.s32.totalorder %s26, 0
      %p84 = por %p82, %p83
      %p85 = scmp.ne.s32.totalorder %s73, %s74
      %p86 = scmp.eq.s32.totalorder %s27, 1
      %p87 = por %p85, %p86
      %p89 = scmp.ne.s32.totalorder %s74, %s88
      %p90 = scmp.eq.s32.totalorder %s27, 0
      %p91 = por %p89, %p90
      %s92 = ssub.s32 %s21, %s28
      %p93 = scmp.eq.s32.totalorder %s92, 0
      %s95 = sadd.s32 %s94, 1
      %s96 = scalar_select %p93, %s94, %s95
      %p99 = pneg %p93
      %p100 = scmp.eq.s32.totalorder %s21, 1
      %p101 = por %p99, %p100
      %p102 = scmp.ne.s32.totalorder %s94, %s97
      %p103 = scmp.eq.s32.totalorder %s21, 0
      %p104 = por %p102, %p103
      %p105 = scmp.ne.s32.totalorder %s94, %s97
      %p106 = scmp.eq.s32.totalorder %s26, 1
      %p107 = por %p105, %p106
      %p108 = scmp.ne.s32.totalorder %s97, %s98
      %p109 = scmp.eq.s32.totalorder %s26, 0
      %p110 = por %p108, %p109
      %p111 = scmp.ne.s32.totalorder %s97, %s98
      %p112 = scmp.eq.s32.totalorder %s27, 1
      %p113 = por %p111, %p112
      %p115 = scmp.ne.s32.totalorder %s98, %s114
      %p116 = scmp.eq.s32.totalorder %s27, 0
      %p117 = por %p115, %p116
      %s118 = ssub.s32 %s21, %s28
      %p119 = scmp.eq.s32.totalorder %s118, 0
      %s121 = sadd.s32 %s120, 1
      %s122 = scalar_select %p119, %s120, %s121
      %p125 = pneg %p119
      %p126 = scmp.eq.s32.totalorder %s21, 1
      %p127 = por %p125, %p126
      %p128 = scmp.ne.s32.totalorder %s120, %s123
      %p129 = scmp.eq.s32.totalorder %s21, 0
      %p130 = por %p128, %p129
      %p131 = scmp.ne.s32.totalorder %s120, %s123
      %p132 = scmp.eq.s32.totalorder %s26, 1
      %p133 = por %p131, %p132
      %p134 = scmp.ne.s32.totalorder %s123, %s124
      %p135 = scmp.eq.s32.totalorder %s26, 0
      %p136 = por %p134, %p135
      %p137 = scmp.ne.s32.totalorder %s123, %s124
      %p138 = scmp.eq.s32.totalorder %s27, 1
      %p139 = por %p137, %p138
      %p141 = scmp.ne.s32.totalorder %s124, %s140
      %p142 = scmp.eq.s32.totalorder %s27, 0
      %p143 = por %p141, %p142
      %s144 = ssub.s32 %s21, %s28
      %p145 = scmp.eq.s32.totalorder %s144, 0
      %s147 = sadd.s32 %s146, 1
      %s148 = scalar_select %p145, %s146, %s147
      %p151 = pneg %p145
      %p152 = scmp.eq.s32.totalorder %s21, 1
      %p153 = por %p151, %p152
      %p154 = scmp.ne.s32.totalorder %s146, %s149
      %p155 = scmp.eq.s32.totalorder %s21, 0
      %p156 = por %p154, %p155
      %p157 = scmp.ne.s32.totalorder %s146, %s149
      %p158 = scmp.eq.s32.totalorder %s26, 1
      %p159 = por %p157, %p158
      %p160 = scmp.ne.s32.totalorder %s149, %s150
      %p161 = scmp.eq.s32.totalorder %s26, 0
      %p162 = por %p160, %p161
      %p163 = scmp.ne.s32.totalorder %s149, %s150
      %p164 = scmp.eq.s32.totalorder %s27, 1
      %p165 = por %p163, %p164
      %p167 = scmp.ne.s32.totalorder %s150, %s166
      %p168 = scmp.eq.s32.totalorder %s27, 0
      %p169 = por %p167, %p168
      %s170 = ssub.s32 %s21, %s28
      %p171 = scmp.eq.s32.totalorder %s170, 0
      %s173 = sadd.s32 %s172, 1
      %s174 = scalar_select %p171, %s172, %s173
      %p177 = pneg %p171
      %p178 = scmp.eq.s32.totalorder %s21, 1
      %p179 = por %p177, %p178
      %p180 = scmp.ne.s32.totalorder %s172, %s175
      %p181 = scmp.eq.s32.totalorder %s21, 0
      %p182 = por %p180, %p181
      %p183 = scmp.ne.s32.totalorder %s172, %s175
      %p184 = scmp.eq.s32.totalorder %s26, 1
      %p185 = por %p183, %p184
      %p186 = scmp.ne.s32.totalorder %s175, %s176
      %p187 = scmp.eq.s32.totalorder %s26, 0
      %p188 = por %p186, %p187
      %p189 = scmp.ne.s32.totalorder %s175, %s176
      %p190 = scmp.eq.s32.totalorder %s27, 1
      %p191 = por %p189, %p190
      %p193 = scmp.ne.s32.totalorder %s176, %s192
      %p194 = scmp.eq.s32.totalorder %s27, 0
      %p195 = por %p193, %p194
      %s196 = ssub.s32 %s21, %s28
      %p197 = scmp.eq.s32.totalorder %s196, 0
      %s199 = sadd.s32 %s198, 1
      %s200 = scalar_select %p197, %s198, %s199
      %p203 = pneg %p197
      %p204 = scmp.eq.s32.totalorder %s21, 1
      %p205 = por %p203, %p204
      %p206 = scmp.ne.s32.totalorder %s198, %s201
      %p207 = scmp.eq.s32.totalorder %s21, 0
      %p208 = por %p206, %p207
      %p209 = scmp.ne.s32.totalorder %s198, %s201
      %p210 = scmp.eq.s32.totalorder %s26, 1
      %p211 = por %p209, %p210
      %p212 = scmp.ne.s32.totalorder %s201, %s202
      %p213 = scmp.eq.s32.totalorder %s26, 0
      %p214 = por %p212, %p213
      %p215 = scmp.ne.s32.totalorder %s201, %s202
      %p216 = scmp.eq.s32.totalorder %s27, 1
      %p217 = por %p215, %p216
      %p219 = scmp.ne.s32.totalorder %s202, %s218
      %p220 = scmp.eq.s32.totalorder %s27, 0
      %p221 = por %p219, %p220
      %p222 = scmp.le.s32.totalorder 1, %s21
      %p223 = scmp.lt.s32.totalorder %s21, 3
      %p224 = pnand %p222, %p223
      %p225 = pneg %p224
      // Predicated region
      $region9: #{net_forward.1} parent=5 // pred_check
        _
      $region10: #{net_forward.1} parent=5 // pred_check_branch
        %227 = sbr.rel (%p224) target = $region12
      $region11: #{net_forward.1} parent=5 // pred_region
        %s228 = ssub.s32 %s21, 1
        // Predicated region
        $region13: #{net_forward.1} parent=11 // pred_check
          %p229 = pneg %p42
        $region14: #{net_forward.1} parent=11 // pred_check_branch
          %231 = sbr.rel (%p229) target = $region16
        $region15: #{net_forward.1} parent=11 // pred_region
          %233 = vsyncadd [#allocation3], 0
          %s235 = sshll.u32 %s0, 4
          %s236 = int_to_ptr.hbm [resolvable:$true] %s235
          %s237 = sshll.u32 [#allocation2], 4
          %s238 = int_to_ptr.vmem [resolvable:$true] %s237
          %240 = dma.hbm_to_vmem [thread:$0]  %s236, 128, %s238, [#allocation3]
        $region16: #{net_forward.1} parent=11 // pred_fallthru
          _
        // Predicated region
        $region17: #{net_forward.1} parent=11 // pred_check
          %p241 = pneg %p63
        $region18: #{net_forward.1} parent=11 // pred_check_branch
          %243 = sbr.rel (%p241) target = $region20
        $region19: #{net_forward.1} parent=11 // pred_region
          %245 = vsyncadd [#allocation5], 0
          %s246 = sshll.u32 %s1, 4
          %s247 = int_to_ptr.hbm [resolvable:$true] %s246
          %s248 = sshll.u32 [#allocation4], 4
          %s249 = int_to_ptr.vmem [resolvable:$true] %s248
          %254 = dma.hbm_to_vmem [thread:$0]  %s247, 3072, %s249, [#allocation5], 1536, 1536, 96
        $region20: #{net_forward.1} parent=11 // pred_fallthru
          _
        // Predicated region
        $region21: #{net_forward.1} parent=11 // pred_check
          %p255 = pneg %p84
        $region22: #{net_forward.1} parent=11 // pred_check_branch
          %257 = sbr.rel (%p255) target = $region24
        $region23: #{net_forward.1} parent=11 // pred_region
          %259 = vsyncadd [#allocation5], 0
          %s261 = sshll.u32 %s2, 4
          %s262 = int_to_ptr.hbm [resolvable:$true] %s261
          %s263 = sshll.u32 [#allocation6], 4
          %s264 = int_to_ptr.vmem [resolvable:$true] %s263
          %266 = dma.hbm_to_vmem [thread:$0]  %s262, 192, %s264, [#allocation5]
        $region24: #{net_forward.1} parent=11 // pred_fallthru
          _
      $region12: #{net_forward.1} parent=5 // pred_fallthru
        _
      %p267 = scmp.lt.s32.totalorder %s21, 2
      // Predicated region
      $region25: #{net_forward.1} parent=5 // pred_check
        %p268 = pneg %p267
      $region26: #{net_forward.1} parent=5 // pred_check_branch
        %270 = sbr.rel (%p268) target = $region28
      $region27: #{net_forward.1} parent=5 // pred_region
        // Predicated region
        $region29: #{net_forward.1} parent=27 // pred_check
          %p271 = pneg %p104
        $region30: #{net_forward.1} parent=27 // pred_check_branch
          %273 = sbr.rel (%p271) target = $region32
        $region31: #{net_forward.1} parent=27 // pred_region
          %s274 = sand.u32 %s21, 1
          %s275 = scalar_lea.sflag [#allocation8], %s274
          %s276 = sand.u32 %s94, 1
          %s277 = smul.addr %s276, 2304
          %s278 = scalar_lea.vmem [#allocation7], %s277
          %280 = vsyncadd %s275, 0
          %s281 = smul.addr %s21, 288
          %s282 = smul.addr %s281, 8
          %s283 = scalar_lea.hbm %s3, %s282
          %s284 = sshll.u32 %s283, 4
          %s285 = int_to_ptr.hbm [resolvable:$true] %s284
          %s286 = sshll.u32 %s278, 4
          %s287 = int_to_ptr.vmem [resolvable:$true] %s286
          %292 = dma.hbm_to_vmem [thread:$0]  %s285, 36864, %s287, %s275, 768, 768, 48
        $region32: #{net_forward.1} parent=27 // pred_fallthru
          _
        // Predicated region
        $region33: #{net_forward.1} parent=27 // pred_check
          %p293 = pneg %p130
        $region34: #{net_forward.1} parent=27 // pred_check_branch
          %295 = sbr.rel (%p293) target = $region36
        $region35: #{net_forward.1} parent=27 // pred_region
          %s296 = sand.u32 %s21, 1
          %s297 = scalar_lea.sflag [#allocation8], %s296
          %s298 = sand.u32 %s120, 1
          %s299 = smul.addr %s298, 6
          %s300 = scalar_lea.vmem [#allocation9], %s299
          %s301 = smul.u32 6, %s21
          %303 = vsyncadd %s297, 0
          %s304 = scalar_lea.hbm %s4, %s301
          %s306 = sshll.u32 %s304, 4
          %s307 = int_to_ptr.hbm [resolvable:$true] %s306
          %s308 = sshll.u32 %s300, 4
          %s309 = int_to_ptr.vmem [resolvable:$true] %s308
          %311 = dma.hbm_to_vmem [thread:$0]  %s307, 96, %s309, %s297
        $region36: #{net_forward.1} parent=27 // pred_fallthru
          _
        // Predicated region
        $region37: #{net_forward.1} parent=27 // pred_check
          %p312 = pneg %p156
        $region38: #{net_forward.1} parent=27 // pred_check_branch
          %314 = sbr.rel (%p312) target = $region40
        $region39: #{net_forward.1} parent=27 // pred_region
          %s315 = sand.u32 %s21, 1
          %s316 = scalar_lea.sflag [#allocation11], %s315
          %s317 = sand.u32 %s146, 1
          %s318 = smul.addr %s317, 6
          %s319 = scalar_lea.vmem [#allocation10], %s318
          %s320 = smul.u32 6, %s21
          %322 = vsyncadd %s316, 0
          %s323 = scalar_lea.hbm %s5, %s320
          %s325 = sshll.u32 %s323, 4
          %s326 = int_to_ptr.hbm [resolvable:$true] %s325
          %s327 = sshll.u32 %s319, 4
          %s328 = int_to_ptr.vmem [resolvable:$true] %s327
          %330 = dma.hbm_to_vmem [thread:$0]  %s326, 96, %s328, %s316
        $region40: #{net_forward.1} parent=27 // pred_fallthru
          _
        // Predicated region
        $region41: #{net_forward.1} parent=27 // pred_check
          %p331 = pneg %p182
        $region42: #{net_forward.1} parent=27 // pred_check_branch
          %333 = sbr.rel (%p331) target = $region44
        $region43: #{net_forward.1} parent=27 // pred_region
          %s334 = sand.u32 %s21, 1
          %s335 = scalar_lea.sflag [#allocation11], %s334
          %s336 = sand.u32 %s172, 1
          %s337 = smul.addr %s336, 6
          %s338 = scalar_lea.vmem [#allocation12], %s337
          %s339 = smul.u32 6, %s21
          %341 = vsyncadd %s335, 0
          %s342 = scalar_lea.hbm %s6, %s339
          %s344 = sshll.u32 %s342, 4
          %s345 = int_to_ptr.hbm [resolvable:$true] %s344
          %s346 = sshll.u32 %s338, 4
          %s347 = int_to_ptr.vmem [resolvable:$true] %s346
          %349 = dma.hbm_to_vmem [thread:$0]  %s345, 96, %s347, %s335
        $region44: #{net_forward.1} parent=27 // pred_fallthru
          _
      $region28: #{net_forward.1} parent=5 // pred_fallthru
        _
      %p350 = scmp.le.s32.totalorder 1, %s21
      %p351 = scmp.lt.s32.totalorder %s21, 3
      %p352 = pnand %p350, %p351
      %p353 = pneg %p352
      // Predicated region
      $region45: #{net_forward.1} parent=5 // pred_check
        _
      $region46: #{net_forward.1} parent=5 // pred_check_branch
        %355 = sbr.rel (%p352) target = $region48
      $region47: #{net_forward.1} parent=5 // pred_region
        %s356 = ssub.s32 %s21, 1
        // Predicated region
        $region49: #{net_forward.1} parent=47 // pred_check
          %p357 = pneg %p42
        $region50: #{net_forward.1} parent=47 // pred_check_branch
          %359 = sbr.rel (%p357) target = $region52
        $region51: #{net_forward.1} parent=47 // pred_region
          %361 = dma.done [#allocation3], 128
        $region52: #{net_forward.1} parent=47 // pred_fallthru
          _
        // Predicated region
        $region53: #{net_forward.1} parent=47 // pred_check
          %p362 = pneg %p63
        $region54: #{net_forward.1} parent=47 // pred_check_branch
          %364 = sbr.rel (%p362) target = $region56
        $region55: #{net_forward.1} parent=47 // pred_region
          %366 = dma.done [#allocation5], 3072
        $region56: #{net_forward.1} parent=47 // pred_fallthru
          _
        // Predicated region
        $region57: #{net_forward.1} parent=47 // pred_check
          %p367 = pneg %p84
        $region58: #{net_forward.1} parent=47 // pred_check_branch
          %369 = sbr.rel (%p367) target = $region60
        $region59: #{net_forward.1} parent=47 // pred_region
          %371 = dma.done [#allocation5], 192
        $region60: #{net_forward.1} parent=47 // pred_fallthru
          _
        %s372 = sand.u32 %s26, 1
        %s373 = scalar_lea.sflag [#allocation8], %s372
        %s374 = sand.u32 %s97, 1
        %s375 = smul.addr %s374, 2304
        %s376 = scalar_lea.vmem [#allocation7], %s375
        // Predicated region
        $region61: #{net_forward.1} parent=47 // pred_check
          %p377 = pneg %p110
        $region62: #{net_forward.1} parent=47 // pred_check_branch
          %379 = sbr.rel (%p377) target = $region64
        $region63: #{net_forward.1} parent=47 // pred_region
          %381 = dma.done %s373, 36864
        $region64: #{net_forward.1} parent=47 // pred_fallthru
          _
        %s382 = sand.u32 %s26, 1
        %s383 = scalar_lea.sflag [#allocation8], %s382
        %s384 = sand.u32 %s123, 1
        %s385 = smul.addr %s384, 6
        %s386 = scalar_lea.vmem [#allocation9], %s385
        // Predicated region
        $region65: #{net_forward.1} parent=47 // pred_check
          %p387 = pneg %p136
        $region66: #{net_forward.1} parent=47 // pred_check_branch
          %389 = sbr.rel (%p387) target = $region68
        $region67: #{net_forward.1} parent=47 // pred_region
          %391 = dma.done %s383, 96
        $region68: #{net_forward.1} parent=47 // pred_fallthru
          _
        %s392 = sand.u32 %s26, 1
        %s393 = scalar_lea.sflag [#allocation11], %s392
        %s394 = sand.u32 %s149, 1
        %s395 = smul.addr %s394, 6
        %s396 = scalar_lea.vmem [#allocation10], %s395
        // Predicated region
        $region69: #{net_forward.1} parent=47 // pred_check
          %p397 = pneg %p162
        $region70: #{net_forward.1} parent=47 // pred_check_branch
          %399 = sbr.rel (%p397) target = $region72
        $region71: #{net_forward.1} parent=47 // pred_region
          %401 = dma.done %s393, 96
        $region72: #{net_forward.1} parent=47 // pred_fallthru
          _
        %s402 = sand.u32 %s26, 1
        %s403 = scalar_lea.sflag [#allocation11], %s402
        %s404 = sand.u32 %s175, 1
        %s405 = smul.addr %s404, 6
        %s406 = scalar_lea.vmem [#allocation12], %s405
        // Predicated region
        $region73: #{net_forward.1} parent=47 // pred_check
          %p407 = pneg %p188
        $region74: #{net_forward.1} parent=47 // pred_check_branch
          %409 = sbr.rel (%p407) target = $region76
        $region75: #{net_forward.1} parent=47 // pred_region
          %411 = dma.done %s403, 96
        $region76: #{net_forward.1} parent=47 // pred_fallthru
          _
        %p412 = pneg %p42
        %p413 = pneg %p39
        %p414 = pneg %p63
        %p415 = pneg %p60
        %p416 = pneg %p84
        %p417 = pneg %p81
        %s418 = sand.u32 %s26, 1
        %s419 = scalar_lea.sflag [#allocation8], %s418
        %s420 = sand.u32 %s97, 1
        %s421 = smul.addr %s420, 2304
        %s422 = scalar_lea.vmem [#allocation7], %s421
        %p423 = pneg %p110
        %p424 = pneg %p107
        %s425 = sand.u32 %s26, 1
        %s426 = scalar_lea.sflag [#allocation8], %s425
        %s427 = sand.u32 %s123, 1
        %s428 = smul.addr %s427, 6
        %s429 = scalar_lea.vmem [#allocation9], %s428
        %p430 = pneg %p136
        %p431 = pneg %p133
        %s432 = sand.u32 %s26, 1
        %s433 = scalar_lea.sflag [#allocation11], %s432
        %s434 = sand.u32 %s149, 1
        %s435 = smul.addr %s434, 6
        %s436 = scalar_lea.vmem [#allocation10], %s435
        %p437 = pneg %p162
        %p438 = pneg %p159
        %s439 = sand.u32 %s26, 1
        %s440 = scalar_lea.sflag [#allocation11], %s439
        %s441 = sand.u32 %s175, 1
        %s442 = smul.addr %s441, 6
        %s443 = scalar_lea.vmem [#allocation12], %s442
        %p444 = pneg %p188
        %p445 = pneg %p185
        %p446 = pneg %p214
        %p447 = pneg %p211
        %p448 = scmp.lt.s32.totalorder %s26, 1
        %s449 = scalar_select %p448, %s26, 1
        %s450 = smul.addr %s449, 8
        %s451 = scalar_lea.vmem %s7, %s450
        %s452 = smul.u32 6, %s26
        %s453 = smul.u32 6, %s26
        %s454 = smul.u32 6, %s26
        %p455 = scmp.lt.s32.totalorder %s26, 1
        %s456 = scalar_select %p455, %s26, 1
        %s457 = smul.addr %s456, 8
        %s458 = scalar_lea.vmem %s7, %s457
        %v459 = vld [vmem:[#allocation2] sm:$0xff]
        %v460 = vld [vmem:[#allocation4] sm:$0xff]
        %v461 = vld [vmem:[#allocation4 + $0x8] sm:$0xff]
        %v462 = vld [vmem:[#allocation4 + $0x10] sm:$0xff]
        %v463 = vld [vmem:[#allocation4 + $0x18] sm:$0xff]
        %v464 = vld [vmem:[#allocation4 + $0x20] sm:$0xff]
        %v465 = vld [vmem:[#allocation4 + $0x28] sm:$0xff]
        %v466 = vld [vmem:[#allocation4 + $0x30] sm:$0xff]
        %v467 = vld [vmem:[#allocation4 + $0x38] sm:$0xff]
        %v468 = vld [vmem:[#allocation4 + $0x40] sm:$0xff]
        %v469 = vld [vmem:[#allocation4 + $0x48] sm:$0xff]
        %v470 = vld [vmem:[#allocation4 + $0x50] sm:$0xff]
        %v471 = vld [vmem:[#allocation4 + $0x58] sm:$0xff]
        %v472 = vld [vmem:[#allocation4 + $0x60] sm:$0x7]
        %v473 = vld [vmem:[#allocation4 + $0x68] sm:$0x7]
        %v474 = vld [vmem:[#allocation4 + $0x70] sm:$0x7]
        %v475 = vld [vmem:[#allocation4 + $0x78] sm:$0x7]
        %v476 = vld [vmem:[#allocation4 + $0x80] sm:$0x7]
        %v477 = vld [vmem:[#allocation4 + $0x88] sm:$0x7]
        %v478 = vld [vmem:[#allocation4 + $0x90] sm:$0x7]
        %v479 = vld [vmem:[#allocation4 + $0x98] sm:$0x7]
        %v480 = vld [vmem:[#allocation4 + $0xa0] sm:$0x7]
        %v481 = vld [vmem:[#allocation4 + $0xa8] sm:$0x7]
        %v482 = vld [vmem:[#allocation4 + $0xb0] sm:$0x7]
        %v483 = vld [vmem:[#allocation4 + $0xb8] sm:$0x7]
        %v484 = vld [vmem:[#allocation6] sm:$0xff]
        %v485 = vld [vmem:[#allocation6 + $0x8] sm:$0xf]
        %v488 = vperm.slane %v484, 0
        %v489 = vperm.slane %v484, 1
        %v490 = vperm.slane %v484, 2
        %v491 = vperm.slane %v484, 3
        %v492 = vperm.slane %v484, 4
        %v493 = vperm.slane %v484, 5
        %v494 = vperm.slane %v484, 6
        %v495 = vperm.slane %v484, 7
        %v496 = vperm.slane %v485, 0
        %v497 = vperm.slane %v485, 1
        %v498 = vperm.slane %v485, 2
        %v499 = vperm.slane %v485, 3
        %vm512 = vcmask 89088
        %v514 = vsel %vm512, %v459, 0
        %vm516 = vcmask 1042432
        %v518 = vsel %vm516, %v472, 0
        %v521 = vsel %vm516, %v473, 0
        %v524 = vsel %vm516, %v474, 0
        %v527 = vsel %vm516, %v475, 0
        %v530 = vsel %vm516, %v476, 0
        %v533 = vsel %vm516, %v477, 0
        %v536 = vsel %vm516, %v478, 0
        %v539 = vsel %vm516, %v479, 0
        %v542 = vsel %vm516, %v480, 0
        %v545 = vsel %vm516, %v481, 0
        %v548 = vsel %vm516, %v482, 0
        %v551 = vsel %vm516, %v483, 0
        %553 = vmatpush.msra.mxu0 0.0
        %554 = vmatpush.msra.mxu0 0.0
        %555 = vmatpush.msra.mxu0 0.0
        %556 = vmatpush.msra.mxu0 0.0
        %557 = vmatpush.msra.mxu0 0.0
        %558 = vmatpush.msra.mxu0 0.0
        %559 = vmatpush.msra.mxu0 0.0
        %560 = vmatpush.msra.mxu0 0.0
        %561 = vmatpush.msra.mxu0 0.0
        %562 = vmatpush.msra.mxu0 0.0
        %563 = vmatpush.msra.mxu0 0.0
        %564 = vmatpush.msra.mxu0 0.0
        %565 = vmatpush.msra.mxu0 0.0
        %566 = vmatpush.msra.mxu0 0.0
        %567 = vmatpush.msra.mxu0 %v518
        %568 = vmatpush.msra.mxu0 %v460
        %569 = vmatmul.f32.gmra.mxu0 %v514
        %v570 = vpop.f32.mrf.mxu0
        %v571 = vadd.f32 %v488, %v570
        %572 = vdwg.mxu0
        %573 = vmatpush.msra.mxu0 0.0
        %574 = vmatpush.msra.mxu0 0.0
        %575 = vmatpush.msra.mxu0 0.0
        %576 = vmatpush.msra.mxu0 0.0
        %577 = vmatpush.msra.mxu0 0.0
        %578 = vmatpush.msra.mxu0 0.0
        %579 = vmatpush.msra.mxu0 0.0
        %580 = vmatpush.msra.mxu0 0.0
        %581 = vmatpush.msra.mxu0 0.0
        %582 = vmatpush.msra.mxu0 0.0
        %583 = vmatpush.msra.mxu0 0.0
        %584 = vmatpush.msra.mxu0 0.0
        %585 = vmatpush.msra.mxu0 0.0
        %586 = vmatpush.msra.mxu0 0.0
        %587 = vmatpush.msra.mxu0 %v521
        %588 = vmatpush.msra.mxu0 %v461
        %589 = vmatmul.f32.gmra.mxu0 %v514
        %v590 = vpop.f32.mrf.mxu0
        %v591 = vadd.f32 %v489, %v590
        %592 = vdwg.mxu0
        %593 = vmatpush.msra.mxu0 0.0
        %594 = vmatpush.msra.mxu0 0.0
        %595 = vmatpush.msra.mxu0 0.0
        %596 = vmatpush.msra.mxu0 0.0
        %597 = vmatpush.msra.mxu0 0.0
        %598 = vmatpush.msra.mxu0 0.0
        %599 = vmatpush.msra.mxu0 0.0
        %600 = vmatpush.msra.mxu0 0.0
        %601 = vmatpush.msra.mxu0 0.0
        %602 = vmatpush.msra.mxu0 0.0
        %603 = vmatpush.msra.mxu0 0.0
        %604 = vmatpush.msra.mxu0 0.0
        %605 = vmatpush.msra.mxu0 0.0
        %606 = vmatpush.msra.mxu0 0.0
        %607 = vmatpush.msra.mxu0 %v524
        %608 = vmatpush.msra.mxu0 %v462
        %609 = vmatmul.f32.gmra.mxu0 %v514
        %v610 = vpop.f32.mrf.mxu0
        %v611 = vadd.f32 %v490, %v610
        %612 = vdwg.mxu0
        %613 = vmatpush.msra.mxu0 0.0
        %614 = vmatpush.msra.mxu0 0.0
        %615 = vmatpush.msra.mxu0 0.0
        %616 = vmatpush.msra.mxu0 0.0
        %617 = vmatpush.msra.mxu0 0.0
        %618 = vmatpush.msra.mxu0 0.0
        %619 = vmatpush.msra.mxu0 0.0
        %620 = vmatpush.msra.mxu0 0.0
        %621 = vmatpush.msra.mxu0 0.0
        %622 = vmatpush.msra.mxu0 0.0
        %623 = vmatpush.msra.mxu0 0.0
        %624 = vmatpush.msra.mxu0 0.0
        %625 = vmatpush.msra.mxu0 0.0
        %626 = vmatpush.msra.mxu0 0.0
        %627 = vmatpush.msra.mxu0 %v527
        %628 = vmatpush.msra.mxu0 %v463
        %629 = vmatmul.f32.gmra.mxu0 %v514
        %v630 = vpop.f32.mrf.mxu0
        %v631 = vadd.f32 %v491, %v630
        %632 = vdwg.mxu0
        %633 = vmatpush.msra.mxu0 0.0
        %634 = vmatpush.msra.mxu0 0.0
        %635 = vmatpush.msra.mxu0 0.0
        %636 = vmatpush.msra.mxu0 0.0
        %637 = vmatpush.msra.mxu0 0.0
        %638 = vmatpush.msra.mxu0 0.0
        %639 = vmatpush.msra.mxu0 0.0
        %640 = vmatpush.msra.mxu0 0.0
        %641 = vmatpush.msra.mxu0 0.0
        %642 = vmatpush.msra.mxu0 0.0
        %643 = vmatpush.msra.mxu0 0.0
        %644 = vmatpush.msra.mxu0 0.0
        %645 = vmatpush.msra.mxu0 0.0
        %646 = vmatpush.msra.mxu0 0.0
        %647 = vmatpush.msra.mxu0 %v530
        %648 = vmatpush.msra.mxu0 %v464
        %649 = vmatmul.f32.gmra.mxu0 %v514
        %v650 = vpop.f32.mrf.mxu0
        %v651 = vadd.f32 %v492, %v650
        %652 = vdwg.mxu0
        %653 = vmatpush.msra.mxu0 0.0
        %654 = vmatpush.msra.mxu0 0.0
        %655 = vmatpush.msra.mxu0 0.0
        %656 = vmatpush.msra.mxu0 0.0
        %657 = vmatpush.msra.mxu0 0.0
        %658 = vmatpush.msra.mxu0 0.0
        %659 = vmatpush.msra.mxu0 0.0
        %660 = vmatpush.msra.mxu0 0.0
        %661 = vmatpush.msra.mxu0 0.0
        %662 = vmatpush.msra.mxu0 0.0
        %663 = vmatpush.msra.mxu0 0.0
        %664 = vmatpush.msra.mxu0 0.0
        %665 = vmatpush.msra.mxu0 0.0
        %666 = vmatpush.msra.mxu0 0.0
        %667 = vmatpush.msra.mxu0 %v533
        %668 = vmatpush.msra.mxu0 %v465
        %669 = vmatmul.f32.gmra.mxu0 %v514
        %v670 = vpop.f32.mrf.mxu0
        %v671 = vadd.f32 %v493, %v670
        %672 = vdwg.mxu0
        %673 = vmatpush.msra.mxu0 0.0
        %674 = vmatpush.msra.mxu0 0.0
        %675 = vmatpush.msra.mxu0 0.0
        %676 = vmatpush.msra.mxu0 0.0
        %677 = vmatpush.msra.mxu0 0.0
        %678 = vmatpush.msra.mxu0 0.0
        %679 = vmatpush.msra.mxu0 0.0
        %680 = vmatpush.msra.mxu0 0.0
        %681 = vmatpush.msra.mxu0 0.0
        %682 = vmatpush.msra.mxu0 0.0
        %683 = vmatpush.msra.mxu0 0.0
        %684 = vmatpush.msra.mxu0 0.0
        %685 = vmatpush.msra.mxu0 0.0
        %686 = vmatpush.msra.mxu0 0.0
        %687 = vmatpush.msra.mxu0 %v536
        %688 = vmatpush.msra.mxu0 %v466
        %689 = vmatmul.f32.gmra.mxu0 %v514
        %v690 = vpop.f32.mrf.mxu0
        %v691 = vadd.f32 %v494, %v690
        %692 = vdwg.mxu0
        %693 = vmatpush.msra.mxu0 0.0
        %694 = vmatpush.msra.mxu0 0.0
        %695 = vmatpush.msra.mxu0 0.0
        %696 = vmatpush.msra.mxu0 0.0
        %697 = vmatpush.msra.mxu0 0.0
        %698 = vmatpush.msra.mxu0 0.0
        %699 = vmatpush.msra.mxu0 0.0
        %700 = vmatpush.msra.mxu0 0.0
        %701 = vmatpush.msra.mxu0 0.0
        %702 = vmatpush.msra.mxu0 0.0
        %703 = vmatpush.msra.mxu0 0.0
        %704 = vmatpush.msra.mxu0 0.0
        %705 = vmatpush.msra.mxu0 0.0
        %706 = vmatpush.msra.mxu0 0.0
        %707 = vmatpush.msra.mxu0 %v539
        %708 = vmatpush.msra.mxu0 %v467
        %709 = vmatmul.f32.gmra.mxu0 %v514
        %v710 = vpop.f32.mrf.mxu0
        %v711 = vadd.f32 %v495, %v710
        %712 = vdwg.mxu0
        %713 = vmatpush.msra.mxu0 0.0
        %714 = vmatpush.msra.mxu0 0.0
        %715 = vmatpush.msra.mxu0 0.0
        %716 = vmatpush.msra.mxu0 0.0
        %717 = vmatpush.msra.mxu0 0.0
        %718 = vmatpush.msra.mxu0 0.0
        %719 = vmatpush.msra.mxu0 0.0
        %720 = vmatpush.msra.mxu0 0.0
        %721 = vmatpush.msra.mxu0 0.0
        %722 = vmatpush.msra.mxu0 0.0
        %723 = vmatpush.msra.mxu0 0.0
        %724 = vmatpush.msra.mxu0 0.0
        %725 = vmatpush.msra.mxu0 0.0
        %726 = vmatpush.msra.mxu0 0.0
        %727 = vmatpush.msra.mxu0 %v542
        %728 = vmatpush.msra.mxu0 %v468
        %729 = vmatmul.f32.gmra.mxu0 %v514
        %v730 = vpop.f32.mrf.mxu0
        %v731 = vadd.f32 %v496, %v730
        %732 = vdwg.mxu0
        %733 = vmatpush.msra.mxu0 0.0
        %734 = vmatpush.msra.mxu0 0.0
        %735 = vmatpush.msra.mxu0 0.0
        %736 = vmatpush.msra.mxu0 0.0
        %737 = vmatpush.msra.mxu0 0.0
        %738 = vmatpush.msra.mxu0 0.0
        %739 = vmatpush.msra.mxu0 0.0
        %740 = vmatpush.msra.mxu0 0.0
        %741 = vmatpush.msra.mxu0 0.0
        %742 = vmatpush.msra.mxu0 0.0
        %743 = vmatpush.msra.mxu0 0.0
        %744 = vmatpush.msra.mxu0 0.0
        %745 = vmatpush.msra.mxu0 0.0
        %746 = vmatpush.msra.mxu0 0.0
        %747 = vmatpush.msra.mxu0 %v545
        %748 = vmatpush.msra.mxu0 %v469
        %749 = vmatmul.f32.gmra.mxu0 %v514
        %v750 = vpop.f32.mrf.mxu0
        %v751 = vadd.f32 %v497, %v750
        %752 = vdwg.mxu0
        %753 = vmatpush.msra.mxu0 0.0
        %754 = vmatpush.msra.mxu0 0.0
        %755 = vmatpush.msra.mxu0 0.0
        %756 = vmatpush.msra.mxu0 0.0
        %757 = vmatpush.msra.mxu0 0.0
        %758 = vmatpush.msra.mxu0 0.0
        %759 = vmatpush.msra.mxu0 0.0
        %760 = vmatpush.msra.mxu0 0.0
        %761 = vmatpush.msra.mxu0 0.0
        %762 = vmatpush.msra.mxu0 0.0
        %763 = vmatpush.msra.mxu0 0.0
        %764 = vmatpush.msra.mxu0 0.0
        %765 = vmatpush.msra.mxu0 0.0
        %766 = vmatpush.msra.mxu0 0.0
        %767 = vmatpush.msra.mxu0 %v548
        %768 = vmatpush.msra.mxu0 %v470
        %769 = vmatmul.f32.gmra.mxu0 %v514
        %v770 = vpop.f32.mrf.mxu0
        %v771 = vadd.f32 %v498, %v770
        %772 = vdwg.mxu0
        %773 = vmatpush.msra.mxu0 0.0
        %774 = vmatpush.msra.mxu0 0.0
        %775 = vmatpush.msra.mxu0 0.0
        %776 = vmatpush.msra.mxu0 0.0
        %777 = vmatpush.msra.mxu0 0.0
        %778 = vmatpush.msra.mxu0 0.0
        %779 = vmatpush.msra.mxu0 0.0
        %780 = vmatpush.msra.mxu0 0.0
        %781 = vmatpush.msra.mxu0 0.0
        %782 = vmatpush.msra.mxu0 0.0
        %783 = vmatpush.msra.mxu0 0.0
        %784 = vmatpush.msra.mxu0 0.0
        %785 = vmatpush.msra.mxu0 0.0
        %786 = vmatpush.msra.mxu0 0.0
        %787 = vmatpush.msra.mxu0 %v551
        %788 = vmatpush.msra.mxu0 %v471
        %789 = vmatmul.f32.gmra.mxu0 %v514
        %v790 = vpop.f32.mrf.mxu0
        %v791 = vadd.f32 %v499, %v790
        %792 = vdwg.mxu0
        %v793 = vmax.f32 %v571, 0.0
        %v794 = vmax.f32 %v591, 0.0
        %v795 = vmax.f32 %v611, 0.0
        %v796 = vmax.f32 %v631, 0.0
        %v797 = vmax.f32 %v651, 0.0
        %v798 = vmax.f32 %v671, 0.0
        %v799 = vmax.f32 %v691, 0.0
        %v800 = vmax.f32 %v711, 0.0
        %v801 = vmax.f32 %v731, 0.0
        %v802 = vmax.f32 %v751, 0.0
        %v803 = vmax.f32 %v771, 0.0
        %v804 = vmax.f32 %v791, 0.0
        %v805 = vpack.c.bf16 %v793, %v793
        %v806 = vpack.c.bf16 %v794, %v794
        %v807 = vpack.c.bf16 %v795, %v795
        %v808 = vpack.c.bf16 %v796, %v796
        %v809 = vpack.c.bf16 %v797, %v797
        %v810 = vpack.c.bf16 %v798, %v798
        %v811 = vpack.c.bf16 %v799, %v799
        %v812 = vpack.c.bf16 %v800, %v800
        %v813 = vpack.c.bf16 %v801, %v801
        %v814 = vpack.c.bf16 %v802, %v802
        %v815 = vpack.c.bf16 %v803, %v803
        %v816 = vpack.c.bf16 %v804, %v804
        %v817 = vld [vmem:[%s376] sm:$0xff]
        %v818 = vld [vmem:[%s376 + $0x8] sm:$0xff]
        %v819 = vld [vmem:[%s376 + $0x10] sm:$0xff]
        %v820 = vld [vmem:[%s376 + $0x18] sm:$0xff]
        %v821 = vld [vmem:[%s376 + $0x20] sm:$0xff]
        %v822 = vld [vmem:[%s376 + $0x28] sm:$0xff]
        %v823 = vld [vmem:[%s376 + $0x30] sm:$0xff]
        %v824 = vld [vmem:[%s376 + $0x38] sm:$0xff]
        %v825 = vld [vmem:[%s376 + $0x40] sm:$0xff]
        %v826 = vld [vmem:[%s376 + $0x48] sm:$0xff]
        %v827 = vld [vmem:[%s376 + $0x50] sm:$0xff]
        %v828 = vld [vmem:[%s376 + $0x58] sm:$0xff]
        %v829 = vld [vmem:[%s376 + $0x60] sm:$0xff]
        %v830 = vld [vmem:[%s376 + $0x68] sm:$0xff]
        %v831 = vld [vmem:[%s376 + $0x70] sm:$0xff]
        %v832 = vld [vmem:[%s376 + $0x78] sm:$0xff]
        %v833 = vld [vmem:[%s376 + $0x80] sm:$0xff]
        %v834 = vld [vmem:[%s376 + $0x88] sm:$0xff]
        %v835 = vld [vmem:[%s376 + $0x90] sm:$0xff]
        %v836 = vld [vmem:[%s376 + $0x98] sm:$0xff]
        %v837 = vld [vmem:[%s376 + $0xa0] sm:$0xff]
        %v838 = vld [vmem:[%s376 + $0xa8] sm:$0xff]
        %v839 = vld [vmem:[%s376 + $0xb0] sm:$0xff]
        %v840 = vld [vmem:[%s376 + $0xb8] sm:$0xff]
        %v841 = vld [vmem:[%s376 + $0xc0] sm:$0xff]
        %v842 = vld [vmem:[%s376 + $0xc8] sm:$0xff]
        %v843 = vld [vmem:[%s376 + $0xd0] sm:$0xff]
        %v844 = vld [vmem:[%s376 + $0xd8] sm:$0xff]
        %v845 = vld [vmem:[%s376 + $0xe0] sm:$0xff]
        %v846 = vld [vmem:[%s376 + $0xe8] sm:$0xff]
        %v847 = vld [vmem:[%s376 + $0xf0] sm:$0xff]
        %v848 = vld [vmem:[%s376 + $0xf8] sm:$0xff]
        %v849 = vld [vmem:[%s376 + $0x100] sm:$0xff]
        %v850 = vld [vmem:[%s376 + $0x108] sm:$0xff]
        %v851 = vld [vmem:[%s376 + $0x110] sm:$0xff]
        %v852 = vld [vmem:[%s376 + $0x118] sm:$0xff]
        %v853 = vld [vmem:[%s376 + $0x120] sm:$0xff]
        %v854 = vld [vmem:[%s376 + $0x128] sm:$0xff]
        %v855 = vld [vmem:[%s376 + $0x130] sm:$0xff]
        %v856 = vld [vmem:[%s376 + $0x138] sm:$0xff]
        %v857 = vld [vmem:[%s376 + $0x140] sm:$0xff]
        %v858 = vld [vmem:[%s376 + $0x148] sm:$0xff]
        %v859 = vld [vmem:[%s376 + $0x150] sm:$0xff]
        %v860 = vld [vmem:[%s376 + $0x158] sm:$0xff]
        %v861 = vld [vmem:[%s376 + $0x160] sm:$0xff]
        %v862 = vld [vmem:[%s376 + $0x168] sm:$0xff]
        %v863 = vld [vmem:[%s376 + $0x170] sm:$0xff]
        %v864 = vld [vmem:[%s376 + $0x178] sm:$0xff]
        %v865 = vld [vmem:[%s376 + $0x180] sm:$0xff]
        %v866 = vld [vmem:[%s376 + $0x188] sm:$0xff]
        %v867 = vld [vmem:[%s376 + $0x190] sm:$0xff]
        %v868 = vld [vmem:[%s376 + $0x198] sm:$0xff]
        %v869 = vld [vmem:[%s376 + $0x1a0] sm:$0xff]
        %v870 = vld [vmem:[%s376 + $0x1a8] sm:$0xff]
        %v871 = vld [vmem:[%s376 + $0x1b0] sm:$0xff]
        %v872 = vld [vmem:[%s376 + $0x1b8] sm:$0xff]
        %v873 = vld [vmem:[%s376 + $0x1c0] sm:$0xff]
        %v874 = vld [vmem:[%s376 + $0x1c8] sm:$0xff]
        %v875 = vld [vmem:[%s376 + $0x1d0] sm:$0xff]
        %v876 = vld [vmem:[%s376 + $0x1d8] sm:$0xff]
        %v877 = vld [vmem:[%s376 + $0x1e0] sm:$0xff]
        %v878 = vld [vmem:[%s376 + $0x1e8] sm:$0xff]
        %v879 = vld [vmem:[%s376 + $0x1f0] sm:$0xff]
        %v880 = vld [vmem:[%s376 + $0x1f8] sm:$0xff]
        %v881 = vld [vmem:[%s376 + $0x200] sm:$0xff]
        %v882 = vld [vmem:[%s376 + $0x208] sm:$0xff]
        %v883 = vld [vmem:[%s376 + $0x210] sm:$0xff]
        %v884 = vld [vmem:[%s376 + $0x218] sm:$0xff]
        %v885 = vld [vmem:[%s376 + $0x220] sm:$0xff]
        %v886 = vld [vmem:[%s376 + $0x228] sm:$0xff]
        %v887 = vld [vmem:[%s376 + $0x230] sm:$0xff]
        %v888 = vld [vmem:[%s376 + $0x238] sm:$0xff]
        %v889 = vld [vmem:[%s376 + $0x240] sm:$0xff]
        %v890 = vld [vmem:[%s376 + $0x248] sm:$0xff]
        %v891 = vld [vmem:[%s376 + $0x250] sm:$0xff]
        %v892 = vld [vmem:[%s376 + $0x258] sm:$0xff]
        %v893 = vld [vmem:[%s376 + $0x260] sm:$0xff]
        %v894 = vld [vmem:[%s376 + $0x268] sm:$0xff]
        %v895 = vld [vmem:[%s376 + $0x270] sm:$0xff]
        %v896 = vld [vmem:[%s376 + $0x278] sm:$0xff]
        %v897 = vld [vmem:[%s376 + $0x280] sm:$0xff]
        %v898 = vld [vmem:[%s376 + $0x288] sm:$0xff]
        %v899 = vld [vmem:[%s376 + $0x290] sm:$0xff]
        %v900 = vld [vmem:[%s376 + $0x298] sm:$0xff]
        %v901 = vld [vmem:[%s376 + $0x2a0] sm:$0xff]
        %v902 = vld [vmem:[%s376 + $0x2a8] sm:$0xff]
        %v903 = vld [vmem:[%s376 + $0x2b0] sm:$0xff]
        %v904 = vld [vmem:[%s376 + $0x2b8] sm:$0xff]
        %v905 = vld [vmem:[%s376 + $0x2c0] sm:$0xff]
        %v906 = vld [vmem:[%s376 + $0x2c8] sm:$0xff]
        %v907 = vld [vmem:[%s376 + $0x2d0] sm:$0xff]
        %v908 = vld [vmem:[%s376 + $0x2d8] sm:$0xff]
        %v909 = vld [vmem:[%s376 + $0x2e0] sm:$0xff]
        %v910 = vld [vmem:[%s376 + $0x2e8] sm:$0xff]
        %v911 = vld [vmem:[%s376 + $0x2f0] sm:$0xff]
        %v912 = vld [vmem:[%s376 + $0x2f8] sm:$0xff]
        %v913 = vld [vmem:[%s376 + $0x300] sm:$0xff]
        %v914 = vld [vmem:[%s376 + $0x308] sm:$0xff]
        %v915 = vld [vmem:[%s376 + $0x310] sm:$0xff]
        %v916 = vld [vmem:[%s376 + $0x318] sm:$0xff]
        %v917 = vld [vmem:[%s376 + $0x320] sm:$0xff]
        %v918 = vld [vmem:[%s376 + $0x328] sm:$0xff]
        %v919 = vld [vmem:[%s376 + $0x330] sm:$0xff]
        %v920 = vld [vmem:[%s376 + $0x338] sm:$0xff]
        %v921 = vld [vmem:[%s376 + $0x340] sm:$0xff]
        %v922 = vld [vmem:[%s376 + $0x348] sm:$0xff]
        %v923 = vld [vmem:[%s376 + $0x350] sm:$0xff]
        %v924 = vld [vmem:[%s376 + $0x358] sm:$0xff]
        %v925 = vld [vmem:[%s376 + $0x360] sm:$0xff]
        %v926 = vld [vmem:[%s376 + $0x368] sm:$0xff]
        %v927 = vld [vmem:[%s376 + $0x370] sm:$0xff]
        %v928 = vld [vmem:[%s376 + $0x378] sm:$0xff]
        %v929 = vld [vmem:[%s376 + $0x380] sm:$0xff]
        %v930 = vld [vmem:[%s376 + $0x388] sm:$0xff]
        %v931 = vld [vmem:[%s376 + $0x390] sm:$0xff]
        %v932 = vld [vmem:[%s376 + $0x398] sm:$0xff]
        %v933 = vld [vmem:[%s376 + $0x3a0] sm:$0xff]
        %v934 = vld [vmem:[%s376 + $0x3a8] sm:$0xff]
        %v935 = vld [vmem:[%s376 + $0x3b0] sm:$0xff]
        %v936 = vld [vmem:[%s376 + $0x3b8] sm:$0xff]
        %v937 = vld [vmem:[%s376 + $0x3c0] sm:$0xff]
        %v938 = vld [vmem:[%s376 + $0x3c8] sm:$0xff]
        %v939 = vld [vmem:[%s376 + $0x3d0] sm:$0xff]
        %v940 = vld [vmem:[%s376 + $0x3d8] sm:$0xff]
        %v941 = vld [vmem:[%s376 + $0x3e0] sm:$0xff]
        %v942 = vld [vmem:[%s376 + $0x3e8] sm:$0xff]
        %v943 = vld [vmem:[%s376 + $0x3f0] sm:$0xff]
        %v944 = vld [vmem:[%s376 + $0x3f8] sm:$0xff]
        %v945 = vld [vmem:[%s376 + $0x400] sm:$0xff]
        %v946 = vld [vmem:[%s376 + $0x408] sm:$0xff]
        %v947 = vld [vmem:[%s376 + $0x410] sm:$0xff]
        %v948 = vld [vmem:[%s376 + $0x418] sm:$0xff]
        %v949 = vld [vmem:[%s376 + $0x420] sm:$0xff]
        %v950 = vld [vmem:[%s376 + $0x428] sm:$0xff]
        %v951 = vld [vmem:[%s376 + $0x430] sm:$0xff]
        %v952 = vld [vmem:[%s376 + $0x438] sm:$0xff]
        %v953 = vld [vmem:[%s376 + $0x440] sm:$0xff]
        %v954 = vld [vmem:[%s376 + $0x448] sm:$0xff]
        %v955 = vld [vmem:[%s376 + $0x450] sm:$0xff]
        %v956 = vld [vmem:[%s376 + $0x458] sm:$0xff]
        %v957 = vld [vmem:[%s376 + $0x460] sm:$0xff]
        %v958 = vld [vmem:[%s376 + $0x468] sm:$0xff]
        %v959 = vld [vmem:[%s376 + $0x470] sm:$0xff]
        %v960 = vld [vmem:[%s376 + $0x478] sm:$0xff]
        %v961 = vld [vmem:[%s376 + $0x480] sm:$0xff]
        %v962 = vld [vmem:[%s376 + $0x488] sm:$0xff]
        %v963 = vld [vmem:[%s376 + $0x490] sm:$0xff]
        %v964 = vld [vmem:[%s376 + $0x498] sm:$0xff]
        %v965 = vld [vmem:[%s376 + $0x4a0] sm:$0xff]
        %v966 = vld [vmem:[%s376 + $0x4a8] sm:$0xff]
        %v967 = vld [vmem:[%s376 + $0x4b0] sm:$0xff]
        %v968 = vld [vmem:[%s376 + $0x4b8] sm:$0xff]
        %v969 = vld [vmem:[%s376 + $0x4c0] sm:$0xff]
        %v970 = vld [vmem:[%s376 + $0x4c8] sm:$0xff]
        %v971 = vld [vmem:[%s376 + $0x4d0] sm:$0xff]
        %v972 = vld [vmem:[%s376 + $0x4d8] sm:$0xff]
        %v973 = vld [vmem:[%s376 + $0x4e0] sm:$0xff]
        %v974 = vld [vmem:[%s376 + $0x4e8] sm:$0xff]
        %v975 = vld [vmem:[%s376 + $0x4f0] sm:$0xff]
        %v976 = vld [vmem:[%s376 + $0x4f8] sm:$0xff]
        %v977 = vld [vmem:[%s376 + $0x500] sm:$0xff]
        %v978 = vld [vmem:[%s376 + $0x508] sm:$0xff]
        %v979 = vld [vmem:[%s376 + $0x510] sm:$0xff]
        %v980 = vld [vmem:[%s376 + $0x518] sm:$0xff]
        %v981 = vld [vmem:[%s376 + $0x520] sm:$0xff]
        %v982 = vld [vmem:[%s376 + $0x528] sm:$0xff]
        %v983 = vld [vmem:[%s376 + $0x530] sm:$0xff]
        %v984 = vld [vmem:[%s376 + $0x538] sm:$0xff]
        %v985 = vld [vmem:[%s376 + $0x540] sm:$0xff]
        %v986 = vld [vmem:[%s376 + $0x548] sm:$0xff]
        %v987 = vld [vmem:[%s376 + $0x550] sm:$0xff]
        %v988 = vld [vmem:[%s376 + $0x558] sm:$0xff]
        %v989 = vld [vmem:[%s376 + $0x560] sm:$0xff]
        %v990 = vld [vmem:[%s376 + $0x568] sm:$0xff]
        %v991 = vld [vmem:[%s376 + $0x570] sm:$0xff]
        %v992 = vld [vmem:[%s376 + $0x578] sm:$0xff]
        %v993 = vld [vmem:[%s376 + $0x580] sm:$0xff]
        %v994 = vld [vmem:[%s376 + $0x588] sm:$0xff]
        %v995 = vld [vmem:[%s376 + $0x590] sm:$0xff]
        %v996 = vld [vmem:[%s376 + $0x598] sm:$0xff]
        %v997 = vld [vmem:[%s376 + $0x5a0] sm:$0xff]
        %v998 = vld [vmem:[%s376 + $0x5a8] sm:$0xff]
        %v999 = vld [vmem:[%s376 + $0x5b0] sm:$0xff]
        %v1000 = vld [vmem:[%s376 + $0x5b8] sm:$0xff]
        %v1001 = vld [vmem:[%s376 + $0x5c0] sm:$0xff]
        %v1002 = vld [vmem:[%s376 + $0x5c8] sm:$0xff]
        %v1003 = vld [vmem:[%s376 + $0x5d0] sm:$0xff]
        %v1004 = vld [vmem:[%s376 + $0x5d8] sm:$0xff]
        %v1005 = vld [vmem:[%s376 + $0x5e0] sm:$0xff]
        %v1006 = vld [vmem:[%s376 + $0x5e8] sm:$0xff]
        %v1007 = vld [vmem:[%s376 + $0x5f0] sm:$0xff]
        %v1008 = vld [vmem:[%s376 + $0x5f8] sm:$0xff]
        %v1009 = vld [vmem:[%s376 + $0x600] sm:$0xff]
        %v1010 = vld [vmem:[%s376 + $0x608] sm:$0xff]
        %v1011 = vld [vmem:[%s376 + $0x610] sm:$0xff]
        %v1012 = vld [vmem:[%s376 + $0x618] sm:$0xff]
        %v1013 = vld [vmem:[%s376 + $0x620] sm:$0xff]
        %v1014 = vld [vmem:[%s376 + $0x628] sm:$0xff]
        %v1015 = vld [vmem:[%s376 + $0x630] sm:$0xff]
        %v1016 = vld [vmem:[%s376 + $0x638] sm:$0xff]
        %v1017 = vld [vmem:[%s376 + $0x640] sm:$0xff]
        %v1018 = vld [vmem:[%s376 + $0x648] sm:$0xff]
        %v1019 = vld [vmem:[%s376 + $0x650] sm:$0xff]
        %v1020 = vld [vmem:[%s376 + $0x658] sm:$0xff]
        %v1021 = vld [vmem:[%s376 + $0x660] sm:$0xff]
        %v1022 = vld [vmem:[%s376 + $0x668] sm:$0xff]
        %v1023 = vld [vmem:[%s376 + $0x670] sm:$0xff]
        %v1024 = vld [vmem:[%s376 + $0x678] sm:$0xff]
        %v1025 = vld [vmem:[%s376 + $0x680] sm:$0xff]
        %v1026 = vld [vmem:[%s376 + $0x688] sm:$0xff]
        %v1027 = vld [vmem:[%s376 + $0x690] sm:$0xff]
        %v1028 = vld [vmem:[%s376 + $0x698] sm:$0xff]
        %v1029 = vld [vmem:[%s376 + $0x6a0] sm:$0xff]
        %v1030 = vld [vmem:[%s376 + $0x6a8] sm:$0xff]
        %v1031 = vld [vmem:[%s376 + $0x6b0] sm:$0xff]
        %v1032 = vld [vmem:[%s376 + $0x6b8] sm:$0xff]
        %v1033 = vld [vmem:[%s376 + $0x6c0] sm:$0xff]
        %v1034 = vld [vmem:[%s376 + $0x6c8] sm:$0xff]
        %v1035 = vld [vmem:[%s376 + $0x6d0] sm:$0xff]
        %v1036 = vld [vmem:[%s376 + $0x6d8] sm:$0xff]
        %v1037 = vld [vmem:[%s376 + $0x6e0] sm:$0xff]
        %v1038 = vld [vmem:[%s376 + $0x6e8] sm:$0xff]
        %v1039 = vld [vmem:[%s376 + $0x6f0] sm:$0xff]
        %v1040 = vld [vmem:[%s376 + $0x6f8] sm:$0xff]
        %v1041 = vld [vmem:[%s376 + $0x700] sm:$0xff]
        %v1042 = vld [vmem:[%s376 + $0x708] sm:$0xff]
        %v1043 = vld [vmem:[%s376 + $0x710] sm:$0xff]
        %v1044 = vld [vmem:[%s376 + $0x718] sm:$0xff]
        %v1045 = vld [vmem:[%s376 + $0x720] sm:$0xff]
        %v1046 = vld [vmem:[%s376 + $0x728] sm:$0xff]
        %v1047 = vld [vmem:[%s376 + $0x730] sm:$0xff]
        %v1048 = vld [vmem:[%s376 + $0x738] sm:$0xff]
        %v1049 = vld [vmem:[%s376 + $0x740] sm:$0xff]
        %v1050 = vld [vmem:[%s376 + $0x748] sm:$0xff]
        %v1051 = vld [vmem:[%s376 + $0x750] sm:$0xff]
        %v1052 = vld [vmem:[%s376 + $0x758] sm:$0xff]
        %v1053 = vld [vmem:[%s376 + $0x760] sm:$0xff]
        %v1054 = vld [vmem:[%s376 + $0x768] sm:$0xff]
        %v1055 = vld [vmem:[%s376 + $0x770] sm:$0xff]
        %v1056 = vld [vmem:[%s376 + $0x778] sm:$0xff]
        %v1057 = vld [vmem:[%s376 + $0x780] sm:$0xff]
        %v1058 = vld [vmem:[%s376 + $0x788] sm:$0xff]
        %v1059 = vld [vmem:[%s376 + $0x790] sm:$0xff]
        %v1060 = vld [vmem:[%s376 + $0x798] sm:$0xff]
        %v1061 = vld [vmem:[%s376 + $0x7a0] sm:$0xff]
        %v1062 = vld [vmem:[%s376 + $0x7a8] sm:$0xff]
        %v1063 = vld [vmem:[%s376 + $0x7b0] sm:$0xff]
        %v1064 = vld [vmem:[%s376 + $0x7b8] sm:$0xff]
        %v1065 = vld [vmem:[%s376 + $0x7c0] sm:$0xff]
        %v1066 = vld [vmem:[%s376 + $0x7c8] sm:$0xff]
        %v1067 = vld [vmem:[%s376 + $0x7d0] sm:$0xff]
        %v1068 = vld [vmem:[%s376 + $0x7d8] sm:$0xff]
        %v1069 = vld [vmem:[%s376 + $0x7e0] sm:$0xff]
        %v1070 = vld [vmem:[%s376 + $0x7e8] sm:$0xff]
        %v1071 = vld [vmem:[%s376 + $0x7f0] sm:$0xff]
        %v1072 = vld [vmem:[%s376 + $0x7f8] sm:$0xff]
        %v1073 = vld [vmem:[%s376 + $0x800] sm:$0xff]
        %v1074 = vld [vmem:[%s376 + $0x808] sm:$0xff]
        %v1075 = vld [vmem:[%s376 + $0x810] sm:$0xff]
        %v1076 = vld [vmem:[%s376 + $0x818] sm:$0xff]
        %v1077 = vld [vmem:[%s376 + $0x820] sm:$0xff]
        %v1078 = vld [vmem:[%s376 + $0x828] sm:$0xff]
        %v1079 = vld [vmem:[%s376 + $0x830] sm:$0xff]
        %v1080 = vld [vmem:[%s376 + $0x838] sm:$0xff]
        %v1081 = vld [vmem:[%s376 + $0x840] sm:$0xff]
        %v1082 = vld [vmem:[%s376 + $0x848] sm:$0xff]
        %v1083 = vld [vmem:[%s376 + $0x850] sm:$0xff]
        %v1084 = vld [vmem:[%s376 + $0x858] sm:$0xff]
        %v1085 = vld [vmem:[%s376 + $0x860] sm:$0xff]
        %v1086 = vld [vmem:[%s376 + $0x868] sm:$0xff]
        %v1087 = vld [vmem:[%s376 + $0x870] sm:$0xff]
        %v1088 = vld [vmem:[%s376 + $0x878] sm:$0xff]
        %v1089 = vld [vmem:[%s376 + $0x880] sm:$0xff]
        %v1090 = vld [vmem:[%s376 + $0x888] sm:$0xff]
        %v1091 = vld [vmem:[%s376 + $0x890] sm:$0xff]
        %v1092 = vld [vmem:[%s376 + $0x898] sm:$0xff]
        %v1093 = vld [vmem:[%s376 + $0x8a0] sm:$0xff]
        %v1094 = vld [vmem:[%s376 + $0x8a8] sm:$0xff]
        %v1095 = vld [vmem:[%s376 + $0x8b0] sm:$0xff]
        %v1096 = vld [vmem:[%s376 + $0x8b8] sm:$0xff]
        %v1097 = vld [vmem:[%s376 + $0x8c0] sm:$0xff]
        %v1098 = vld [vmem:[%s376 + $0x8c8] sm:$0xff]
        %v1099 = vld [vmem:[%s376 + $0x8d0] sm:$0xff]
        %v1100 = vld [vmem:[%s376 + $0x8d8] sm:$0xff]
        %v1101 = vld [vmem:[%s376 + $0x8e0] sm:$0xff]
        %v1102 = vld [vmem:[%s376 + $0x8e8] sm:$0xff]
        %v1103 = vld [vmem:[%s376 + $0x8f0] sm:$0xff]
        %v1104 = vld [vmem:[%s376 + $0x8f8] sm:$0xff]
        %v1105 = vunpack.c.0.s8 %v817
        %v1106 = vunpack.c.0.s8 %v818
        %v1107 = vunpack.c.0.s8 %v819
        %v1108 = vunpack.c.0.s8 %v820
        %v1109 = vunpack.c.0.s8 %v821
        %v1110 = vunpack.c.0.s8 %v822
        %v1111 = vunpack.c.1.s8 %v817
        %v1112 = vunpack.c.1.s8 %v818
        %v1113 = vunpack.c.1.s8 %v819
        %v1114 = vunpack.c.1.s8 %v820
        %v1115 = vunpack.c.1.s8 %v821
        %v1116 = vunpack.c.1.s8 %v822
        %v1117 = vunpack.c.2.s8 %v817
        %v1118 = vunpack.c.2.s8 %v818
        %v1119 = vunpack.c.2.s8 %v819
        %v1120 = vunpack.c.2.s8 %v820
        %v1121 = vunpack.c.2.s8 %v821
        %v1122 = vunpack.c.2.s8 %v822
        %v1123 = vunpack.c.3.s8 %v817
        %v1124 = vunpack.c.3.s8 %v818
        %v1125 = vunpack.c.3.s8 %v819
        %v1126 = vunpack.c.3.s8 %v820
        %v1127 = vunpack.c.3.s8 %v821
        %v1128 = vunpack.c.3.s8 %v822
        %v1129 = vunpack.c.0.s8 %v823
        %v1130 = vunpack.c.0.s8 %v824
        %v1131 = vunpack.c.0.s8 %v825
        %v1132 = vunpack.c.0.s8 %v826
        %v1133 = vunpack.c.0.s8 %v827
        %v1134 = vunpack.c.0.s8 %v828
        %v1135 = vunpack.c.1.s8 %v823
        %v1136 = vunpack.c.1.s8 %v824
        %v1137 = vunpack.c.1.s8 %v825
        %v1138 = vunpack.c.1.s8 %v826
        %v1139 = vunpack.c.1.s8 %v827
        %v1140 = vunpack.c.1.s8 %v828
        %v1141 = vunpack.c.2.s8 %v823
        %v1142 = vunpack.c.2.s8 %v824
        %v1143 = vunpack.c.2.s8 %v825
        %v1144 = vunpack.c.2.s8 %v826
        %v1145 = vunpack.c.2.s8 %v827
        %v1146 = vunpack.c.2.s8 %v828
        %v1147 = vunpack.c.3.s8 %v823
        %v1148 = vunpack.c.3.s8 %v824
        %v1149 = vunpack.c.3.s8 %v825
        %v1150 = vunpack.c.3.s8 %v826
        %v1151 = vunpack.c.3.s8 %v827
        %v1152 = vunpack.c.3.s8 %v828
        %v1153 = vunpack.c.0.s8 %v829
        %v1154 = vunpack.c.0.s8 %v830
        %v1155 = vunpack.c.0.s8 %v831
        %v1156 = vunpack.c.0.s8 %v832
        %v1157 = vunpack.c.0.s8 %v833
        %v1158 = vunpack.c.0.s8 %v834
        %v1159 = vunpack.c.1.s8 %v829
        %v1160 = vunpack.c.1.s8 %v830
        %v1161 = vunpack.c.1.s8 %v831
        %v1162 = vunpack.c.1.s8 %v832
        %v1163 = vunpack.c.1.s8 %v833
        %v1164 = vunpack.c.1.s8 %v834
        %v1165 = vunpack.c.2.s8 %v829
        %v1166 = vunpack.c.2.s8 %v830
        %v1167 = vunpack.c.2.s8 %v831
        %v1168 = vunpack.c.2.s8 %v832
        %v1169 = vunpack.c.2.s8 %v833
        %v1170 = vunpack.c.2.s8 %v834
        %v1171 = vunpack.c.3.s8 %v829
        %v1172 = vunpack.c.3.s8 %v830
        %v1173 = vunpack.c.3.s8 %v831
        %v1174 = vunpack.c.3.s8 %v832
        %v1175 = vunpack.c.3.s8 %v833
        %v1176 = vunpack.c.3.s8 %v834
        %v1177 = vunpack.c.0.s8 %v835
        %v1178 = vunpack.c.0.s8 %v836
        %v1179 = vunpack.c.0.s8 %v837
        %v1180 = vunpack.c.0.s8 %v838
        %v1181 = vunpack.c.0.s8 %v839
        %v1182 = vunpack.c.0.s8 %v840
        %v1183 = vunpack.c.1.s8 %v835
        %v1184 = vunpack.c.1.s8 %v836
        %v1185 = vunpack.c.1.s8 %v837
        %v1186 = vunpack.c.1.s8 %v838
        %v1187 = vunpack.c.1.s8 %v839
        %v1188 = vunpack.c.1.s8 %v840
        %v1189 = vunpack.c.2.s8 %v835
        %v1190 = vunpack.c.2.s8 %v836
        %v1191 = vunpack.c.2.s8 %v837
        %v1192 = vunpack.c.2.s8 %v838
        %v1193 = vunpack.c.2.s8 %v839
        %v1194 = vunpack.c.2.s8 %v840
        %v1195 = vunpack.c.3.s8 %v835
        %v1196 = vunpack.c.3.s8 %v836
        %v1197 = vunpack.c.3.s8 %v837
        %v1198 = vunpack.c.3.s8 %v838
        %v1199 = vunpack.c.3.s8 %v839
        %v1200 = vunpack.c.3.s8 %v840
        %v1201 = vunpack.c.0.s8 %v841
        %v1202 = vunpack.c.0.s8 %v842
        %v1203 = vunpack.c.0.s8 %v843
        %v1204 = vunpack.c.0.s8 %v844
        %v1205 = vunpack.c.0.s8 %v845
        %v1206 = vunpack.c.0.s8 %v846
        %v1207 = vunpack.c.1.s8 %v841
        %v1208 = vunpack.c.1.s8 %v842
        %v1209 = vunpack.c.1.s8 %v843
        %v1210 = vunpack.c.1.s8 %v844
        %v1211 = vunpack.c.1.s8 %v845
        %v1212 = vunpack.c.1.s8 %v846
        %v1213 = vunpack.c.2.s8 %v841
        %v1214 = vunpack.c.2.s8 %v842
        %v1215 = vunpack.c.2.s8 %v843
        %v1216 = vunpack.c.2.s8 %v844
        %v1217 = vunpack.c.2.s8 %v845
        %v1218 = vunpack.c.2.s8 %v846
        %v1219 = vunpack.c.3.s8 %v841
        %v1220 = vunpack.c.3.s8 %v842
        %v1221 = vunpack.c.3.s8 %v843
        %v1222 = vunpack.c.3.s8 %v844
        %v1223 = vunpack.c.3.s8 %v845
        %v1224 = vunpack.c.3.s8 %v846
        %v1225 = vunpack.c.0.s8 %v847
        %v1226 = vunpack.c.0.s8 %v848
        %v1227 = vunpack.c.0.s8 %v849
        %v1228 = vunpack.c.0.s8 %v850
        %v1229 = vunpack.c.0.s8 %v851
        %v1230 = vunpack.c.0.s8 %v852
        %v1231 = vunpack.c.1.s8 %v847
        %v1232 = vunpack.c.1.s8 %v848
        %v1233 = vunpack.c.1.s8 %v849
        %v1234 = vunpack.c.1.s8 %v850
        %v1235 = vunpack.c.1.s8 %v851
        %v1236 = vunpack.c.1.s8 %v852
        %v1237 = vunpack.c.2.s8 %v847
        %v1238 = vunpack.c.2.s8 %v848
        %v1239 = vunpack.c.2.s8 %v849
        %v1240 = vunpack.c.2.s8 %v850
        %v1241 = vunpack.c.2.s8 %v851
        %v1242 = vunpack.c.2.s8 %v852
        %v1243 = vunpack.c.3.s8 %v847
        %v1244 = vunpack.c.3.s8 %v848
        %v1245 = vunpack.c.3.s8 %v849
        %v1246 = vunpack.c.3.s8 %v850
        %v1247 = vunpack.c.3.s8 %v851
        %v1248 = vunpack.c.3.s8 %v852
        %v1249 = vunpack.c.0.s8 %v853
        %v1250 = vunpack.c.0.s8 %v854
        %v1251 = vunpack.c.0.s8 %v855
        %v1252 = vunpack.c.0.s8 %v856
        %v1253 = vunpack.c.0.s8 %v857
        %v1254 = vunpack.c.0.s8 %v858
        %v1255 = vunpack.c.1.s8 %v853
        %v1256 = vunpack.c.1.s8 %v854
        %v1257 = vunpack.c.1.s8 %v855
        %v1258 = vunpack.c.1.s8 %v856
        %v1259 = vunpack.c.1.s8 %v857
        %v1260 = vunpack.c.1.s8 %v858
        %v1261 = vunpack.c.2.s8 %v853
        %v1262 = vunpack.c.2.s8 %v854
        %v1263 = vunpack.c.2.s8 %v855
        %v1264 = vunpack.c.2.s8 %v856
        %v1265 = vunpack.c.2.s8 %v857
        %v1266 = vunpack.c.2.s8 %v858
        %v1267 = vunpack.c.3.s8 %v853
        %v1268 = vunpack.c.3.s8 %v854
        %v1269 = vunpack.c.3.s8 %v855
        %v1270 = vunpack.c.3.s8 %v856
        %v1271 = vunpack.c.3.s8 %v857
        %v1272 = vunpack.c.3.s8 %v858
        %v1273 = vunpack.c.0.s8 %v859
        %v1274 = vunpack.c.0.s8 %v860
        %v1275 = vunpack.c.0.s8 %v861
        %v1276 = vunpack.c.0.s8 %v862
        %v1277 = vunpack.c.0.s8 %v863
        %v1278 = vunpack.c.0.s8 %v864
        %v1279 = vunpack.c.1.s8 %v859
        %v1280 = vunpack.c.1.s8 %v860
        %v1281 = vunpack.c.1.s8 %v861
        %v1282 = vunpack.c.1.s8 %v862
        %v1283 = vunpack.c.1.s8 %v863
        %v1284 = vunpack.c.1.s8 %v864
        %v1285 = vunpack.c.2.s8 %v859
        %v1286 = vunpack.c.2.s8 %v860
        %v1287 = vunpack.c.2.s8 %v861
        %v1288 = vunpack.c.2.s8 %v862
        %v1289 = vunpack.c.2.s8 %v863
        %v1290 = vunpack.c.2.s8 %v864
        %v1291 = vunpack.c.3.s8 %v859
        %v1292 = vunpack.c.3.s8 %v860
        %v1293 = vunpack.c.3.s8 %v861
        %v1294 = vunpack.c.3.s8 %v862
        %v1295 = vunpack.c.3.s8 %v863
        %v1296 = vunpack.c.3.s8 %v864
        %v1297 = vunpack.c.0.s8 %v865
        %v1298 = vunpack.c.0.s8 %v866
        %v1299 = vunpack.c.0.s8 %v867
        %v1300 = vunpack.c.0.s8 %v868
        %v1301 = vunpack.c.0.s8 %v869
        %v1302 = vunpack.c.0.s8 %v870
        %v1303 = vunpack.c.1.s8 %v865
        %v1304 = vunpack.c.1.s8 %v866
        %v1305 = vunpack.c.1.s8 %v867
        %v1306 = vunpack.c.1.s8 %v868
        %v1307 = vunpack.c.1.s8 %v869
        %v1308 = vunpack.c.1.s8 %v870
        %v1309 = vunpack.c.2.s8 %v865
        %v1310 = vunpack.c.2.s8 %v866
        %v1311 = vunpack.c.2.s8 %v867
        %v1312 = vunpack.c.2.s8 %v868
        %v1313 = vunpack.c.2.s8 %v869
        %v1314 = vunpack.c.2.s8 %v870
        %v1315 = vunpack.c.3.s8 %v865
        %v1316 = vunpack.c.3.s8 %v866
        %v1317 = vunpack.c.3.s8 %v867
        %v1318 = vunpack.c.3.s8 %v868
        %v1319 = vunpack.c.3.s8 %v869
        %v1320 = vunpack.c.3.s8 %v870
        %v1321 = vunpack.c.0.s8 %v871
        %v1322 = vunpack.c.0.s8 %v872
        %v1323 = vunpack.c.0.s8 %v873
        %v1324 = vunpack.c.0.s8 %v874
        %v1325 = vunpack.c.0.s8 %v875
        %v1326 = vunpack.c.0.s8 %v876
        %v1327 = vunpack.c.1.s8 %v871
        %v1328 = vunpack.c.1.s8 %v872
        %v1329 = vunpack.c.1.s8 %v873
        %v1330 = vunpack.c.1.s8 %v874
        %v1331 = vunpack.c.1.s8 %v875
        %v1332 = vunpack.c.1.s8 %v876
        %v1333 = vunpack.c.2.s8 %v871
        %v1334 = vunpack.c.2.s8 %v872
        %v1335 = vunpack.c.2.s8 %v873
        %v1336 = vunpack.c.2.s8 %v874
        %v1337 = vunpack.c.2.s8 %v875
        %v1338 = vunpack.c.2.s8 %v876
        %v1339 = vunpack.c.3.s8 %v871
        %v1340 = vunpack.c.3.s8 %v872
        %v1341 = vunpack.c.3.s8 %v873
        %v1342 = vunpack.c.3.s8 %v874
        %v1343 = vunpack.c.3.s8 %v875
        %v1344 = vunpack.c.3.s8 %v876
        %v1345 = vunpack.c.0.s8 %v877
        %v1346 = vunpack.c.0.s8 %v878
        %v1347 = vunpack.c.0.s8 %v879
        %v1348 = vunpack.c.0.s8 %v880
        %v1349 = vunpack.c.0.s8 %v881
        %v1350 = vunpack.c.0.s8 %v882
        %v1351 = vunpack.c.1.s8 %v877
        %v1352 = vunpack.c.1.s8 %v878
        %v1353 = vunpack.c.1.s8 %v879
        %v1354 = vunpack.c.1.s8 %v880
        %v1355 = vunpack.c.1.s8 %v881
        %v1356 = vunpack.c.1.s8 %v882
        %v1357 = vunpack.c.2.s8 %v877
        %v1358 = vunpack.c.2.s8 %v878
        %v1359 = vunpack.c.2.s8 %v879
        %v1360 = vunpack.c.2.s8 %v880
        %v1361 = vunpack.c.2.s8 %v881
        %v1362 = vunpack.c.2.s8 %v882
        %v1363 = vunpack.c.3.s8 %v877
        %v1364 = vunpack.c.3.s8 %v878
        %v1365 = vunpack.c.3.s8 %v879
        %v1366 = vunpack.c.3.s8 %v880
        %v1367 = vunpack.c.3.s8 %v881
        %v1368 = vunpack.c.3.s8 %v882
        %v1369 = vunpack.c.0.s8 %v883
        %v1370 = vunpack.c.0.s8 %v884
        %v1371 = vunpack.c.0.s8 %v885
        %v1372 = vunpack.c.0.s8 %v886
        %v1373 = vunpack.c.0.s8 %v887
        %v1374 = vunpack.c.0.s8 %v888
        %v1375 = vunpack.c.1.s8 %v883
        %v1376 = vunpack.c.1.s8 %v884
        %v1377 = vunpack.c.1.s8 %v885
        %v1378 = vunpack.c.1.s8 %v886
        %v1379 = vunpack.c.1.s8 %v887
        %v1380 = vunpack.c.1.s8 %v888
        %v1381 = vunpack.c.2.s8 %v883
        %v1382 = vunpack.c.2.s8 %v884
        %v1383 = vunpack.c.2.s8 %v885
        %v1384 = vunpack.c.2.s8 %v886
        %v1385 = vunpack.c.2.s8 %v887
        %v1386 = vunpack.c.2.s8 %v888
        %v1387 = vunpack.c.3.s8 %v883
        %v1388 = vunpack.c.3.s8 %v884
        %v1389 = vunpack.c.3.s8 %v885
        %v1390 = vunpack.c.3.s8 %v886
        %v1391 = vunpack.c.3.s8 %v887
        %v1392 = vunpack.c.3.s8 %v888
        %v1393 = vunpack.c.0.s8 %v889
        %v1394 = vunpack.c.0.s8 %v890
        %v1395 = vunpack.c.0.s8 %v891
        %v1396 = vunpack.c.0.s8 %v892
        %v1397 = vunpack.c.0.s8 %v893
        %v1398 = vunpack.c.0.s8 %v894
        %v1399 = vunpack.c.1.s8 %v889
        %v1400 = vunpack.c.1.s8 %v890
        %v1401 = vunpack.c.1.s8 %v891
        %v1402 = vunpack.c.1.s8 %v892
        %v1403 = vunpack.c.1.s8 %v893
        %v1404 = vunpack.c.1.s8 %v894
        %v1405 = vunpack.c.2.s8 %v889
        %v1406 = vunpack.c.2.s8 %v890
        %v1407 = vunpack.c.2.s8 %v891
        %v1408 = vunpack.c.2.s8 %v892
        %v1409 = vunpack.c.2.s8 %v893
        %v1410 = vunpack.c.2.s8 %v894
        %v1411 = vunpack.c.3.s8 %v889
        %v1412 = vunpack.c.3.s8 %v890
        %v1413 = vunpack.c.3.s8 %v891
        %v1414 = vunpack.c.3.s8 %v892
        %v1415 = vunpack.c.3.s8 %v893
        %v1416 = vunpack.c.3.s8 %v894
        %v1417 = vunpack.c.0.s8 %v895
        %v1418 = vunpack.c.0.s8 %v896
        %v1419 = vunpack.c.0.s8 %v897
        %v1420 = vunpack.c.0.s8 %v898
        %v1421 = vunpack.c.0.s8 %v899
        %v1422 = vunpack.c.0.s8 %v900
        %v1423 = vunpack.c.1.s8 %v895
        %v1424 = vunpack.c.1.s8 %v896
        %v1425 = vunpack.c.1.s8 %v897
        %v1426 = vunpack.c.1.s8 %v898
        %v1427 = vunpack.c.1.s8 %v899
        %v1428 = vunpack.c.1.s8 %v900
        %v1429 = vunpack.c.2.s8 %v895
        %v1430 = vunpack.c.2.s8 %v896
        %v1431 = vunpack.c.2.s8 %v897
        %v1432 = vunpack.c.2.s8 %v898
        %v1433 = vunpack.c.2.s8 %v899
        %v1434 = vunpack.c.2.s8 %v900
        %v1435 = vunpack.c.3.s8 %v895
        %v1436 = vunpack.c.3.s8 %v896
        %v1437 = vunpack.c.3.s8 %v897
        %v1438 = vunpack.c.3.s8 %v898
        %v1439 = vunpack.c.3.s8 %v899
        %v1440 = vunpack.c.3.s8 %v900
        %v1441 = vunpack.c.0.s8 %v901
        %v1442 = vunpack.c.0.s8 %v902
        %v1443 = vunpack.c.0.s8 %v903
        %v1444 = vunpack.c.0.s8 %v904
        %v1445 = vunpack.c.0.s8 %v905
        %v1446 = vunpack.c.0.s8 %v906
        %v1447 = vunpack.c.1.s8 %v901
        %v1448 = vunpack.c.1.s8 %v902
        %v1449 = vunpack.c.1.s8 %v903
        %v1450 = vunpack.c.1.s8 %v904
        %v1451 = vunpack.c.1.s8 %v905
        %v1452 = vunpack.c.1.s8 %v906
        %v1453 = vunpack.c.2.s8 %v901
        %v1454 = vunpack.c.2.s8 %v902
        %v1455 = vunpack.c.2.s8 %v903
        %v1456 = vunpack.c.2.s8 %v904
        %v1457 = vunpack.c.2.s8 %v905
        %v1458 = vunpack.c.2.s8 %v906
        %v1459 = vunpack.c.3.s8 %v901
        %v1460 = vunpack.c.3.s8 %v902
        %v1461 = vunpack.c.3.s8 %v903
        %v1462 = vunpack.c.3.s8 %v904
        %v1463 = vunpack.c.3.s8 %v905
        %v1464 = vunpack.c.3.s8 %v906
        %v1465 = vunpack.c.0.s8 %v907
        %v1466 = vunpack.c.0.s8 %v908
        %v1467 = vunpack.c.0.s8 %v909
        %v1468 = vunpack.c.0.s8 %v910
        %v1469 = vunpack.c.0.s8 %v911
        %v1470 = vunpack.c.0.s8 %v912
        %v1471 = vunpack.c.1.s8 %v907
        %v1472 = vunpack.c.1.s8 %v908
        %v1473 = vunpack.c.1.s8 %v909
        %v1474 = vunpack.c.1.s8 %v910
        %v1475 = vunpack.c.1.s8 %v911
        %v1476 = vunpack.c.1.s8 %v912
        %v1477 = vunpack.c.2.s8 %v907
        %v1478 = vunpack.c.2.s8 %v908
        %v1479 = vunpack.c.2.s8 %v909
        %v1480 = vunpack.c.2.s8 %v910
        %v1481 = vunpack.c.2.s8 %v911
        %v1482 = vunpack.c.2.s8 %v912
        %v1483 = vunpack.c.3.s8 %v907
        %v1484 = vunpack.c.3.s8 %v908
        %v1485 = vunpack.c.3.s8 %v909
        %v1486 = vunpack.c.3.s8 %v910
        %v1487 = vunpack.c.3.s8 %v911
        %v1488 = vunpack.c.3.s8 %v912
        %v1489 = vunpack.c.0.s8 %v913
        %v1490 = vunpack.c.0.s8 %v914
        %v1491 = vunpack.c.0.s8 %v915
        %v1492 = vunpack.c.0.s8 %v916
        %v1493 = vunpack.c.0.s8 %v917
        %v1494 = vunpack.c.0.s8 %v918
        %v1495 = vunpack.c.1.s8 %v913
        %v1496 = vunpack.c.1.s8 %v914
        %v1497 = vunpack.c.1.s8 %v915
        %v1498 = vunpack.c.1.s8 %v916
        %v1499 = vunpack.c.1.s8 %v917
        %v1500 = vunpack.c.1.s8 %v918
        %v1501 = vunpack.c.2.s8 %v913
        %v1502 = vunpack.c.2.s8 %v914
        %v1503 = vunpack.c.2.s8 %v915
        %v1504 = vunpack.c.2.s8 %v916
        %v1505 = vunpack.c.2.s8 %v917
        %v1506 = vunpack.c.2.s8 %v918
        %v1507 = vunpack.c.3.s8 %v913
        %v1508 = vunpack.c.3.s8 %v914
        %v1509 = vunpack.c.3.s8 %v915
        %v1510 = vunpack.c.3.s8 %v916
        %v1511 = vunpack.c.3.s8 %v917
        %v1512 = vunpack.c.3.s8 %v918
        %v1513 = vunpack.c.0.s8 %v919
        %v1514 = vunpack.c.0.s8 %v920
        %v1515 = vunpack.c.0.s8 %v921
        %v1516 = vunpack.c.0.s8 %v922
        %v1517 = vunpack.c.0.s8 %v923
        %v1518 = vunpack.c.0.s8 %v924
        %v1519 = vunpack.c.1.s8 %v919
        %v1520 = vunpack.c.1.s8 %v920
        %v1521 = vunpack.c.1.s8 %v921
        %v1522 = vunpack.c.1.s8 %v922
        %v1523 = vunpack.c.1.s8 %v923
        %v1524 = vunpack.c.1.s8 %v924
        %v1525 = vunpack.c.2.s8 %v919
        %v1526 = vunpack.c.2.s8 %v920
        %v1527 = vunpack.c.2.s8 %v921
        %v1528 = vunpack.c.2.s8 %v922
        %v1529 = vunpack.c.2.s8 %v923
        %v1530 = vunpack.c.2.s8 %v924
        %v1531 = vunpack.c.3.s8 %v919
        %v1532 = vunpack.c.3.s8 %v920
        %v1533 = vunpack.c.3.s8 %v921
        %v1534 = vunpack.c.3.s8 %v922
        %v1535 = vunpack.c.3.s8 %v923
        %v1536 = vunpack.c.3.s8 %v924
        %v1537 = vunpack.c.0.s8 %v925
        %v1538 = vunpack.c.0.s8 %v926
        %v1539 = vunpack.c.0.s8 %v927
        %v1540 = vunpack.c.0.s8 %v928
        %v1541 = vunpack.c.0.s8 %v929
        %v1542 = vunpack.c.0.s8 %v930
        %v1543 = vunpack.c.1.s8 %v925
        %v1544 = vunpack.c.1.s8 %v926
        %v1545 = vunpack.c.1.s8 %v927
        %v1546 = vunpack.c.1.s8 %v928
        %v1547 = vunpack.c.1.s8 %v929
        %v1548 = vunpack.c.1.s8 %v930
        %v1549 = vunpack.c.2.s8 %v925
        %v1550 = vunpack.c.2.s8 %v926
        %v1551 = vunpack.c.2.s8 %v927
        %v1552 = vunpack.c.2.s8 %v928
        %v1553 = vunpack.c.2.s8 %v929
        %v1554 = vunpack.c.2.s8 %v930
        %v1555 = vunpack.c.3.s8 %v925
        %v1556 = vunpack.c.3.s8 %v926
        %v1557 = vunpack.c.3.s8 %v927
        %v1558 = vunpack.c.3.s8 %v928
        %v1559 = vunpack.c.3.s8 %v929
        %v1560 = vunpack.c.3.s8 %v930
        %v1561 = vunpack.c.0.s8 %v931
        %v1562 = vunpack.c.0.s8 %v932
        %v1563 = vunpack.c.0.s8 %v933
        %v1564 = vunpack.c.0.s8 %v934
        %v1565 = vunpack.c.0.s8 %v935
        %v1566 = vunpack.c.0.s8 %v936
        %v1567 = vunpack.c.1.s8 %v931
        %v1568 = vunpack.c.1.s8 %v932
        %v1569 = vunpack.c.1.s8 %v933
        %v1570 = vunpack.c.1.s8 %v934
        %v1571 = vunpack.c.1.s8 %v935
        %v1572 = vunpack.c.1.s8 %v936
        %v1573 = vunpack.c.2.s8 %v931
        %v1574 = vunpack.c.2.s8 %v932
        %v1575 = vunpack.c.2.s8 %v933
        %v1576 = vunpack.c.2.s8 %v934
        %v1577 = vunpack.c.2.s8 %v935
        %v1578 = vunpack.c.2.s8 %v936
        %v1579 = vunpack.c.3.s8 %v931
        %v1580 = vunpack.c.3.s8 %v932
        %v1581 = vunpack.c.3.s8 %v933
        %v1582 = vunpack.c.3.s8 %v934
        %v1583 = vunpack.c.3.s8 %v935
        %v1584 = vunpack.c.3.s8 %v936
        %v1585 = vunpack.c.0.s8 %v937
        %v1586 = vunpack.c.0.s8 %v938
        %v1587 = vunpack.c.0.s8 %v939
        %v1588 = vunpack.c.0.s8 %v940
        %v1589 = vunpack.c.0.s8 %v941
        %v1590 = vunpack.c.0.s8 %v942
        %v1591 = vunpack.c.1.s8 %v937
        %v1592 = vunpack.c.1.s8 %v938
        %v1593 = vunpack.c.1.s8 %v939
        %v1594 = vunpack.c.1.s8 %v940
        %v1595 = vunpack.c.1.s8 %v941
        %v1596 = vunpack.c.1.s8 %v942
        %v1597 = vunpack.c.2.s8 %v937
        %v1598 = vunpack.c.2.s8 %v938
        %v1599 = vunpack.c.2.s8 %v939
        %v1600 = vunpack.c.2.s8 %v940
        %v1601 = vunpack.c.2.s8 %v941
        %v1602 = vunpack.c.2.s8 %v942
        %v1603 = vunpack.c.3.s8 %v937
        %v1604 = vunpack.c.3.s8 %v938
        %v1605 = vunpack.c.3.s8 %v939
        %v1606 = vunpack.c.3.s8 %v940
        %v1607 = vunpack.c.3.s8 %v941
        %v1608 = vunpack.c.3.s8 %v942
        %v1609 = vunpack.c.0.s8 %v943
        %v1610 = vunpack.c.0.s8 %v944
        %v1611 = vunpack.c.0.s8 %v945
        %v1612 = vunpack.c.0.s8 %v946
        %v1613 = vunpack.c.0.s8 %v947
        %v1614 = vunpack.c.0.s8 %v948
        %v1615 = vunpack.c.1.s8 %v943
        %v1616 = vunpack.c.1.s8 %v944
        %v1617 = vunpack.c.1.s8 %v945
        %v1618 = vunpack.c.1.s8 %v946
        %v1619 = vunpack.c.1.s8 %v947
        %v1620 = vunpack.c.1.s8 %v948
        %v1621 = vunpack.c.2.s8 %v943
        %v1622 = vunpack.c.2.s8 %v944
        %v1623 = vunpack.c.2.s8 %v945
        %v1624 = vunpack.c.2.s8 %v946
        %v1625 = vunpack.c.2.s8 %v947
        %v1626 = vunpack.c.2.s8 %v948
        %v1627 = vunpack.c.3.s8 %v943
        %v1628 = vunpack.c.3.s8 %v944
        %v1629 = vunpack.c.3.s8 %v945
        %v1630 = vunpack.c.3.s8 %v946
        %v1631 = vunpack.c.3.s8 %v947
        %v1632 = vunpack.c.3.s8 %v948
        %v1633 = vunpack.c.0.s8 %v949
        %v1634 = vunpack.c.0.s8 %v950
        %v1635 = vunpack.c.0.s8 %v951
        %v1636 = vunpack.c.0.s8 %v952
        %v1637 = vunpack.c.0.s8 %v953
        %v1638 = vunpack.c.0.s8 %v954
        %v1639 = vunpack.c.1.s8 %v949
        %v1640 = vunpack.c.1.s8 %v950
        %v1641 = vunpack.c.1.s8 %v951
        %v1642 = vunpack.c.1.s8 %v952
        %v1643 = vunpack.c.1.s8 %v953
        %v1644 = vunpack.c.1.s8 %v954
        %v1645 = vunpack.c.2.s8 %v949
        %v1646 = vunpack.c.2.s8 %v950
        %v1647 = vunpack.c.2.s8 %v951
        %v1648 = vunpack.c.2.s8 %v952
        %v1649 = vunpack.c.2.s8 %v953
        %v1650 = vunpack.c.2.s8 %v954
        %v1651 = vunpack.c.3.s8 %v949
        %v1652 = vunpack.c.3.s8 %v950
        %v1653 = vunpack.c.3.s8 %v951
        %v1654 = vunpack.c.3.s8 %v952
        %v1655 = vunpack.c.3.s8 %v953
        %v1656 = vunpack.c.3.s8 %v954
        %v1657 = vunpack.c.0.s8 %v955
        %v1658 = vunpack.c.0.s8 %v956
        %v1659 = vunpack.c.0.s8 %v957
        %v1660 = vunpack.c.0.s8 %v958
        %v1661 = vunpack.c.0.s8 %v959
        %v1662 = vunpack.c.0.s8 %v960
        %v1663 = vunpack.c.1.s8 %v955
        %v1664 = vunpack.c.1.s8 %v956
        %v1665 = vunpack.c.1.s8 %v957
        %v1666 = vunpack.c.1.s8 %v958
        %v1667 = vunpack.c.1.s8 %v959
        %v1668 = vunpack.c.1.s8 %v960
        %v1669 = vunpack.c.2.s8 %v955
        %v1670 = vunpack.c.2.s8 %v956
        %v1671 = vunpack.c.2.s8 %v957
        %v1672 = vunpack.c.2.s8 %v958
        %v1673 = vunpack.c.2.s8 %v959
        %v1674 = vunpack.c.2.s8 %v960
        %v1675 = vunpack.c.3.s8 %v955
        %v1676 = vunpack.c.3.s8 %v956
        %v1677 = vunpack.c.3.s8 %v957
        %v1678 = vunpack.c.3.s8 %v958
        %v1679 = vunpack.c.3.s8 %v959
        %v1680 = vunpack.c.3.s8 %v960
        %v1681 = vunpack.c.0.s8 %v961
        %v1682 = vunpack.c.0.s8 %v962
        %v1683 = vunpack.c.0.s8 %v963
        %v1684 = vunpack.c.0.s8 %v964
        %v1685 = vunpack.c.0.s8 %v965
        %v1686 = vunpack.c.0.s8 %v966
        %v1687 = vunpack.c.1.s8 %v961
        %v1688 = vunpack.c.1.s8 %v962
        %v1689 = vunpack.c.1.s8 %v963
        %v1690 = vunpack.c.1.s8 %v964
        %v1691 = vunpack.c.1.s8 %v965
        %v1692 = vunpack.c.1.s8 %v966
        %v1693 = vunpack.c.2.s8 %v961
        %v1694 = vunpack.c.2.s8 %v962
        %v1695 = vunpack.c.2.s8 %v963
        %v1696 = vunpack.c.2.s8 %v964
        %v1697 = vunpack.c.2.s8 %v965
        %v1698 = vunpack.c.2.s8 %v966
        %v1699 = vunpack.c.3.s8 %v961
        %v1700 = vunpack.c.3.s8 %v962
        %v1701 = vunpack.c.3.s8 %v963
        %v1702 = vunpack.c.3.s8 %v964
        %v1703 = vunpack.c.3.s8 %v965
        %v1704 = vunpack.c.3.s8 %v966
        %v1705 = vunpack.c.0.s8 %v967
        %v1706 = vunpack.c.0.s8 %v968
        %v1707 = vunpack.c.0.s8 %v969
        %v1708 = vunpack.c.0.s8 %v970
        %v1709 = vunpack.c.0.s8 %v971
        %v1710 = vunpack.c.0.s8 %v972
        %v1711 = vunpack.c.1.s8 %v967
        %v1712 = vunpack.c.1.s8 %v968
        %v1713 = vunpack.c.1.s8 %v969
        %v1714 = vunpack.c.1.s8 %v970
        %v1715 = vunpack.c.1.s8 %v971
        %v1716 = vunpack.c.1.s8 %v972
        %v1717 = vunpack.c.2.s8 %v967
        %v1718 = vunpack.c.2.s8 %v968
        %v1719 = vunpack.c.2.s8 %v969
        %v1720 = vunpack.c.2.s8 %v970
        %v1721 = vunpack.c.2.s8 %v971
        %v1722 = vunpack.c.2.s8 %v972
        %v1723 = vunpack.c.3.s8 %v967
        %v1724 = vunpack.c.3.s8 %v968
        %v1725 = vunpack.c.3.s8 %v969
        %v1726 = vunpack.c.3.s8 %v970
        %v1727 = vunpack.c.3.s8 %v971
        %v1728 = vunpack.c.3.s8 %v972
        %v1729 = vunpack.c.0.s8 %v973
        %v1730 = vunpack.c.0.s8 %v974
        %v1731 = vunpack.c.0.s8 %v975
        %v1732 = vunpack.c.0.s8 %v976
        %v1733 = vunpack.c.0.s8 %v977
        %v1734 = vunpack.c.0.s8 %v978
        %v1735 = vunpack.c.1.s8 %v973
        %v1736 = vunpack.c.1.s8 %v974
        %v1737 = vunpack.c.1.s8 %v975
        %v1738 = vunpack.c.1.s8 %v976
        %v1739 = vunpack.c.1.s8 %v977
        %v1740 = vunpack.c.1.s8 %v978
        %v1741 = vunpack.c.2.s8 %v973
        %v1742 = vunpack.c.2.s8 %v974
        %v1743 = vunpack.c.2.s8 %v975
        %v1744 = vunpack.c.2.s8 %v976
        %v1745 = vunpack.c.2.s8 %v977
        %v1746 = vunpack.c.2.s8 %v978
        %v1747 = vunpack.c.3.s8 %v973
        %v1748 = vunpack.c.3.s8 %v974
        %v1749 = vunpack.c.3.s8 %v975
        %v1750 = vunpack.c.3.s8 %v976
        %v1751 = vunpack.c.3.s8 %v977
        %v1752 = vunpack.c.3.s8 %v978
        %v1753 = vunpack.c.0.s8 %v979
        %v1754 = vunpack.c.0.s8 %v980
        %v1755 = vunpack.c.0.s8 %v981
        %v1756 = vunpack.c.0.s8 %v982
        %v1757 = vunpack.c.0.s8 %v983
        %v1758 = vunpack.c.0.s8 %v984
        %v1759 = vunpack.c.1.s8 %v979
        %v1760 = vunpack.c.1.s8 %v980
        %v1761 = vunpack.c.1.s8 %v981
        %v1762 = vunpack.c.1.s8 %v982
        %v1763 = vunpack.c.1.s8 %v983
        %v1764 = vunpack.c.1.s8 %v984
        %v1765 = vunpack.c.2.s8 %v979
        %v1766 = vunpack.c.2.s8 %v980
        %v1767 = vunpack.c.2.s8 %v981
        %v1768 = vunpack.c.2.s8 %v982
        %v1769 = vunpack.c.2.s8 %v983
        %v1770 = vunpack.c.2.s8 %v984
        %v1771 = vunpack.c.3.s8 %v979
        %v1772 = vunpack.c.3.s8 %v980
        %v1773 = vunpack.c.3.s8 %v981
        %v1774 = vunpack.c.3.s8 %v982
        %v1775 = vunpack.c.3.s8 %v983
        %v1776 = vunpack.c.3.s8 %v984
        %v1777 = vunpack.c.0.s8 %v985
        %v1778 = vunpack.c.0.s8 %v986
        %v1779 = vunpack.c.0.s8 %v987
        %v1780 = vunpack.c.0.s8 %v988
        %v1781 = vunpack.c.0.s8 %v989
        %v1782 = vunpack.c.0.s8 %v990
        %v1783 = vunpack.c.1.s8 %v985
        %v1784 = vunpack.c.1.s8 %v986
        %v1785 = vunpack.c.1.s8 %v987
        %v1786 = vunpack.c.1.s8 %v988
        %v1787 = vunpack.c.1.s8 %v989
        %v1788 = vunpack.c.1.s8 %v990
        %v1789 = vunpack.c.2.s8 %v985
        %v1790 = vunpack.c.2.s8 %v986
        %v1791 = vunpack.c.2.s8 %v987
        %v1792 = vunpack.c.2.s8 %v988
        %v1793 = vunpack.c.2.s8 %v989
        %v1794 = vunpack.c.2.s8 %v990
        %v1795 = vunpack.c.3.s8 %v985
        %v1796 = vunpack.c.3.s8 %v986
        %v1797 = vunpack.c.3.s8 %v987
        %v1798 = vunpack.c.3.s8 %v988
        %v1799 = vunpack.c.3.s8 %v989
        %v1800 = vunpack.c.3.s8 %v990
        %v1801 = vunpack.c.0.s8 %v991
        %v1802 = vunpack.c.0.s8 %v992
        %v1803 = vunpack.c.0.s8 %v993
        %v1804 = vunpack.c.0.s8 %v994
        %v1805 = vunpack.c.0.s8 %v995
        %v1806 = vunpack.c.0.s8 %v996
        %v1807 = vunpack.c.1.s8 %v991
        %v1808 = vunpack.c.1.s8 %v992
        %v1809 = vunpack.c.1.s8 %v993
        %v1810 = vunpack.c.1.s8 %v994
        %v1811 = vunpack.c.1.s8 %v995
        %v1812 = vunpack.c.1.s8 %v996
        %v1813 = vunpack.c.2.s8 %v991
        %v1814 = vunpack.c.2.s8 %v992
        %v1815 = vunpack.c.2.s8 %v993
        %v1816 = vunpack.c.2.s8 %v994
        %v1817 = vunpack.c.2.s8 %v995
        %v1818 = vunpack.c.2.s8 %v996
        %v1819 = vunpack.c.3.s8 %v991
        %v1820 = vunpack.c.3.s8 %v992
        %v1821 = vunpack.c.3.s8 %v993
        %v1822 = vunpack.c.3.s8 %v994
        %v1823 = vunpack.c.3.s8 %v995
        %v1824 = vunpack.c.3.s8 %v996
        %v1825 = vunpack.c.0.s8 %v997
        %v1826 = vunpack.c.0.s8 %v998
        %v1827 = vunpack.c.0.s8 %v999
        %v1828 = vunpack.c.0.s8 %v1000
        %v1829 = vunpack.c.0.s8 %v1001
        %v1830 = vunpack.c.0.s8 %v1002
        %v1831 = vunpack.c.1.s8 %v997
        %v1832 = vunpack.c.1.s8 %v998
        %v1833 = vunpack.c.1.s8 %v999
        %v1834 = vunpack.c.1.s8 %v1000
        %v1835 = vunpack.c.1.s8 %v1001
        %v1836 = vunpack.c.1.s8 %v1002
        %v1837 = vunpack.c.2.s8 %v997
        %v1838 = vunpack.c.2.s8 %v998
        %v1839 = vunpack.c.2.s8 %v999
        %v1840 = vunpack.c.2.s8 %v1000
        %v1841 = vunpack.c.2.s8 %v1001
        %v1842 = vunpack.c.2.s8 %v1002
        %v1843 = vunpack.c.3.s8 %v997
        %v1844 = vunpack.c.3.s8 %v998
        %v1845 = vunpack.c.3.s8 %v999
        %v1846 = vunpack.c.3.s8 %v1000
        %v1847 = vunpack.c.3.s8 %v1001
        %v1848 = vunpack.c.3.s8 %v1002
        %v1849 = vunpack.c.0.s8 %v1003
        %v1850 = vunpack.c.0.s8 %v1004
        %v1851 = vunpack.c.0.s8 %v1005
        %v1852 = vunpack.c.0.s8 %v1006
        %v1853 = vunpack.c.0.s8 %v1007
        %v1854 = vunpack.c.0.s8 %v1008
        %v1855 = vunpack.c.1.s8 %v1003
        %v1856 = vunpack.c.1.s8 %v1004
        %v1857 = vunpack.c.1.s8 %v1005
        %v1858 = vunpack.c.1.s8 %v1006
        %v1859 = vunpack.c.1.s8 %v1007
        %v1860 = vunpack.c.1.s8 %v1008
        %v1861 = vunpack.c.2.s8 %v1003
        %v1862 = vunpack.c.2.s8 %v1004
        %v1863 = vunpack.c.2.s8 %v1005
        %v1864 = vunpack.c.2.s8 %v1006
        %v1865 = vunpack.c.2.s8 %v1007
        %v1866 = vunpack.c.2.s8 %v1008
        %v1867 = vunpack.c.3.s8 %v1003
        %v1868 = vunpack.c.3.s8 %v1004
        %v1869 = vunpack.c.3.s8 %v1005
        %v1870 = vunpack.c.3.s8 %v1006
        %v1871 = vunpack.c.3.s8 %v1007
        %v1872 = vunpack.c.3.s8 %v1008
        %v1873 = vunpack.c.0.s8 %v1009
        %v1874 = vunpack.c.0.s8 %v1010
        %v1875 = vunpack.c.0.s8 %v1011
        %v1876 = vunpack.c.0.s8 %v1012
        %v1877 = vunpack.c.0.s8 %v1013
        %v1878 = vunpack.c.0.s8 %v1014
        %v1879 = vunpack.c.1.s8 %v1009
        %v1880 = vunpack.c.1.s8 %v1010
        %v1881 = vunpack.c.1.s8 %v1011
        %v1882 = vunpack.c.1.s8 %v1012
        %v1883 = vunpack.c.1.s8 %v1013
        %v1884 = vunpack.c.1.s8 %v1014
        %v1885 = vunpack.c.2.s8 %v1009
        %v1886 = vunpack.c.2.s8 %v1010
        %v1887 = vunpack.c.2.s8 %v1011
        %v1888 = vunpack.c.2.s8 %v1012
        %v1889 = vunpack.c.2.s8 %v1013
        %v1890 = vunpack.c.2.s8 %v1014
        %v1891 = vunpack.c.3.s8 %v1009
        %v1892 = vunpack.c.3.s8 %v1010
        %v1893 = vunpack.c.3.s8 %v1011
        %v1894 = vunpack.c.3.s8 %v1012
        %v1895 = vunpack.c.3.s8 %v1013
        %v1896 = vunpack.c.3.s8 %v1014
        %v1897 = vunpack.c.0.s8 %v1015
        %v1898 = vunpack.c.0.s8 %v1016
        %v1899 = vunpack.c.0.s8 %v1017
        %v1900 = vunpack.c.0.s8 %v1018
        %v1901 = vunpack.c.0.s8 %v1019
        %v1902 = vunpack.c.0.s8 %v1020
        %v1903 = vunpack.c.1.s8 %v1015
        %v1904 = vunpack.c.1.s8 %v1016
        %v1905 = vunpack.c.1.s8 %v1017
        %v1906 = vunpack.c.1.s8 %v1018
        %v1907 = vunpack.c.1.s8 %v1019
        %v1908 = vunpack.c.1.s8 %v1020
        %v1909 = vunpack.c.2.s8 %v1015
        %v1910 = vunpack.c.2.s8 %v1016
        %v1911 = vunpack.c.2.s8 %v1017
        %v1912 = vunpack.c.2.s8 %v1018
        %v1913 = vunpack.c.2.s8 %v1019
        %v1914 = vunpack.c.2.s8 %v1020
        %v1915 = vunpack.c.3.s8 %v1015
        %v1916 = vunpack.c.3.s8 %v1016
        %v1917 = vunpack.c.3.s8 %v1017
        %v1918 = vunpack.c.3.s8 %v1018
        %v1919 = vunpack.c.3.s8 %v1019
        %v1920 = vunpack.c.3.s8 %v1020
        %v1921 = vunpack.c.0.s8 %v1021
        %v1922 = vunpack.c.0.s8 %v1022
        %v1923 = vunpack.c.0.s8 %v1023
        %v1924 = vunpack.c.0.s8 %v1024
        %v1925 = vunpack.c.0.s8 %v1025
        %v1926 = vunpack.c.0.s8 %v1026
        %v1927 = vunpack.c.1.s8 %v1021
        %v1928 = vunpack.c.1.s8 %v1022
        %v1929 = vunpack.c.1.s8 %v1023
        %v1930 = vunpack.c.1.s8 %v1024
        %v1931 = vunpack.c.1.s8 %v1025
        %v1932 = vunpack.c.1.s8 %v1026
        %v1933 = vunpack.c.2.s8 %v1021
        %v1934 = vunpack.c.2.s8 %v1022
        %v1935 = vunpack.c.2.s8 %v1023
        %v1936 = vunpack.c.2.s8 %v1024
        %v1937 = vunpack.c.2.s8 %v1025
        %v1938 = vunpack.c.2.s8 %v1026
        %v1939 = vunpack.c.3.s8 %v1021
        %v1940 = vunpack.c.3.s8 %v1022
        %v1941 = vunpack.c.3.s8 %v1023
        %v1942 = vunpack.c.3.s8 %v1024
        %v1943 = vunpack.c.3.s8 %v1025
        %v1944 = vunpack.c.3.s8 %v1026
        %v1945 = vunpack.c.0.s8 %v1027
        %v1946 = vunpack.c.0.s8 %v1028
        %v1947 = vunpack.c.0.s8 %v1029
        %v1948 = vunpack.c.0.s8 %v1030
        %v1949 = vunpack.c.0.s8 %v1031
        %v1950 = vunpack.c.0.s8 %v1032
        %v1951 = vunpack.c.1.s8 %v1027
        %v1952 = vunpack.c.1.s8 %v1028
        %v1953 = vunpack.c.1.s8 %v1029
        %v1954 = vunpack.c.1.s8 %v1030
        %v1955 = vunpack.c.1.s8 %v1031
        %v1956 = vunpack.c.1.s8 %v1032
        %v1957 = vunpack.c.2.s8 %v1027
        %v1958 = vunpack.c.2.s8 %v1028
        %v1959 = vunpack.c.2.s8 %v1029
        %v1960 = vunpack.c.2.s8 %v1030
        %v1961 = vunpack.c.2.s8 %v1031
        %v1962 = vunpack.c.2.s8 %v1032
        %v1963 = vunpack.c.3.s8 %v1027
        %v1964 = vunpack.c.3.s8 %v1028
        %v1965 = vunpack.c.3.s8 %v1029
        %v1966 = vunpack.c.3.s8 %v1030
        %v1967 = vunpack.c.3.s8 %v1031
        %v1968 = vunpack.c.3.s8 %v1032
        %v1969 = vunpack.c.0.s8 %v1033
        %v1970 = vunpack.c.0.s8 %v1034
        %v1971 = vunpack.c.0.s8 %v1035
        %v1972 = vunpack.c.0.s8 %v1036
        %v1973 = vunpack.c.0.s8 %v1037
        %v1974 = vunpack.c.0.s8 %v1038
        %v1975 = vunpack.c.1.s8 %v1033
        %v1976 = vunpack.c.1.s8 %v1034
        %v1977 = vunpack.c.1.s8 %v1035
        %v1978 = vunpack.c.1.s8 %v1036
        %v1979 = vunpack.c.1.s8 %v1037
        %v1980 = vunpack.c.1.s8 %v1038
        %v1981 = vunpack.c.2.s8 %v1033
        %v1982 = vunpack.c.2.s8 %v1034
        %v1983 = vunpack.c.2.s8 %v1035
        %v1984 = vunpack.c.2.s8 %v1036
        %v1985 = vunpack.c.2.s8 %v1037
        %v1986 = vunpack.c.2.s8 %v1038
        %v1987 = vunpack.c.3.s8 %v1033
        %v1988 = vunpack.c.3.s8 %v1034
        %v1989 = vunpack.c.3.s8 %v1035
        %v1990 = vunpack.c.3.s8 %v1036
        %v1991 = vunpack.c.3.s8 %v1037
        %v1992 = vunpack.c.3.s8 %v1038
        %v1993 = vunpack.c.0.s8 %v1039
        %v1994 = vunpack.c.0.s8 %v1040
        %v1995 = vunpack.c.0.s8 %v1041
        %v1996 = vunpack.c.0.s8 %v1042
        %v1997 = vunpack.c.0.s8 %v1043
        %v1998 = vunpack.c.0.s8 %v1044
        %v1999 = vunpack.c.1.s8 %v1039
        %v2000 = vunpack.c.1.s8 %v1040
        %v2001 = vunpack.c.1.s8 %v1041
        %v2002 = vunpack.c.1.s8 %v1042
        %v2003 = vunpack.c.1.s8 %v1043
        %v2004 = vunpack.c.1.s8 %v1044
        %v2005 = vunpack.c.2.s8 %v1039
        %v2006 = vunpack.c.2.s8 %v1040
        %v2007 = vunpack.c.2.s8 %v1041
        %v2008 = vunpack.c.2.s8 %v1042
        %v2009 = vunpack.c.2.s8 %v1043
        %v2010 = vunpack.c.2.s8 %v1044
        %v2011 = vunpack.c.3.s8 %v1039
        %v2012 = vunpack.c.3.s8 %v1040
        %v2013 = vunpack.c.3.s8 %v1041
        %v2014 = vunpack.c.3.s8 %v1042
        %v2015 = vunpack.c.3.s8 %v1043
        %v2016 = vunpack.c.3.s8 %v1044
        %v2017 = vunpack.c.0.s8 %v1045
        %v2018 = vunpack.c.0.s8 %v1046
        %v2019 = vunpack.c.0.s8 %v1047
        %v2020 = vunpack.c.0.s8 %v1048
        %v2021 = vunpack.c.0.s8 %v1049
        %v2022 = vunpack.c.0.s8 %v1050
        %v2023 = vunpack.c.1.s8 %v1045
        %v2024 = vunpack.c.1.s8 %v1046
        %v2025 = vunpack.c.1.s8 %v1047
        %v2026 = vunpack.c.1.s8 %v1048
        %v2027 = vunpack.c.1.s8 %v1049
        %v2028 = vunpack.c.1.s8 %v1050
        %v2029 = vunpack.c.2.s8 %v1045
        %v2030 = vunpack.c.2.s8 %v1046
        %v2031 = vunpack.c.2.s8 %v1047
        %v2032 = vunpack.c.2.s8 %v1048
        %v2033 = vunpack.c.2.s8 %v1049
        %v2034 = vunpack.c.2.s8 %v1050
        %v2035 = vunpack.c.3.s8 %v1045
        %v2036 = vunpack.c.3.s8 %v1046
        %v2037 = vunpack.c.3.s8 %v1047
        %v2038 = vunpack.c.3.s8 %v1048
        %v2039 = vunpack.c.3.s8 %v1049
        %v2040 = vunpack.c.3.s8 %v1050
        %v2041 = vunpack.c.0.s8 %v1051
        %v2042 = vunpack.c.0.s8 %v1052
        %v2043 = vunpack.c.0.s8 %v1053
        %v2044 = vunpack.c.0.s8 %v1054
        %v2045 = vunpack.c.0.s8 %v1055
        %v2046 = vunpack.c.0.s8 %v1056
        %v2047 = vunpack.c.1.s8 %v1051
        %v2048 = vunpack.c.1.s8 %v1052
        %v2049 = vunpack.c.1.s8 %v1053
        %v2050 = vunpack.c.1.s8 %v1054
        %v2051 = vunpack.c.1.s8 %v1055
        %v2052 = vunpack.c.1.s8 %v1056
        %v2053 = vunpack.c.2.s8 %v1051
        %v2054 = vunpack.c.2.s8 %v1052
        %v2055 = vunpack.c.2.s8 %v1053
        %v2056 = vunpack.c.2.s8 %v1054
        %v2057 = vunpack.c.2.s8 %v1055
        %v2058 = vunpack.c.2.s8 %v1056
        %v2059 = vunpack.c.3.s8 %v1051
        %v2060 = vunpack.c.3.s8 %v1052
        %v2061 = vunpack.c.3.s8 %v1053
        %v2062 = vunpack.c.3.s8 %v1054
        %v2063 = vunpack.c.3.s8 %v1055
        %v2064 = vunpack.c.3.s8 %v1056
        %v2065 = vunpack.c.0.s8 %v1057
        %v2066 = vunpack.c.0.s8 %v1058
        %v2067 = vunpack.c.0.s8 %v1059
        %v2068 = vunpack.c.0.s8 %v1060
        %v2069 = vunpack.c.0.s8 %v1061
        %v2070 = vunpack.c.0.s8 %v1062
        %v2071 = vunpack.c.1.s8 %v1057
        %v2072 = vunpack.c.1.s8 %v1058
        %v2073 = vunpack.c.1.s8 %v1059
        %v2074 = vunpack.c.1.s8 %v1060
        %v2075 = vunpack.c.1.s8 %v1061
        %v2076 = vunpack.c.1.s8 %v1062
        %v2077 = vunpack.c.2.s8 %v1057
        %v2078 = vunpack.c.2.s8 %v1058
        %v2079 = vunpack.c.2.s8 %v1059
        %v2080 = vunpack.c.2.s8 %v1060
        %v2081 = vunpack.c.2.s8 %v1061
        %v2082 = vunpack.c.2.s8 %v1062
        %v2083 = vunpack.c.3.s8 %v1057
        %v2084 = vunpack.c.3.s8 %v1058
        %v2085 = vunpack.c.3.s8 %v1059
        %v2086 = vunpack.c.3.s8 %v1060
        %v2087 = vunpack.c.3.s8 %v1061
        %v2088 = vunpack.c.3.s8 %v1062
        %v2089 = vunpack.c.0.s8 %v1063
        %v2090 = vunpack.c.0.s8 %v1064
        %v2091 = vunpack.c.0.s8 %v1065
        %v2092 = vunpack.c.0.s8 %v1066
        %v2093 = vunpack.c.0.s8 %v1067
        %v2094 = vunpack.c.0.s8 %v1068
        %v2095 = vunpack.c.1.s8 %v1063
        %v2096 = vunpack.c.1.s8 %v1064
        %v2097 = vunpack.c.1.s8 %v1065
        %v2098 = vunpack.c.1.s8 %v1066
        %v2099 = vunpack.c.1.s8 %v1067
        %v2100 = vunpack.c.1.s8 %v1068
        %v2101 = vunpack.c.2.s8 %v1063
        %v2102 = vunpack.c.2.s8 %v1064
        %v2103 = vunpack.c.2.s8 %v1065
        %v2104 = vunpack.c.2.s8 %v1066
        %v2105 = vunpack.c.2.s8 %v1067
        %v2106 = vunpack.c.2.s8 %v1068
        %v2107 = vunpack.c.3.s8 %v1063
        %v2108 = vunpack.c.3.s8 %v1064
        %v2109 = vunpack.c.3.s8 %v1065
        %v2110 = vunpack.c.3.s8 %v1066
        %v2111 = vunpack.c.3.s8 %v1067
        %v2112 = vunpack.c.3.s8 %v1068
        %v2113 = vunpack.c.0.s8 %v1069
        %v2114 = vunpack.c.0.s8 %v1070
        %v2115 = vunpack.c.0.s8 %v1071
        %v2116 = vunpack.c.0.s8 %v1072
        %v2117 = vunpack.c.0.s8 %v1073
        %v2118 = vunpack.c.0.s8 %v1074
        %v2119 = vunpack.c.1.s8 %v1069
        %v2120 = vunpack.c.1.s8 %v1070
        %v2121 = vunpack.c.1.s8 %v1071
        %v2122 = vunpack.c.1.s8 %v1072
        %v2123 = vunpack.c.1.s8 %v1073
        %v2124 = vunpack.c.1.s8 %v1074
        %v2125 = vunpack.c.2.s8 %v1069
        %v2126 = vunpack.c.2.s8 %v1070
        %v2127 = vunpack.c.2.s8 %v1071
        %v2128 = vunpack.c.2.s8 %v1072
        %v2129 = vunpack.c.2.s8 %v1073
        %v2130 = vunpack.c.2.s8 %v1074
        %v2131 = vunpack.c.3.s8 %v1069
        %v2132 = vunpack.c.3.s8 %v1070
        %v2133 = vunpack.c.3.s8 %v1071
        %v2134 = vunpack.c.3.s8 %v1072
        %v2135 = vunpack.c.3.s8 %v1073
        %v2136 = vunpack.c.3.s8 %v1074
        %v2137 = vunpack.c.0.s8 %v1075
        %v2138 = vunpack.c.0.s8 %v1076
        %v2139 = vunpack.c.0.s8 %v1077
        %v2140 = vunpack.c.0.s8 %v1078
        %v2141 = vunpack.c.0.s8 %v1079
        %v2142 = vunpack.c.0.s8 %v1080
        %v2143 = vunpack.c.1.s8 %v1075
        %v2144 = vunpack.c.1.s8 %v1076
        %v2145 = vunpack.c.1.s8 %v1077
        %v2146 = vunpack.c.1.s8 %v1078
        %v2147 = vunpack.c.1.s8 %v1079
        %v2148 = vunpack.c.1.s8 %v1080
        %v2149 = vunpack.c.2.s8 %v1075
        %v2150 = vunpack.c.2.s8 %v1076
        %v2151 = vunpack.c.2.s8 %v1077
        %v2152 = vunpack.c.2.s8 %v1078
        %v2153 = vunpack.c.2.s8 %v1079
        %v2154 = vunpack.c.2.s8 %v1080
        %v2155 = vunpack.c.3.s8 %v1075
        %v2156 = vunpack.c.3.s8 %v1076
        %v2157 = vunpack.c.3.s8 %v1077
        %v2158 = vunpack.c.3.s8 %v1078
        %v2159 = vunpack.c.3.s8 %v1079
        %v2160 = vunpack.c.3.s8 %v1080
        %v2161 = vunpack.c.0.s8 %v1081
        %v2162 = vunpack.c.0.s8 %v1082
        %v2163 = vunpack.c.0.s8 %v1083
        %v2164 = vunpack.c.0.s8 %v1084
        %v2165 = vunpack.c.0.s8 %v1085
        %v2166 = vunpack.c.0.s8 %v1086
        %v2167 = vunpack.c.1.s8 %v1081
        %v2168 = vunpack.c.1.s8 %v1082
        %v2169 = vunpack.c.1.s8 %v1083
        %v2170 = vunpack.c.1.s8 %v1084
        %v2171 = vunpack.c.1.s8 %v1085
        %v2172 = vunpack.c.1.s8 %v1086
        %v2173 = vunpack.c.2.s8 %v1081
        %v2174 = vunpack.c.2.s8 %v1082
        %v2175 = vunpack.c.2.s8 %v1083
        %v2176 = vunpack.c.2.s8 %v1084
        %v2177 = vunpack.c.2.s8 %v1085
        %v2178 = vunpack.c.2.s8 %v1086
        %v2179 = vunpack.c.3.s8 %v1081
        %v2180 = vunpack.c.3.s8 %v1082
        %v2181 = vunpack.c.3.s8 %v1083
        %v2182 = vunpack.c.3.s8 %v1084
        %v2183 = vunpack.c.3.s8 %v1085
        %v2184 = vunpack.c.3.s8 %v1086
        %v2185 = vunpack.c.0.s8 %v1087
        %v2186 = vunpack.c.0.s8 %v1088
        %v2187 = vunpack.c.0.s8 %v1089
        %v2188 = vunpack.c.0.s8 %v1090
        %v2189 = vunpack.c.0.s8 %v1091
        %v2190 = vunpack.c.0.s8 %v1092
        %v2191 = vunpack.c.1.s8 %v1087
        %v2192 = vunpack.c.1.s8 %v1088
        %v2193 = vunpack.c.1.s8 %v1089
        %v2194 = vunpack.c.1.s8 %v1090
        %v2195 = vunpack.c.1.s8 %v1091
        %v2196 = vunpack.c.1.s8 %v1092
        %v2197 = vunpack.c.2.s8 %v1087
        %v2198 = vunpack.c.2.s8 %v1088
        %v2199 = vunpack.c.2.s8 %v1089
        %v2200 = vunpack.c.2.s8 %v1090
        %v2201 = vunpack.c.2.s8 %v1091
        %v2202 = vunpack.c.2.s8 %v1092
        %v2203 = vunpack.c.3.s8 %v1087
        %v2204 = vunpack.c.3.s8 %v1088
        %v2205 = vunpack.c.3.s8 %v1089
        %v2206 = vunpack.c.3.s8 %v1090
        %v2207 = vunpack.c.3.s8 %v1091
        %v2208 = vunpack.c.3.s8 %v1092
        %v2209 = vunpack.c.0.s8 %v1093
        %v2210 = vunpack.c.0.s8 %v1094
        %v2211 = vunpack.c.0.s8 %v1095
        %v2212 = vunpack.c.0.s8 %v1096
        %v2213 = vunpack.c.0.s8 %v1097
        %v2214 = vunpack.c.0.s8 %v1098
        %v2215 = vunpack.c.1.s8 %v1093
        %v2216 = vunpack.c.1.s8 %v1094
        %v2217 = vunpack.c.1.s8 %v1095
        %v2218 = vunpack.c.1.s8 %v1096
        %v2219 = vunpack.c.1.s8 %v1097
        %v2220 = vunpack.c.1.s8 %v1098
        %v2221 = vunpack.c.2.s8 %v1093
        %v2222 = vunpack.c.2.s8 %v1094
        %v2223 = vunpack.c.2.s8 %v1095
        %v2224 = vunpack.c.2.s8 %v1096
        %v2225 = vunpack.c.2.s8 %v1097
        %v2226 = vunpack.c.2.s8 %v1098
        %v2227 = vunpack.c.3.s8 %v1093
        %v2228 = vunpack.c.3.s8 %v1094
        %v2229 = vunpack.c.3.s8 %v1095
        %v2230 = vunpack.c.3.s8 %v1096
        %v2231 = vunpack.c.3.s8 %v1097
        %v2232 = vunpack.c.3.s8 %v1098
        %v2233 = vunpack.c.0.s8 %v1099
        %v2234 = vunpack.c.0.s8 %v1100
        %v2235 = vunpack.c.0.s8 %v1101
        %v2236 = vunpack.c.0.s8 %v1102
        %v2237 = vunpack.c.0.s8 %v1103
        %v2238 = vunpack.c.0.s8 %v1104
        %v2239 = vunpack.c.1.s8 %v1099
        %v2240 = vunpack.c.1.s8 %v1100
        %v2241 = vunpack.c.1.s8 %v1101
        %v2242 = vunpack.c.1.s8 %v1102
        %v2243 = vunpack.c.1.s8 %v1103
        %v2244 = vunpack.c.1.s8 %v1104
        %v2245 = vunpack.c.2.s8 %v1099
        %v2246 = vunpack.c.2.s8 %v1100
        %v2247 = vunpack.c.2.s8 %v1101
        %v2248 = vunpack.c.2.s8 %v1102
        %v2249 = vunpack.c.2.s8 %v1103
        %v2250 = vunpack.c.2.s8 %v1104
        %v2251 = vunpack.c.3.s8 %v1099
        %v2252 = vunpack.c.3.s8 %v1100
        %v2253 = vunpack.c.3.s8 %v1101
        %v2254 = vunpack.c.3.s8 %v1102
        %v2255 = vunpack.c.3.s8 %v1103
        %v2256 = vunpack.c.3.s8 %v1104
        %v2257 = vcvt.s32.f32 %v1105
        %v2258 = vcvt.s32.f32 %v1106
        %v2259 = vcvt.s32.f32 %v1107
        %v2260 = vcvt.s32.f32 %v1108
        %v2261 = vcvt.s32.f32 %v1109
        %v2262 = vcvt.s32.f32 %v1110
        %v2263 = vcvt.s32.f32 %v1111
        %v2264 = vcvt.s32.f32 %v1112
        %v2265 = vcvt.s32.f32 %v1113
        %v2266 = vcvt.s32.f32 %v1114
        %v2267 = vcvt.s32.f32 %v1115
        %v2268 = vcvt.s32.f32 %v1116
        %v2269 = vcvt.s32.f32 %v1117
        %v2270 = vcvt.s32.f32 %v1118
        %v2271 = vcvt.s32.f32 %v1119
        %v2272 = vcvt.s32.f32 %v1120
        %v2273 = vcvt.s32.f32 %v1121
        %v2274 = vcvt.s32.f32 %v1122
        %v2275 = vcvt.s32.f32 %v1123
        %v2276 = vcvt.s32.f32 %v1124
        %v2277 = vcvt.s32.f32 %v1125
        %v2278 = vcvt.s32.f32 %v1126
        %v2279 = vcvt.s32.f32 %v1127
        %v2280 = vcvt.s32.f32 %v1128
        %v2281 = vcvt.s32.f32 %v1129
        %v2282 = vcvt.s32.f32 %v1130
        %v2283 = vcvt.s32.f32 %v1131
        %v2284 = vcvt.s32.f32 %v1132
        %v2285 = vcvt.s32.f32 %v1133
        %v2286 = vcvt.s32.f32 %v1134
        %v2287 = vcvt.s32.f32 %v1135
        %v2288 = vcvt.s32.f32 %v1136
        %v2289 = vcvt.s32.f32 %v1137
        %v2290 = vcvt.s32.f32 %v1138
        %v2291 = vcvt.s32.f32 %v1139
        %v2292 = vcvt.s32.f32 %v1140
        %v2293 = vcvt.s32.f32 %v1141
        %v2294 = vcvt.s32.f32 %v1142
        %v2295 = vcvt.s32.f32 %v1143
        %v2296 = vcvt.s32.f32 %v1144
        %v2297 = vcvt.s32.f32 %v1145
        %v2298 = vcvt.s32.f32 %v1146
        %v2299 = vcvt.s32.f32 %v1147
        %v2300 = vcvt.s32.f32 %v1148
        %v2301 = vcvt.s32.f32 %v1149
        %v2302 = vcvt.s32.f32 %v1150
        %v2303 = vcvt.s32.f32 %v1151
        %v2304 = vcvt.s32.f32 %v1152
        %v2305 = vcvt.s32.f32 %v1153
        %v2306 = vcvt.s32.f32 %v1154
        %v2307 = vcvt.s32.f32 %v1155
        %v2308 = vcvt.s32.f32 %v1156
        %v2309 = vcvt.s32.f32 %v1157
        %v2310 = vcvt.s32.f32 %v1158
        %v2311 = vcvt.s32.f32 %v1159
        %v2312 = vcvt.s32.f32 %v1160
        %v2313 = vcvt.s32.f32 %v1161
        %v2314 = vcvt.s32.f32 %v1162
        %v2315 = vcvt.s32.f32 %v1163
        %v2316 = vcvt.s32.f32 %v1164
        %v2317 = vcvt.s32.f32 %v1165
        %v2318 = vcvt.s32.f32 %v1166
        %v2319 = vcvt.s32.f32 %v1167
        %v2320 = vcvt.s32.f32 %v1168
        %v2321 = vcvt.s32.f32 %v1169
        %v2322 = vcvt.s32.f32 %v1170
        %v2323 = vcvt.s32.f32 %v1171
        %v2324 = vcvt.s32.f32 %v1172
        %v2325 = vcvt.s32.f32 %v1173
        %v2326 = vcvt.s32.f32 %v1174
        %v2327 = vcvt.s32.f32 %v1175
        %v2328 = vcvt.s32.f32 %v1176
        %v2329 = vcvt.s32.f32 %v1177
        %v2330 = vcvt.s32.f32 %v1178
        %v2331 = vcvt.s32.f32 %v1179
        %v2332 = vcvt.s32.f32 %v1180
        %v2333 = vcvt.s32.f32 %v1181
        %v2334 = vcvt.s32.f32 %v1182
        %v2335 = vcvt.s32.f32 %v1183
        %v2336 = vcvt.s32.f32 %v1184
        %v2337 = vcvt.s32.f32 %v1185
        %v2338 = vcvt.s32.f32 %v1186
        %v2339 = vcvt.s32.f32 %v1187
        %v2340 = vcvt.s32.f32 %v1188
        %v2341 = vcvt.s32.f32 %v1189
        %v2342 = vcvt.s32.f32 %v1190
        %v2343 = vcvt.s32.f32 %v1191
        %v2344 = vcvt.s32.f32 %v1192
        %v2345 = vcvt.s32.f32 %v1193
        %v2346 = vcvt.s32.f32 %v1194
        %v2347 = vcvt.s32.f32 %v1195
        %v2348 = vcvt.s32.f32 %v1196
        %v2349 = vcvt.s32.f32 %v1197
        %v2350 = vcvt.s32.f32 %v1198
        %v2351 = vcvt.s32.f32 %v1199
        %v2352 = vcvt.s32.f32 %v1200
        %v2353 = vcvt.s32.f32 %v1201
        %v2354 = vcvt.s32.f32 %v1202
        %v2355 = vcvt.s32.f32 %v1203
        %v2356 = vcvt.s32.f32 %v1204
        %v2357 = vcvt.s32.f32 %v1205
        %v2358 = vcvt.s32.f32 %v1206
        %v2359 = vcvt.s32.f32 %v1207
        %v2360 = vcvt.s32.f32 %v1208
        %v2361 = vcvt.s32.f32 %v1209
        %v2362 = vcvt.s32.f32 %v1210
        %v2363 = vcvt.s32.f32 %v1211
        %v2364 = vcvt.s32.f32 %v1212
        %v2365 = vcvt.s32.f32 %v1213
        %v2366 = vcvt.s32.f32 %v1214
        %v2367 = vcvt.s32.f32 %v1215
        %v2368 = vcvt.s32.f32 %v1216
        %v2369 = vcvt.s32.f32 %v1217
        %v2370 = vcvt.s32.f32 %v1218
        %v2371 = vcvt.s32.f32 %v1219
        %v2372 = vcvt.s32.f32 %v1220
        %v2373 = vcvt.s32.f32 %v1221
        %v2374 = vcvt.s32.f32 %v1222
        %v2375 = vcvt.s32.f32 %v1223
        %v2376 = vcvt.s32.f32 %v1224
        %v2377 = vcvt.s32.f32 %v1225
        %v2378 = vcvt.s32.f32 %v1226
        %v2379 = vcvt.s32.f32 %v1227
        %v2380 = vcvt.s32.f32 %v1228
        %v2381 = vcvt.s32.f32 %v1229
        %v2382 = vcvt.s32.f32 %v1230
        %v2383 = vcvt.s32.f32 %v1231
        %v2384 = vcvt.s32.f32 %v1232
        %v2385 = vcvt.s32.f32 %v1233
        %v2386 = vcvt.s32.f32 %v1234
        %v2387 = vcvt.s32.f32 %v1235
        %v2388 = vcvt.s32.f32 %v1236
        %v2389 = vcvt.s32.f32 %v1237
        %v2390 = vcvt.s32.f32 %v1238
        %v2391 = vcvt.s32.f32 %v1239
        %v2392 = vcvt.s32.f32 %v1240
        %v2393 = vcvt.s32.f32 %v1241
        %v2394 = vcvt.s32.f32 %v1242
        %v2395 = vcvt.s32.f32 %v1243
        %v2396 = vcvt.s32.f32 %v1244
        %v2397 = vcvt.s32.f32 %v1245
        %v2398 = vcvt.s32.f32 %v1246
        %v2399 = vcvt.s32.f32 %v1247
        %v2400 = vcvt.s32.f32 %v1248
        %v2401 = vcvt.s32.f32 %v1249
        %v2402 = vcvt.s32.f32 %v1250
        %v2403 = vcvt.s32.f32 %v1251
        %v2404 = vcvt.s32.f32 %v1252
        %v2405 = vcvt.s32.f32 %v1253
        %v2406 = vcvt.s32.f32 %v1254
        %v2407 = vcvt.s32.f32 %v1255
        %v2408 = vcvt.s32.f32 %v1256
        %v2409 = vcvt.s32.f32 %v1257
        %v2410 = vcvt.s32.f32 %v1258
        %v2411 = vcvt.s32.f32 %v1259
        %v2412 = vcvt.s32.f32 %v1260
        %v2413 = vcvt.s32.f32 %v1261
        %v2414 = vcvt.s32.f32 %v1262
        %v2415 = vcvt.s32.f32 %v1263
        %v2416 = vcvt.s32.f32 %v1264
        %v2417 = vcvt.s32.f32 %v1265
        %v2418 = vcvt.s32.f32 %v1266
        %v2419 = vcvt.s32.f32 %v1267
        %v2420 = vcvt.s32.f32 %v1268
        %v2421 = vcvt.s32.f32 %v1269
        %v2422 = vcvt.s32.f32 %v1270
        %v2423 = vcvt.s32.f32 %v1271
        %v2424 = vcvt.s32.f32 %v1272
        %v2425 = vcvt.s32.f32 %v1273
        %v2426 = vcvt.s32.f32 %v1274
        %v2427 = vcvt.s32.f32 %v1275
        %v2428 = vcvt.s32.f32 %v1276
        %v2429 = vcvt.s32.f32 %v1277
        %v2430 = vcvt.s32.f32 %v1278
        %v2431 = vcvt.s32.f32 %v1279
        %v2432 = vcvt.s32.f32 %v1280
        %v2433 = vcvt.s32.f32 %v1281
        %v2434 = vcvt.s32.f32 %v1282
        %v2435 = vcvt.s32.f32 %v1283
        %v2436 = vcvt.s32.f32 %v1284
        %v2437 = vcvt.s32.f32 %v1285
        %v2438 = vcvt.s32.f32 %v1286
        %v2439 = vcvt.s32.f32 %v1287
        %v2440 = vcvt.s32.f32 %v1288
        %v2441 = vcvt.s32.f32 %v1289
        %v2442 = vcvt.s32.f32 %v1290
        %v2443 = vcvt.s32.f32 %v1291
        %v2444 = vcvt.s32.f32 %v1292
        %v2445 = vcvt.s32.f32 %v1293
        %v2446 = vcvt.s32.f32 %v1294
        %v2447 = vcvt.s32.f32 %v1295
        %v2448 = vcvt.s32.f32 %v1296
        %v2449 = vcvt.s32.f32 %v1297
        %v2450 = vcvt.s32.f32 %v1298
        %v2451 = vcvt.s32.f32 %v1299
        %v2452 = vcvt.s32.f32 %v1300
        %v2453 = vcvt.s32.f32 %v1301
        %v2454 = vcvt.s32.f32 %v1302
        %v2455 = vcvt.s32.f32 %v1303
        %v2456 = vcvt.s32.f32 %v1304
        %v2457 = vcvt.s32.f32 %v1305
        %v2458 = vcvt.s32.f32 %v1306
        %v2459 = vcvt.s32.f32 %v1307
        %v2460 = vcvt.s32.f32 %v1308
        %v2461 = vcvt.s32.f32 %v1309
        %v2462 = vcvt.s32.f32 %v1310
        %v2463 = vcvt.s32.f32 %v1311
        %v2464 = vcvt.s32.f32 %v1312
        %v2465 = vcvt.s32.f32 %v1313
        %v2466 = vcvt.s32.f32 %v1314
        %v2467 = vcvt.s32.f32 %v1315
        %v2468 = vcvt.s32.f32 %v1316
        %v2469 = vcvt.s32.f32 %v1317
        %v2470 = vcvt.s32.f32 %v1318
        %v2471 = vcvt.s32.f32 %v1319
        %v2472 = vcvt.s32.f32 %v1320
        %v2473 = vcvt.s32.f32 %v1321
        %v2474 = vcvt.s32.f32 %v1322
        %v2475 = vcvt.s32.f32 %v1323
        %v2476 = vcvt.s32.f32 %v1324
        %v2477 = vcvt.s32.f32 %v1325
        %v2478 = vcvt.s32.f32 %v1326
        %v2479 = vcvt.s32.f32 %v1327
        %v2480 = vcvt.s32.f32 %v1328
        %v2481 = vcvt.s32.f32 %v1329
        %v2482 = vcvt.s32.f32 %v1330
        %v2483 = vcvt.s32.f32 %v1331
        %v2484 = vcvt.s32.f32 %v1332
        %v2485 = vcvt.s32.f32 %v1333
        %v2486 = vcvt.s32.f32 %v1334
        %v2487 = vcvt.s32.f32 %v1335
        %v2488 = vcvt.s32.f32 %v1336
        %v2489 = vcvt.s32.f32 %v1337
        %v2490 = vcvt.s32.f32 %v1338
        %v2491 = vcvt.s32.f32 %v1339
        %v2492 = vcvt.s32.f32 %v1340
        %v2493 = vcvt.s32.f32 %v1341
        %v2494 = vcvt.s32.f32 %v1342
        %v2495 = vcvt.s32.f32 %v1343
        %v2496 = vcvt.s32.f32 %v1344
        %v2497 = vcvt.s32.f32 %v1345
        %v2498 = vcvt.s32.f32 %v1346
        %v2499 = vcvt.s32.f32 %v1347
        %v2500 = vcvt.s32.f32 %v1348
        %v2501 = vcvt.s32.f32 %v1349
        %v2502 = vcvt.s32.f32 %v1350
        %v2503 = vcvt.s32.f32 %v1351
        %v2504 = vcvt.s32.f32 %v1352
        %v2505 = vcvt.s32.f32 %v1353
        %v2506 = vcvt.s32.f32 %v1354
        %v2507 = vcvt.s32.f32 %v1355
        %v2508 = vcvt.s32.f32 %v1356
        %v2509 = vcvt.s32.f32 %v1357
        %v2510 = vcvt.s32.f32 %v1358
        %v2511 = vcvt.s32.f32 %v1359
        %v2512 = vcvt.s32.f32 %v1360
        %v2513 = vcvt.s32.f32 %v1361
        %v2514 = vcvt.s32.f32 %v1362
        %v2515 = vcvt.s32.f32 %v1363
        %v2516 = vcvt.s32.f32 %v1364
        %v2517 = vcvt.s32.f32 %v1365
        %v2518 = vcvt.s32.f32 %v1366
        %v2519 = vcvt.s32.f32 %v1367
        %v2520 = vcvt.s32.f32 %v1368
        %v2521 = vcvt.s32.f32 %v1369
        %v2522 = vcvt.s32.f32 %v1370
        %v2523 = vcvt.s32.f32 %v1371
        %v2524 = vcvt.s32.f32 %v1372
        %v2525 = vcvt.s32.f32 %v1373
        %v2526 = vcvt.s32.f32 %v1374
        %v2527 = vcvt.s32.f32 %v1375
        %v2528 = vcvt.s32.f32 %v1376
        %v2529 = vcvt.s32.f32 %v1377
        %v2530 = vcvt.s32.f32 %v1378
        %v2531 = vcvt.s32.f32 %v1379
        %v2532 = vcvt.s32.f32 %v1380
        %v2533 = vcvt.s32.f32 %v1381
        %v2534 = vcvt.s32.f32 %v1382
        %v2535 = vcvt.s32.f32 %v1383
        %v2536 = vcvt.s32.f32 %v1384
        %v2537 = vcvt.s32.f32 %v1385
        %v2538 = vcvt.s32.f32 %v1386
        %v2539 = vcvt.s32.f32 %v1387
        %v2540 = vcvt.s32.f32 %v1388
        %v2541 = vcvt.s32.f32 %v1389
        %v2542 = vcvt.s32.f32 %v1390
        %v2543 = vcvt.s32.f32 %v1391
        %v2544 = vcvt.s32.f32 %v1392
        %v2545 = vcvt.s32.f32 %v1393
        %v2546 = vcvt.s32.f32 %v1394
        %v2547 = vcvt.s32.f32 %v1395
        %v2548 = vcvt.s32.f32 %v1396
        %v2549 = vcvt.s32.f32 %v1397
        %v2550 = vcvt.s32.f32 %v1398
        %v2551 = vcvt.s32.f32 %v1399
        %v2552 = vcvt.s32.f32 %v1400
        %v2553 = vcvt.s32.f32 %v1401
        %v2554 = vcvt.s32.f32 %v1402
        %v2555 = vcvt.s32.f32 %v1403
        %v2556 = vcvt.s32.f32 %v1404
        %v2557 = vcvt.s32.f32 %v1405
        %v2558 = vcvt.s32.f32 %v1406
        %v2559 = vcvt.s32.f32 %v1407
        %v2560 = vcvt.s32.f32 %v1408
        %v2561 = vcvt.s32.f32 %v1409
        %v2562 = vcvt.s32.f32 %v1410
        %v2563 = vcvt.s32.f32 %v1411
        %v2564 = vcvt.s32.f32 %v1412
        %v2565 = vcvt.s32.f32 %v1413
        %v2566 = vcvt.s32.f32 %v1414
        %v2567 = vcvt.s32.f32 %v1415
        %v2568 = vcvt.s32.f32 %v1416
        %v2569 = vcvt.s32.f32 %v1417
        %v2570 = vcvt.s32.f32 %v1418
        %v2571 = vcvt.s32.f32 %v1419
        %v2572 = vcvt.s32.f32 %v1420
        %v2573 = vcvt.s32.f32 %v1421
        %v2574 = vcvt.s32.f32 %v1422
        %v2575 = vcvt.s32.f32 %v1423
        %v2576 = vcvt.s32.f32 %v1424
        %v2577 = vcvt.s32.f32 %v1425
        %v2578 = vcvt.s32.f32 %v1426
        %v2579 = vcvt.s32.f32 %v1427
        %v2580 = vcvt.s32.f32 %v1428
        %v2581 = vcvt.s32.f32 %v1429
        %v2582 = vcvt.s32.f32 %v1430
        %v2583 = vcvt.s32.f32 %v1431
        %v2584 = vcvt.s32.f32 %v1432
        %v2585 = vcvt.s32.f32 %v1433
        %v2586 = vcvt.s32.f32 %v1434
        %v2587 = vcvt.s32.f32 %v1435
        %v2588 = vcvt.s32.f32 %v1436
        %v2589 = vcvt.s32.f32 %v1437
        %v2590 = vcvt.s32.f32 %v1438
        %v2591 = vcvt.s32.f32 %v1439
        %v2592 = vcvt.s32.f32 %v1440
        %v2593 = vcvt.s32.f32 %v1441
        %v2594 = vcvt.s32.f32 %v1442
        %v2595 = vcvt.s32.f32 %v1443
        %v2596 = vcvt.s32.f32 %v1444
        %v2597 = vcvt.s32.f32 %v1445
        %v2598 = vcvt.s32.f32 %v1446
        %v2599 = vcvt.s32.f32 %v1447
        %v2600 = vcvt.s32.f32 %v1448
        %v2601 = vcvt.s32.f32 %v1449
        %v2602 = vcvt.s32.f32 %v1450
        %v2603 = vcvt.s32.f32 %v1451
        %v2604 = vcvt.s32.f32 %v1452
        %v2605 = vcvt.s32.f32 %v1453
        %v2606 = vcvt.s32.f32 %v1454
        %v2607 = vcvt.s32.f32 %v1455
        %v2608 = vcvt.s32.f32 %v1456
        %v2609 = vcvt.s32.f32 %v1457
        %v2610 = vcvt.s32.f32 %v1458
        %v2611 = vcvt.s32.f32 %v1459
        %v2612 = vcvt.s32.f32 %v1460
        %v2613 = vcvt.s32.f32 %v1461
        %v2614 = vcvt.s32.f32 %v1462
        %v2615 = vcvt.s32.f32 %v1463
        %v2616 = vcvt.s32.f32 %v1464
        %v2617 = vcvt.s32.f32 %v1465
        %v2618 = vcvt.s32.f32 %v1466
        %v2619 = vcvt.s32.f32 %v1467
        %v2620 = vcvt.s32.f32 %v1468
        %v2621 = vcvt.s32.f32 %v1469
        %v2622 = vcvt.s32.f32 %v1470
        %v2623 = vcvt.s32.f32 %v1471
        %v2624 = vcvt.s32.f32 %v1472
        %v2625 = vcvt.s32.f32 %v1473
        %v2626 = vcvt.s32.f32 %v1474
        %v2627 = vcvt.s32.f32 %v1475
        %v2628 = vcvt.s32.f32 %v1476
        %v2629 = vcvt.s32.f32 %v1477
        %v2630 = vcvt.s32.f32 %v1478
        %v2631 = vcvt.s32.f32 %v1479
        %v2632 = vcvt.s32.f32 %v1480
        %v2633 = vcvt.s32.f32 %v1481
        %v2634 = vcvt.s32.f32 %v1482
        %v2635 = vcvt.s32.f32 %v1483
        %v2636 = vcvt.s32.f32 %v1484
        %v2637 = vcvt.s32.f32 %v1485
        %v2638 = vcvt.s32.f32 %v1486
        %v2639 = vcvt.s32.f32 %v1487
        %v2640 = vcvt.s32.f32 %v1488
        %v2641 = vcvt.s32.f32 %v1489
        %v2642 = vcvt.s32.f32 %v1490
        %v2643 = vcvt.s32.f32 %v1491
        %v2644 = vcvt.s32.f32 %v1492
        %v2645 = vcvt.s32.f32 %v1493
        %v2646 = vcvt.s32.f32 %v1494
        %v2647 = vcvt.s32.f32 %v1495
        %v2648 = vcvt.s32.f32 %v1496
        %v2649 = vcvt.s32.f32 %v1497
        %v2650 = vcvt.s32.f32 %v1498
        %v2651 = vcvt.s32.f32 %v1499
        %v2652 = vcvt.s32.f32 %v1500
        %v2653 = vcvt.s32.f32 %v1501
        %v2654 = vcvt.s32.f32 %v1502
        %v2655 = vcvt.s32.f32 %v1503
        %v2656 = vcvt.s32.f32 %v1504
        %v2657 = vcvt.s32.f32 %v1505
        %v2658 = vcvt.s32.f32 %v1506
        %v2659 = vcvt.s32.f32 %v1507
        %v2660 = vcvt.s32.f32 %v1508
        %v2661 = vcvt.s32.f32 %v1509
        %v2662 = vcvt.s32.f32 %v1510
        %v2663 = vcvt.s32.f32 %v1511
        %v2664 = vcvt.s32.f32 %v1512
        %v2665 = vcvt.s32.f32 %v1513
        %v2666 = vcvt.s32.f32 %v1514
        %v2667 = vcvt.s32.f32 %v1515
        %v2668 = vcvt.s32.f32 %v1516
        %v2669 = vcvt.s32.f32 %v1517
        %v2670 = vcvt.s32.f32 %v1518
        %v2671 = vcvt.s32.f32 %v1519
        %v2672 = vcvt.s32.f32 %v1520
        %v2673 = vcvt.s32.f32 %v1521
        %v2674 = vcvt.s32.f32 %v1522
        %v2675 = vcvt.s32.f32 %v1523
        %v2676 = vcvt.s32.f32 %v1524
        %v2677 = vcvt.s32.f32 %v1525
        %v2678 = vcvt.s32.f32 %v1526
        %v2679 = vcvt.s32.f32 %v1527
        %v2680 = vcvt.s32.f32 %v1528
        %v2681 = vcvt.s32.f32 %v1529
        %v2682 = vcvt.s32.f32 %v1530
        %v2683 = vcvt.s32.f32 %v1531
        %v2684 = vcvt.s32.f32 %v1532
        %v2685 = vcvt.s32.f32 %v1533
        %v2686 = vcvt.s32.f32 %v1534
        %v2687 = vcvt.s32.f32 %v1535
        %v2688 = vcvt.s32.f32 %v1536
        %v2689 = vcvt.s32.f32 %v1537
        %v2690 = vcvt.s32.f32 %v1538
        %v2691 = vcvt.s32.f32 %v1539
        %v2692 = vcvt.s32.f32 %v1540
        %v2693 = vcvt.s32.f32 %v1541
        %v2694 = vcvt.s32.f32 %v1542
        %v2695 = vcvt.s32.f32 %v1543
        %v2696 = vcvt.s32.f32 %v1544
        %v2697 = vcvt.s32.f32 %v1545
        %v2698 = vcvt.s32.f32 %v1546
        %v2699 = vcvt.s32.f32 %v1547
        %v2700 = vcvt.s32.f32 %v1548
        %v2701 = vcvt.s32.f32 %v1549
        %v2702 = vcvt.s32.f32 %v1550
        %v2703 = vcvt.s32.f32 %v1551
        %v2704 = vcvt.s32.f32 %v1552
        %v2705 = vcvt.s32.f32 %v1553
        %v2706 = vcvt.s32.f32 %v1554
        %v2707 = vcvt.s32.f32 %v1555
        %v2708 = vcvt.s32.f32 %v1556
        %v2709 = vcvt.s32.f32 %v1557
        %v2710 = vcvt.s32.f32 %v1558
        %v2711 = vcvt.s32.f32 %v1559
        %v2712 = vcvt.s32.f32 %v1560
        %v2713 = vcvt.s32.f32 %v1561
        %v2714 = vcvt.s32.f32 %v1562
        %v2715 = vcvt.s32.f32 %v1563
        %v2716 = vcvt.s32.f32 %v1564
        %v2717 = vcvt.s32.f32 %v1565
        %v2718 = vcvt.s32.f32 %v1566
        %v2719 = vcvt.s32.f32 %v1567
        %v2720 = vcvt.s32.f32 %v1568
        %v2721 = vcvt.s32.f32 %v1569
        %v2722 = vcvt.s32.f32 %v1570
        %v2723 = vcvt.s32.f32 %v1571
        %v2724 = vcvt.s32.f32 %v1572
        %v2725 = vcvt.s32.f32 %v1573
        %v2726 = vcvt.s32.f32 %v1574
        %v2727 = vcvt.s32.f32 %v1575
        %v2728 = vcvt.s32.f32 %v1576
        %v2729 = vcvt.s32.f32 %v1577
        %v2730 = vcvt.s32.f32 %v1578
        %v2731 = vcvt.s32.f32 %v1579
        %v2732 = vcvt.s32.f32 %v1580
        %v2733 = vcvt.s32.f32 %v1581
        %v2734 = vcvt.s32.f32 %v1582
        %v2735 = vcvt.s32.f32 %v1583
        %v2736 = vcvt.s32.f32 %v1584
        %v2737 = vcvt.s32.f32 %v1585
        %v2738 = vcvt.s32.f32 %v1586
        %v2739 = vcvt.s32.f32 %v1587
        %v2740 = vcvt.s32.f32 %v1588
        %v2741 = vcvt.s32.f32 %v1589
        %v2742 = vcvt.s32.f32 %v1590
        %v2743 = vcvt.s32.f32 %v1591
        %v2744 = vcvt.s32.f32 %v1592
        %v2745 = vcvt.s32.f32 %v1593
        %v2746 = vcvt.s32.f32 %v1594
        %v2747 = vcvt.s32.f32 %v1595
        %v2748 = vcvt.s32.f32 %v1596
        %v2749 = vcvt.s32.f32 %v1597
        %v2750 = vcvt.s32.f32 %v1598
        %v2751 = vcvt.s32.f32 %v1599
        %v2752 = vcvt.s32.f32 %v1600
        %v2753 = vcvt.s32.f32 %v1601
        %v2754 = vcvt.s32.f32 %v1602
        %v2755 = vcvt.s32.f32 %v1603
        %v2756 = vcvt.s32.f32 %v1604
        %v2757 = vcvt.s32.f32 %v1605
        %v2758 = vcvt.s32.f32 %v1606
        %v2759 = vcvt.s32.f32 %v1607
        %v2760 = vcvt.s32.f32 %v1608
        %v2761 = vcvt.s32.f32 %v1609
        %v2762 = vcvt.s32.f32 %v1610
        %v2763 = vcvt.s32.f32 %v1611
        %v2764 = vcvt.s32.f32 %v1612
        %v2765 = vcvt.s32.f32 %v1613
        %v2766 = vcvt.s32.f32 %v1614
        %v2767 = vcvt.s32.f32 %v1615
        %v2768 = vcvt.s32.f32 %v1616
        %v2769 = vcvt.s32.f32 %v1617
        %v2770 = vcvt.s32.f32 %v1618
        %v2771 = vcvt.s32.f32 %v1619
        %v2772 = vcvt.s32.f32 %v1620
        %v2773 = vcvt.s32.f32 %v1621
        %v2774 = vcvt.s32.f32 %v1622
        %v2775 = vcvt.s32.f32 %v1623
        %v2776 = vcvt.s32.f32 %v1624
        %v2777 = vcvt.s32.f32 %v1625
        %v2778 = vcvt.s32.f32 %v1626
        %v2779 = vcvt.s32.f32 %v1627
        %v2780 = vcvt.s32.f32 %v1628
        %v2781 = vcvt.s32.f32 %v1629
        %v2782 = vcvt.s32.f32 %v1630
        %v2783 = vcvt.s32.f32 %v1631
        %v2784 = vcvt.s32.f32 %v1632
        %v2785 = vcvt.s32.f32 %v1633
        %v2786 = vcvt.s32.f32 %v1634
        %v2787 = vcvt.s32.f32 %v1635
        %v2788 = vcvt.s32.f32 %v1636
        %v2789 = vcvt.s32.f32 %v1637
        %v2790 = vcvt.s32.f32 %v1638
        %v2791 = vcvt.s32.f32 %v1639
        %v2792 = vcvt.s32.f32 %v1640
        %v2793 = vcvt.s32.f32 %v1641
        %v2794 = vcvt.s32.f32 %v1642
        %v2795 = vcvt.s32.f32 %v1643
        %v2796 = vcvt.s32.f32 %v1644
        %v2797 = vcvt.s32.f32 %v1645
        %v2798 = vcvt.s32.f32 %v1646
        %v2799 = vcvt.s32.f32 %v1647
        %v2800 = vcvt.s32.f32 %v1648
        %v2801 = vcvt.s32.f32 %v1649
        %v2802 = vcvt.s32.f32 %v1650
        %v2803 = vcvt.s32.f32 %v1651
        %v2804 = vcvt.s32.f32 %v1652
        %v2805 = vcvt.s32.f32 %v1653
        %v2806 = vcvt.s32.f32 %v1654
        %v2807 = vcvt.s32.f32 %v1655
        %v2808 = vcvt.s32.f32 %v1656
        %v2809 = vcvt.s32.f32 %v1657
        %v2810 = vcvt.s32.f32 %v1658
        %v2811 = vcvt.s32.f32 %v1659
        %v2812 = vcvt.s32.f32 %v1660
        %v2813 = vcvt.s32.f32 %v1661
        %v2814 = vcvt.s32.f32 %v1662
        %v2815 = vcvt.s32.f32 %v1663
        %v2816 = vcvt.s32.f32 %v1664
        %v2817 = vcvt.s32.f32 %v1665
        %v2818 = vcvt.s32.f32 %v1666
        %v2819 = vcvt.s32.f32 %v1667
        %v2820 = vcvt.s32.f32 %v1668
        %v2821 = vcvt.s32.f32 %v1669
        %v2822 = vcvt.s32.f32 %v1670
        %v2823 = vcvt.s32.f32 %v1671
        %v2824 = vcvt.s32.f32 %v1672
        %v2825 = vcvt.s32.f32 %v1673
        %v2826 = vcvt.s32.f32 %v1674
        %v2827 = vcvt.s32.f32 %v1675
        %v2828 = vcvt.s32.f32 %v1676
        %v2829 = vcvt.s32.f32 %v1677
        %v2830 = vcvt.s32.f32 %v1678
        %v2831 = vcvt.s32.f32 %v1679
        %v2832 = vcvt.s32.f32 %v1680
        %v2833 = vcvt.s32.f32 %v1681
        %v2834 = vcvt.s32.f32 %v1682
        %v2835 = vcvt.s32.f32 %v1683
        %v2836 = vcvt.s32.f32 %v1684
        %v2837 = vcvt.s32.f32 %v1685
        %v2838 = vcvt.s32.f32 %v1686
        %v2839 = vcvt.s32.f32 %v1687
        %v2840 = vcvt.s32.f32 %v1688
        %v2841 = vcvt.s32.f32 %v1689
        %v2842 = vcvt.s32.f32 %v1690
        %v2843 = vcvt.s32.f32 %v1691
        %v2844 = vcvt.s32.f32 %v1692
        %v2845 = vcvt.s32.f32 %v1693
        %v2846 = vcvt.s32.f32 %v1694
        %v2847 = vcvt.s32.f32 %v1695
        %v2848 = vcvt.s32.f32 %v1696
        %v2849 = vcvt.s32.f32 %v1697
        %v2850 = vcvt.s32.f32 %v1698
        %v2851 = vcvt.s32.f32 %v1699
        %v2852 = vcvt.s32.f32 %v1700
        %v2853 = vcvt.s32.f32 %v1701
        %v2854 = vcvt.s32.f32 %v1702
        %v2855 = vcvt.s32.f32 %v1703
        %v2856 = vcvt.s32.f32 %v1704
        %v2857 = vcvt.s32.f32 %v1705
        %v2858 = vcvt.s32.f32 %v1706
        %v2859 = vcvt.s32.f32 %v1707
        %v2860 = vcvt.s32.f32 %v1708
        %v2861 = vcvt.s32.f32 %v1709
        %v2862 = vcvt.s32.f32 %v1710
        %v2863 = vcvt.s32.f32 %v1711
        %v2864 = vcvt.s32.f32 %v1712
        %v2865 = vcvt.s32.f32 %v1713
        %v2866 = vcvt.s32.f32 %v1714
        %v2867 = vcvt.s32.f32 %v1715
        %v2868 = vcvt.s32.f32 %v1716
        %v2869 = vcvt.s32.f32 %v1717
        %v2870 = vcvt.s32.f32 %v1718
        %v2871 = vcvt.s32.f32 %v1719
        %v2872 = vcvt.s32.f32 %v1720
        %v2873 = vcvt.s32.f32 %v1721
        %v2874 = vcvt.s32.f32 %v1722
        %v2875 = vcvt.s32.f32 %v1723
        %v2876 = vcvt.s32.f32 %v1724
        %v2877 = vcvt.s32.f32 %v1725
        %v2878 = vcvt.s32.f32 %v1726
        %v2879 = vcvt.s32.f32 %v1727
        %v2880 = vcvt.s32.f32 %v1728
        %v2881 = vcvt.s32.f32 %v1729
        %v2882 = vcvt.s32.f32 %v1730
        %v2883 = vcvt.s32.f32 %v1731
        %v2884 = vcvt.s32.f32 %v1732
        %v2885 = vcvt.s32.f32 %v1733
        %v2886 = vcvt.s32.f32 %v1734
        %v2887 = vcvt.s32.f32 %v1735
        %v2888 = vcvt.s32.f32 %v1736
        %v2889 = vcvt.s32.f32 %v1737
        %v2890 = vcvt.s32.f32 %v1738
        %v2891 = vcvt.s32.f32 %v1739
        %v2892 = vcvt.s32.f32 %v1740
        %v2893 = vcvt.s32.f32 %v1741
        %v2894 = vcvt.s32.f32 %v1742
        %v2895 = vcvt.s32.f32 %v1743
        %v2896 = vcvt.s32.f32 %v1744
        %v2897 = vcvt.s32.f32 %v1745
        %v2898 = vcvt.s32.f32 %v1746
        %v2899 = vcvt.s32.f32 %v1747
        %v2900 = vcvt.s32.f32 %v1748
        %v2901 = vcvt.s32.f32 %v1749
        %v2902 = vcvt.s32.f32 %v1750
        %v2903 = vcvt.s32.f32 %v1751
        %v2904 = vcvt.s32.f32 %v1752
        %v2905 = vcvt.s32.f32 %v1753
        %v2906 = vcvt.s32.f32 %v1754
        %v2907 = vcvt.s32.f32 %v1755
        %v2908 = vcvt.s32.f32 %v1756
        %v2909 = vcvt.s32.f32 %v1757
        %v2910 = vcvt.s32.f32 %v1758
        %v2911 = vcvt.s32.f32 %v1759
        %v2912 = vcvt.s32.f32 %v1760
        %v2913 = vcvt.s32.f32 %v1761
        %v2914 = vcvt.s32.f32 %v1762
        %v2915 = vcvt.s32.f32 %v1763
        %v2916 = vcvt.s32.f32 %v1764
        %v2917 = vcvt.s32.f32 %v1765
        %v2918 = vcvt.s32.f32 %v1766
        %v2919 = vcvt.s32.f32 %v1767
        %v2920 = vcvt.s32.f32 %v1768
        %v2921 = vcvt.s32.f32 %v1769
        %v2922 = vcvt.s32.f32 %v1770
        %v2923 = vcvt.s32.f32 %v1771
        %v2924 = vcvt.s32.f32 %v1772
        %v2925 = vcvt.s32.f32 %v1773
        %v2926 = vcvt.s32.f32 %v1774
        %v2927 = vcvt.s32.f32 %v1775
        %v2928 = vcvt.s32.f32 %v1776
        %v2929 = vcvt.s32.f32 %v1777
        %v2930 = vcvt.s32.f32 %v1778
        %v2931 = vcvt.s32.f32 %v1779
        %v2932 = vcvt.s32.f32 %v1780
        %v2933 = vcvt.s32.f32 %v1781
        %v2934 = vcvt.s32.f32 %v1782
        %v2935 = vcvt.s32.f32 %v1783
        %v2936 = vcvt.s32.f32 %v1784
        %v2937 = vcvt.s32.f32 %v1785
        %v2938 = vcvt.s32.f32 %v1786
        %v2939 = vcvt.s32.f32 %v1787
        %v2940 = vcvt.s32.f32 %v1788
        %v2941 = vcvt.s32.f32 %v1789
        %v2942 = vcvt.s32.f32 %v1790
        %v2943 = vcvt.s32.f32 %v1791
        %v2944 = vcvt.s32.f32 %v1792
        %v2945 = vcvt.s32.f32 %v1793
        %v2946 = vcvt.s32.f32 %v1794
        %v2947 = vcvt.s32.f32 %v1795
        %v2948 = vcvt.s32.f32 %v1796
        %v2949 = vcvt.s32.f32 %v1797
        %v2950 = vcvt.s32.f32 %v1798
        %v2951 = vcvt.s32.f32 %v1799
        %v2952 = vcvt.s32.f32 %v1800
        %v2953 = vcvt.s32.f32 %v1801
        %v2954 = vcvt.s32.f32 %v1802
        %v2955 = vcvt.s32.f32 %v1803
        %v2956 = vcvt.s32.f32 %v1804
        %v2957 = vcvt.s32.f32 %v1805
        %v2958 = vcvt.s32.f32 %v1806
        %v2959 = vcvt.s32.f32 %v1807
        %v2960 = vcvt.s32.f32 %v1808
        %v2961 = vcvt.s32.f32 %v1809
        %v2962 = vcvt.s32.f32 %v1810
        %v2963 = vcvt.s32.f32 %v1811
        %v2964 = vcvt.s32.f32 %v1812
        %v2965 = vcvt.s32.f32 %v1813
        %v2966 = vcvt.s32.f32 %v1814
        %v2967 = vcvt.s32.f32 %v1815
        %v2968 = vcvt.s32.f32 %v1816
        %v2969 = vcvt.s32.f32 %v1817
        %v2970 = vcvt.s32.f32 %v1818
        %v2971 = vcvt.s32.f32 %v1819
        %v2972 = vcvt.s32.f32 %v1820
        %v2973 = vcvt.s32.f32 %v1821
        %v2974 = vcvt.s32.f32 %v1822
        %v2975 = vcvt.s32.f32 %v1823
        %v2976 = vcvt.s32.f32 %v1824
        %v2977 = vcvt.s32.f32 %v1825
        %v2978 = vcvt.s32.f32 %v1826
        %v2979 = vcvt.s32.f32 %v1827
        %v2980 = vcvt.s32.f32 %v1828
        %v2981 = vcvt.s32.f32 %v1829
        %v2982 = vcvt.s32.f32 %v1830
        %v2983 = vcvt.s32.f32 %v1831
        %v2984 = vcvt.s32.f32 %v1832
        %v2985 = vcvt.s32.f32 %v1833
        %v2986 = vcvt.s32.f32 %v1834
        %v2987 = vcvt.s32.f32 %v1835
        %v2988 = vcvt.s32.f32 %v1836
        %v2989 = vcvt.s32.f32 %v1837
        %v2990 = vcvt.s32.f32 %v1838
        %v2991 = vcvt.s32.f32 %v1839
        %v2992 = vcvt.s32.f32 %v1840
        %v2993 = vcvt.s32.f32 %v1841
        %v2994 = vcvt.s32.f32 %v1842
        %v2995 = vcvt.s32.f32 %v1843
        %v2996 = vcvt.s32.f32 %v1844
        %v2997 = vcvt.s32.f32 %v1845
        %v2998 = vcvt.s32.f32 %v1846
        %v2999 = vcvt.s32.f32 %v1847
        %v3000 = vcvt.s32.f32 %v1848
        %v3001 = vcvt.s32.f32 %v1849
        %v3002 = vcvt.s32.f32 %v1850
        %v3003 = vcvt.s32.f32 %v1851
        %v3004 = vcvt.s32.f32 %v1852
        %v3005 = vcvt.s32.f32 %v1853
        %v3006 = vcvt.s32.f32 %v1854
        %v3007 = vcvt.s32.f32 %v1855
        %v3008 = vcvt.s32.f32 %v1856
        %v3009 = vcvt.s32.f32 %v1857
        %v3010 = vcvt.s32.f32 %v1858
        %v3011 = vcvt.s32.f32 %v1859
        %v3012 = vcvt.s32.f32 %v1860
        %v3013 = vcvt.s32.f32 %v1861
        %v3014 = vcvt.s32.f32 %v1862
        %v3015 = vcvt.s32.f32 %v1863
        %v3016 = vcvt.s32.f32 %v1864
        %v3017 = vcvt.s32.f32 %v1865
        %v3018 = vcvt.s32.f32 %v1866
        %v3019 = vcvt.s32.f32 %v1867
        %v3020 = vcvt.s32.f32 %v1868
        %v3021 = vcvt.s32.f32 %v1869
        %v3022 = vcvt.s32.f32 %v1870
        %v3023 = vcvt.s32.f32 %v1871
        %v3024 = vcvt.s32.f32 %v1872
        %v3025 = vcvt.s32.f32 %v1873
        %v3026 = vcvt.s32.f32 %v1874
        %v3027 = vcvt.s32.f32 %v1875
        %v3028 = vcvt.s32.f32 %v1876
        %v3029 = vcvt.s32.f32 %v1877
        %v3030 = vcvt.s32.f32 %v1878
        %v3031 = vcvt.s32.f32 %v1879
        %v3032 = vcvt.s32.f32 %v1880
        %v3033 = vcvt.s32.f32 %v1881
        %v3034 = vcvt.s32.f32 %v1882
        %v3035 = vcvt.s32.f32 %v1883
        %v3036 = vcvt.s32.f32 %v1884
        %v3037 = vcvt.s32.f32 %v1885
        %v3038 = vcvt.s32.f32 %v1886
        %v3039 = vcvt.s32.f32 %v1887
        %v3040 = vcvt.s32.f32 %v1888
        %v3041 = vcvt.s32.f32 %v1889
        %v3042 = vcvt.s32.f32 %v1890
        %v3043 = vcvt.s32.f32 %v1891
        %v3044 = vcvt.s32.f32 %v1892
        %v3045 = vcvt.s32.f32 %v1893
        %v3046 = vcvt.s32.f32 %v1894
        %v3047 = vcvt.s32.f32 %v1895
        %v3048 = vcvt.s32.f32 %v1896
        %v3049 = vcvt.s32.f32 %v1897
        %v3050 = vcvt.s32.f32 %v1898
        %v3051 = vcvt.s32.f32 %v1899
        %v3052 = vcvt.s32.f32 %v1900
        %v3053 = vcvt.s32.f32 %v1901
        %v3054 = vcvt.s32.f32 %v1902
        %v3055 = vcvt.s32.f32 %v1903
        %v3056 = vcvt.s32.f32 %v1904
        %v3057 = vcvt.s32.f32 %v1905
        %v3058 = vcvt.s32.f32 %v1906
        %v3059 = vcvt.s32.f32 %v1907
        %v3060 = vcvt.s32.f32 %v1908
        %v3061 = vcvt.s32.f32 %v1909
        %v3062 = vcvt.s32.f32 %v1910
        %v3063 = vcvt.s32.f32 %v1911
        %v3064 = vcvt.s32.f32 %v1912
        %v3065 = vcvt.s32.f32 %v1913
        %v3066 = vcvt.s32.f32 %v1914
        %v3067 = vcvt.s32.f32 %v1915
        %v3068 = vcvt.s32.f32 %v1916
        %v3069 = vcvt.s32.f32 %v1917
        %v3070 = vcvt.s32.f32 %v1918
        %v3071 = vcvt.s32.f32 %v1919
        %v3072 = vcvt.s32.f32 %v1920
        %v3073 = vcvt.s32.f32 %v1921
        %v3074 = vcvt.s32.f32 %v1922
        %v3075 = vcvt.s32.f32 %v1923
        %v3076 = vcvt.s32.f32 %v1924
        %v3077 = vcvt.s32.f32 %v1925
        %v3078 = vcvt.s32.f32 %v1926
        %v3079 = vcvt.s32.f32 %v1927
        %v3080 = vcvt.s32.f32 %v1928
        %v3081 = vcvt.s32.f32 %v1929
        %v3082 = vcvt.s32.f32 %v1930
        %v3083 = vcvt.s32.f32 %v1931
        %v3084 = vcvt.s32.f32 %v1932
        %v3085 = vcvt.s32.f32 %v1933
        %v3086 = vcvt.s32.f32 %v1934
        %v3087 = vcvt.s32.f32 %v1935
        %v3088 = vcvt.s32.f32 %v1936
        %v3089 = vcvt.s32.f32 %v1937
        %v3090 = vcvt.s32.f32 %v1938
        %v3091 = vcvt.s32.f32 %v1939
        %v3092 = vcvt.s32.f32 %v1940
        %v3093 = vcvt.s32.f32 %v1941
        %v3094 = vcvt.s32.f32 %v1942
        %v3095 = vcvt.s32.f32 %v1943
        %v3096 = vcvt.s32.f32 %v1944
        %v3097 = vcvt.s32.f32 %v1945
        %v3098 = vcvt.s32.f32 %v1946
        %v3099 = vcvt.s32.f32 %v1947
        %v3100 = vcvt.s32.f32 %v1948
        %v3101 = vcvt.s32.f32 %v1949
        %v3102 = vcvt.s32.f32 %v1950
        %v3103 = vcvt.s32.f32 %v1951
        %v3104 = vcvt.s32.f32 %v1952
        %v3105 = vcvt.s32.f32 %v1953
        %v3106 = vcvt.s32.f32 %v1954
        %v3107 = vcvt.s32.f32 %v1955
        %v3108 = vcvt.s32.f32 %v1956
        %v3109 = vcvt.s32.f32 %v1957
        %v3110 = vcvt.s32.f32 %v1958
        %v3111 = vcvt.s32.f32 %v1959
        %v3112 = vcvt.s32.f32 %v1960
        %v3113 = vcvt.s32.f32 %v1961
        %v3114 = vcvt.s32.f32 %v1962
        %v3115 = vcvt.s32.f32 %v1963
        %v3116 = vcvt.s32.f32 %v1964
        %v3117 = vcvt.s32.f32 %v1965
        %v3118 = vcvt.s32.f32 %v1966
        %v3119 = vcvt.s32.f32 %v1967
        %v3120 = vcvt.s32.f32 %v1968
        %v3121 = vcvt.s32.f32 %v1969
        %v3122 = vcvt.s32.f32 %v1970
        %v3123 = vcvt.s32.f32 %v1971
        %v3124 = vcvt.s32.f32 %v1972
        %v3125 = vcvt.s32.f32 %v1973
        %v3126 = vcvt.s32.f32 %v1974
        %v3127 = vcvt.s32.f32 %v1975
        %v3128 = vcvt.s32.f32 %v1976
        %v3129 = vcvt.s32.f32 %v1977
        %v3130 = vcvt.s32.f32 %v1978
        %v3131 = vcvt.s32.f32 %v1979
        %v3132 = vcvt.s32.f32 %v1980
        %v3133 = vcvt.s32.f32 %v1981
        %v3134 = vcvt.s32.f32 %v1982
        %v3135 = vcvt.s32.f32 %v1983
        %v3136 = vcvt.s32.f32 %v1984
        %v3137 = vcvt.s32.f32 %v1985
        %v3138 = vcvt.s32.f32 %v1986
        %v3139 = vcvt.s32.f32 %v1987
        %v3140 = vcvt.s32.f32 %v1988
        %v3141 = vcvt.s32.f32 %v1989
        %v3142 = vcvt.s32.f32 %v1990
        %v3143 = vcvt.s32.f32 %v1991
        %v3144 = vcvt.s32.f32 %v1992
        %v3145 = vcvt.s32.f32 %v1993
        %v3146 = vcvt.s32.f32 %v1994
        %v3147 = vcvt.s32.f32 %v1995
        %v3148 = vcvt.s32.f32 %v1996
        %v3149 = vcvt.s32.f32 %v1997
        %v3150 = vcvt.s32.f32 %v1998
        %v3151 = vcvt.s32.f32 %v1999
        %v3152 = vcvt.s32.f32 %v2000
        %v3153 = vcvt.s32.f32 %v2001
        %v3154 = vcvt.s32.f32 %v2002
        %v3155 = vcvt.s32.f32 %v2003
        %v3156 = vcvt.s32.f32 %v2004
        %v3157 = vcvt.s32.f32 %v2005
        %v3158 = vcvt.s32.f32 %v2006
        %v3159 = vcvt.s32.f32 %v2007
        %v3160 = vcvt.s32.f32 %v2008
        %v3161 = vcvt.s32.f32 %v2009
        %v3162 = vcvt.s32.f32 %v2010
        %v3163 = vcvt.s32.f32 %v2011
        %v3164 = vcvt.s32.f32 %v2012
        %v3165 = vcvt.s32.f32 %v2013
        %v3166 = vcvt.s32.f32 %v2014
        %v3167 = vcvt.s32.f32 %v2015
        %v3168 = vcvt.s32.f32 %v2016
        %v3169 = vcvt.s32.f32 %v2017
        %v3170 = vcvt.s32.f32 %v2018
        %v3171 = vcvt.s32.f32 %v2019
        %v3172 = vcvt.s32.f32 %v2020
        %v3173 = vcvt.s32.f32 %v2021
        %v3174 = vcvt.s32.f32 %v2022
        %v3175 = vcvt.s32.f32 %v2023
        %v3176 = vcvt.s32.f32 %v2024
        %v3177 = vcvt.s32.f32 %v2025
        %v3178 = vcvt.s32.f32 %v2026
        %v3179 = vcvt.s32.f32 %v2027
        %v3180 = vcvt.s32.f32 %v2028
        %v3181 = vcvt.s32.f32 %v2029
        %v3182 = vcvt.s32.f32 %v2030
        %v3183 = vcvt.s32.f32 %v2031
        %v3184 = vcvt.s32.f32 %v2032
        %v3185 = vcvt.s32.f32 %v2033
        %v3186 = vcvt.s32.f32 %v2034
        %v3187 = vcvt.s32.f32 %v2035
        %v3188 = vcvt.s32.f32 %v2036
        %v3189 = vcvt.s32.f32 %v2037
        %v3190 = vcvt.s32.f32 %v2038
        %v3191 = vcvt.s32.f32 %v2039
        %v3192 = vcvt.s32.f32 %v2040
        %v3193 = vcvt.s32.f32 %v2041
        %v3194 = vcvt.s32.f32 %v2042
        %v3195 = vcvt.s32.f32 %v2043
        %v3196 = vcvt.s32.f32 %v2044
        %v3197 = vcvt.s32.f32 %v2045
        %v3198 = vcvt.s32.f32 %v2046
        %v3199 = vcvt.s32.f32 %v2047
        %v3200 = vcvt.s32.f32 %v2048
        %v3201 = vcvt.s32.f32 %v2049
        %v3202 = vcvt.s32.f32 %v2050
        %v3203 = vcvt.s32.f32 %v2051
        %v3204 = vcvt.s32.f32 %v2052
        %v3205 = vcvt.s32.f32 %v2053
        %v3206 = vcvt.s32.f32 %v2054
        %v3207 = vcvt.s32.f32 %v2055
        %v3208 = vcvt.s32.f32 %v2056
        %v3209 = vcvt.s32.f32 %v2057
        %v3210 = vcvt.s32.f32 %v2058
        %v3211 = vcvt.s32.f32 %v2059
        %v3212 = vcvt.s32.f32 %v2060
        %v3213 = vcvt.s32.f32 %v2061
        %v3214 = vcvt.s32.f32 %v2062
        %v3215 = vcvt.s32.f32 %v2063
        %v3216 = vcvt.s32.f32 %v2064
        %v3217 = vcvt.s32.f32 %v2065
        %v3218 = vcvt.s32.f32 %v2066
        %v3219 = vcvt.s32.f32 %v2067
        %v3220 = vcvt.s32.f32 %v2068
        %v3221 = vcvt.s32.f32 %v2069
        %v3222 = vcvt.s32.f32 %v2070
        %v3223 = vcvt.s32.f32 %v2071
        %v3224 = vcvt.s32.f32 %v2072
        %v3225 = vcvt.s32.f32 %v2073
        %v3226 = vcvt.s32.f32 %v2074
        %v3227 = vcvt.s32.f32 %v2075
        %v3228 = vcvt.s32.f32 %v2076
        %v3229 = vcvt.s32.f32 %v2077
        %v3230 = vcvt.s32.f32 %v2078
        %v3231 = vcvt.s32.f32 %v2079
        %v3232 = vcvt.s32.f32 %v2080
        %v3233 = vcvt.s32.f32 %v2081
        %v3234 = vcvt.s32.f32 %v2082
        %v3235 = vcvt.s32.f32 %v2083
        %v3236 = vcvt.s32.f32 %v2084
        %v3237 = vcvt.s32.f32 %v2085
        %v3238 = vcvt.s32.f32 %v2086
        %v3239 = vcvt.s32.f32 %v2087
        %v3240 = vcvt.s32.f32 %v2088
        %v3241 = vcvt.s32.f32 %v2089
        %v3242 = vcvt.s32.f32 %v2090
        %v3243 = vcvt.s32.f32 %v2091
        %v3244 = vcvt.s32.f32 %v2092
        %v3245 = vcvt.s32.f32 %v2093
        %v3246 = vcvt.s32.f32 %v2094
        %v3247 = vcvt.s32.f32 %v2095
        %v3248 = vcvt.s32.f32 %v2096
        %v3249 = vcvt.s32.f32 %v2097
        %v3250 = vcvt.s32.f32 %v2098
        %v3251 = vcvt.s32.f32 %v2099
        %v3252 = vcvt.s32.f32 %v2100
        %v3253 = vcvt.s32.f32 %v2101
        %v3254 = vcvt.s32.f32 %v2102
        %v3255 = vcvt.s32.f32 %v2103
        %v3256 = vcvt.s32.f32 %v2104
        %v3257 = vcvt.s32.f32 %v2105
        %v3258 = vcvt.s32.f32 %v2106
        %v3259 = vcvt.s32.f32 %v2107
        %v3260 = vcvt.s32.f32 %v2108
        %v3261 = vcvt.s32.f32 %v2109
        %v3262 = vcvt.s32.f32 %v2110
        %v3263 = vcvt.s32.f32 %v2111
        %v3264 = vcvt.s32.f32 %v2112
        %v3265 = vcvt.s32.f32 %v2113
        %v3266 = vcvt.s32.f32 %v2114
        %v3267 = vcvt.s32.f32 %v2115
        %v3268 = vcvt.s32.f32 %v2116
        %v3269 = vcvt.s32.f32 %v2117
        %v3270 = vcvt.s32.f32 %v2118
        %v3271 = vcvt.s32.f32 %v2119
        %v3272 = vcvt.s32.f32 %v2120
        %v3273 = vcvt.s32.f32 %v2121
        %v3274 = vcvt.s32.f32 %v2122
        %v3275 = vcvt.s32.f32 %v2123
        %v3276 = vcvt.s32.f32 %v2124
        %v3277 = vcvt.s32.f32 %v2125
        %v3278 = vcvt.s32.f32 %v2126
        %v3279 = vcvt.s32.f32 %v2127
        %v3280 = vcvt.s32.f32 %v2128
        %v3281 = vcvt.s32.f32 %v2129
        %v3282 = vcvt.s32.f32 %v2130
        %v3283 = vcvt.s32.f32 %v2131
        %v3284 = vcvt.s32.f32 %v2132
        %v3285 = vcvt.s32.f32 %v2133
        %v3286 = vcvt.s32.f32 %v2134
        %v3287 = vcvt.s32.f32 %v2135
        %v3288 = vcvt.s32.f32 %v2136
        %v3289 = vcvt.s32.f32 %v2137
        %v3290 = vcvt.s32.f32 %v2138
        %v3291 = vcvt.s32.f32 %v2139
        %v3292 = vcvt.s32.f32 %v2140
        %v3293 = vcvt.s32.f32 %v2141
        %v3294 = vcvt.s32.f32 %v2142
        %v3295 = vcvt.s32.f32 %v2143
        %v3296 = vcvt.s32.f32 %v2144
        %v3297 = vcvt.s32.f32 %v2145
        %v3298 = vcvt.s32.f32 %v2146
        %v3299 = vcvt.s32.f32 %v2147
        %v3300 = vcvt.s32.f32 %v2148
        %v3301 = vcvt.s32.f32 %v2149
        %v3302 = vcvt.s32.f32 %v2150
        %v3303 = vcvt.s32.f32 %v2151
        %v3304 = vcvt.s32.f32 %v2152
        %v3305 = vcvt.s32.f32 %v2153
        %v3306 = vcvt.s32.f32 %v2154
        %v3307 = vcvt.s32.f32 %v2155
        %v3308 = vcvt.s32.f32 %v2156
        %v3309 = vcvt.s32.f32 %v2157
        %v3310 = vcvt.s32.f32 %v2158
        %v3311 = vcvt.s32.f32 %v2159
        %v3312 = vcvt.s32.f32 %v2160
        %v3313 = vcvt.s32.f32 %v2161
        %v3314 = vcvt.s32.f32 %v2162
        %v3315 = vcvt.s32.f32 %v2163
        %v3316 = vcvt.s32.f32 %v2164
        %v3317 = vcvt.s32.f32 %v2165
        %v3318 = vcvt.s32.f32 %v2166
        %v3319 = vcvt.s32.f32 %v2167
        %v3320 = vcvt.s32.f32 %v2168
        %v3321 = vcvt.s32.f32 %v2169
        %v3322 = vcvt.s32.f32 %v2170
        %v3323 = vcvt.s32.f32 %v2171
        %v3324 = vcvt.s32.f32 %v2172
        %v3325 = vcvt.s32.f32 %v2173
        %v3326 = vcvt.s32.f32 %v2174
        %v3327 = vcvt.s32.f32 %v2175
        %v3328 = vcvt.s32.f32 %v2176
        %v3329 = vcvt.s32.f32 %v2177
        %v3330 = vcvt.s32.f32 %v2178
        %v3331 = vcvt.s32.f32 %v2179
        %v3332 = vcvt.s32.f32 %v2180
        %v3333 = vcvt.s32.f32 %v2181
        %v3334 = vcvt.s32.f32 %v2182
        %v3335 = vcvt.s32.f32 %v2183
        %v3336 = vcvt.s32.f32 %v2184
        %v3337 = vcvt.s32.f32 %v2185
        %v3338 = vcvt.s32.f32 %v2186
        %v3339 = vcvt.s32.f32 %v2187
        %v3340 = vcvt.s32.f32 %v2188
        %v3341 = vcvt.s32.f32 %v2189
        %v3342 = vcvt.s32.f32 %v2190
        %v3343 = vcvt.s32.f32 %v2191
        %v3344 = vcvt.s32.f32 %v2192
        %v3345 = vcvt.s32.f32 %v2193
        %v3346 = vcvt.s32.f32 %v2194
        %v3347 = vcvt.s32.f32 %v2195
        %v3348 = vcvt.s32.f32 %v2196
        %v3349 = vcvt.s32.f32 %v2197
        %v3350 = vcvt.s32.f32 %v2198
        %v3351 = vcvt.s32.f32 %v2199
        %v3352 = vcvt.s32.f32 %v2200
        %v3353 = vcvt.s32.f32 %v2201
        %v3354 = vcvt.s32.f32 %v2202
        %v3355 = vcvt.s32.f32 %v2203
        %v3356 = vcvt.s32.f32 %v2204
        %v3357 = vcvt.s32.f32 %v2205
        %v3358 = vcvt.s32.f32 %v2206
        %v3359 = vcvt.s32.f32 %v2207
        %v3360 = vcvt.s32.f32 %v2208
        %v3361 = vcvt.s32.f32 %v2209
        %v3362 = vcvt.s32.f32 %v2210
        %v3363 = vcvt.s32.f32 %v2211
        %v3364 = vcvt.s32.f32 %v2212
        %v3365 = vcvt.s32.f32 %v2213
        %v3366 = vcvt.s32.f32 %v2214
        %v3367 = vcvt.s32.f32 %v2215
        %v3368 = vcvt.s32.f32 %v2216
        %v3369 = vcvt.s32.f32 %v2217
        %v3370 = vcvt.s32.f32 %v2218
        %v3371 = vcvt.s32.f32 %v2219
        %v3372 = vcvt.s32.f32 %v2220
        %v3373 = vcvt.s32.f32 %v2221
        %v3374 = vcvt.s32.f32 %v2222
        %v3375 = vcvt.s32.f32 %v2223
        %v3376 = vcvt.s32.f32 %v2224
        %v3377 = vcvt.s32.f32 %v2225
        %v3378 = vcvt.s32.f32 %v2226
        %v3379 = vcvt.s32.f32 %v2227
        %v3380 = vcvt.s32.f32 %v2228
        %v3381 = vcvt.s32.f32 %v2229
        %v3382 = vcvt.s32.f32 %v2230
        %v3383 = vcvt.s32.f32 %v2231
        %v3384 = vcvt.s32.f32 %v2232
        %v3385 = vcvt.s32.f32 %v2233
        %v3386 = vcvt.s32.f32 %v2234
        %v3387 = vcvt.s32.f32 %v2235
        %v3388 = vcvt.s32.f32 %v2236
        %v3389 = vcvt.s32.f32 %v2237
        %v3390 = vcvt.s32.f32 %v2238
        %v3391 = vcvt.s32.f32 %v2239
        %v3392 = vcvt.s32.f32 %v2240
        %v3393 = vcvt.s32.f32 %v2241
        %v3394 = vcvt.s32.f32 %v2242
        %v3395 = vcvt.s32.f32 %v2243
        %v3396 = vcvt.s32.f32 %v2244
        %v3397 = vcvt.s32.f32 %v2245
        %v3398 = vcvt.s32.f32 %v2246
        %v3399 = vcvt.s32.f32 %v2247
        %v3400 = vcvt.s32.f32 %v2248
        %v3401 = vcvt.s32.f32 %v2249
        %v3402 = vcvt.s32.f32 %v2250
        %v3403 = vcvt.s32.f32 %v2251
        %v3404 = vcvt.s32.f32 %v2252
        %v3405 = vcvt.s32.f32 %v2253
        %v3406 = vcvt.s32.f32 %v2254
        %v3407 = vcvt.s32.f32 %v2255
        %v3408 = vcvt.s32.f32 %v2256
        %v3409 = vpack.c.bf16 %v2263, %v2257
        %v3410 = vpack.c.bf16 %v2264, %v2258
        %v3411 = vpack.c.bf16 %v2265, %v2259
        %v3412 = vpack.c.bf16 %v2266, %v2260
        %v3413 = vpack.c.bf16 %v2267, %v2261
        %v3414 = vpack.c.bf16 %v2268, %v2262
        %v3415 = vpack.c.bf16 %v2275, %v2269
        %v3416 = vpack.c.bf16 %v2276, %v2270
        %v3417 = vpack.c.bf16 %v2277, %v2271
        %v3418 = vpack.c.bf16 %v2278, %v2272
        %v3419 = vpack.c.bf16 %v2279, %v2273
        %v3420 = vpack.c.bf16 %v2280, %v2274
        %v3421 = vpack.c.bf16 %v2287, %v2281
        %v3422 = vpack.c.bf16 %v2288, %v2282
        %v3423 = vpack.c.bf16 %v2289, %v2283
        %v3424 = vpack.c.bf16 %v2290, %v2284
        %v3425 = vpack.c.bf16 %v2291, %v2285
        %v3426 = vpack.c.bf16 %v2292, %v2286
        %v3427 = vpack.c.bf16 %v2299, %v2293
        %v3428 = vpack.c.bf16 %v2300, %v2294
        %v3429 = vpack.c.bf16 %v2301, %v2295
        %v3430 = vpack.c.bf16 %v2302, %v2296
        %v3431 = vpack.c.bf16 %v2303, %v2297
        %v3432 = vpack.c.bf16 %v2304, %v2298
        %v3433 = vpack.c.bf16 %v2311, %v2305
        %v3434 = vpack.c.bf16 %v2312, %v2306
        %v3435 = vpack.c.bf16 %v2313, %v2307
        %v3436 = vpack.c.bf16 %v2314, %v2308
        %v3437 = vpack.c.bf16 %v2315, %v2309
        %v3438 = vpack.c.bf16 %v2316, %v2310
        %v3439 = vpack.c.bf16 %v2323, %v2317
        %v3440 = vpack.c.bf16 %v2324, %v2318
        %v3441 = vpack.c.bf16 %v2325, %v2319
        %v3442 = vpack.c.bf16 %v2326, %v2320
        %v3443 = vpack.c.bf16 %v2327, %v2321
        %v3444 = vpack.c.bf16 %v2328, %v2322
        %v3445 = vpack.c.bf16 %v2335, %v2329
        %v3446 = vpack.c.bf16 %v2336, %v2330
        %v3447 = vpack.c.bf16 %v2337, %v2331
        %v3448 = vpack.c.bf16 %v2338, %v2332
        %v3449 = vpack.c.bf16 %v2339, %v2333
        %v3450 = vpack.c.bf16 %v2340, %v2334
        %v3451 = vpack.c.bf16 %v2347, %v2341
        %v3452 = vpack.c.bf16 %v2348, %v2342
        %v3453 = vpack.c.bf16 %v2349, %v2343
        %v3454 = vpack.c.bf16 %v2350, %v2344
        %v3455 = vpack.c.bf16 %v2351, %v2345
        %v3456 = vpack.c.bf16 %v2352, %v2346
        %v3457 = vpack.c.bf16 %v2359, %v2353
        %v3458 = vpack.c.bf16 %v2360, %v2354
        %v3459 = vpack.c.bf16 %v2361, %v2355
        %v3460 = vpack.c.bf16 %v2362, %v2356
        %v3461 = vpack.c.bf16 %v2363, %v2357
        %v3462 = vpack.c.bf16 %v2364, %v2358
        %v3463 = vpack.c.bf16 %v2371, %v2365
        %v3464 = vpack.c.bf16 %v2372, %v2366
        %v3465 = vpack.c.bf16 %v2373, %v2367
        %v3466 = vpack.c.bf16 %v2374, %v2368
        %v3467 = vpack.c.bf16 %v2375, %v2369
        %v3468 = vpack.c.bf16 %v2376, %v2370
        %v3469 = vpack.c.bf16 %v2383, %v2377
        %v3470 = vpack.c.bf16 %v2384, %v2378
        %v3471 = vpack.c.bf16 %v2385, %v2379
        %v3472 = vpack.c.bf16 %v2386, %v2380
        %v3473 = vpack.c.bf16 %v2387, %v2381
        %v3474 = vpack.c.bf16 %v2388, %v2382
        %v3475 = vpack.c.bf16 %v2395, %v2389
        %v3476 = vpack.c.bf16 %v2396, %v2390
        %v3477 = vpack.c.bf16 %v2397, %v2391
        %v3478 = vpack.c.bf16 %v2398, %v2392
        %v3479 = vpack.c.bf16 %v2399, %v2393
        %v3480 = vpack.c.bf16 %v2400, %v2394
        %v3481 = vpack.c.bf16 %v2407, %v2401
        %v3482 = vpack.c.bf16 %v2408, %v2402
        %v3483 = vpack.c.bf16 %v2409, %v2403
        %v3484 = vpack.c.bf16 %v2410, %v2404
        %v3485 = vpack.c.bf16 %v2411, %v2405
        %v3486 = vpack.c.bf16 %v2412, %v2406
        %v3487 = vpack.c.bf16 %v2419, %v2413
        %v3488 = vpack.c.bf16 %v2420, %v2414
        %v3489 = vpack.c.bf16 %v2421, %v2415
        %v3490 = vpack.c.bf16 %v2422, %v2416
        %v3491 = vpack.c.bf16 %v2423, %v2417
        %v3492 = vpack.c.bf16 %v2424, %v2418
        %v3493 = vpack.c.bf16 %v2431, %v2425
        %v3494 = vpack.c.bf16 %v2432, %v2426
        %v3495 = vpack.c.bf16 %v2433, %v2427
        %v3496 = vpack.c.bf16 %v2434, %v2428
        %v3497 = vpack.c.bf16 %v2435, %v2429
        %v3498 = vpack.c.bf16 %v2436, %v2430
        %v3499 = vpack.c.bf16 %v2443, %v2437
        %v3500 = vpack.c.bf16 %v2444, %v2438
        %v3501 = vpack.c.bf16 %v2445, %v2439
        %v3502 = vpack.c.bf16 %v2446, %v2440
        %v3503 = vpack.c.bf16 %v2447, %v2441
        %v3504 = vpack.c.bf16 %v2448, %v2442
        %v3505 = vpack.c.bf16 %v2455, %v2449
        %v3506 = vpack.c.bf16 %v2456, %v2450
        %v3507 = vpack.c.bf16 %v2457, %v2451
        %v3508 = vpack.c.bf16 %v2458, %v2452
        %v3509 = vpack.c.bf16 %v2459, %v2453
        %v3510 = vpack.c.bf16 %v2460, %v2454
        %v3511 = vpack.c.bf16 %v2467, %v2461
        %v3512 = vpack.c.bf16 %v2468, %v2462
        %v3513 = vpack.c.bf16 %v2469, %v2463
        %v3514 = vpack.c.bf16 %v2470, %v2464
        %v3515 = vpack.c.bf16 %v2471, %v2465
        %v3516 = vpack.c.bf16 %v2472, %v2466
        %v3517 = vpack.c.bf16 %v2479, %v2473
        %v3518 = vpack.c.bf16 %v2480, %v2474
        %v3519 = vpack.c.bf16 %v2481, %v2475
        %v3520 = vpack.c.bf16 %v2482, %v2476
        %v3521 = vpack.c.bf16 %v2483, %v2477
        %v3522 = vpack.c.bf16 %v2484, %v2478
        %v3523 = vpack.c.bf16 %v2491, %v2485
        %v3524 = vpack.c.bf16 %v2492, %v2486
        %v3525 = vpack.c.bf16 %v2493, %v2487
        %v3526 = vpack.c.bf16 %v2494, %v2488
        %v3527 = vpack.c.bf16 %v2495, %v2489
        %v3528 = vpack.c.bf16 %v2496, %v2490
        %v3529 = vpack.c.bf16 %v2503, %v2497
        %v3530 = vpack.c.bf16 %v2504, %v2498
        %v3531 = vpack.c.bf16 %v2505, %v2499
        %v3532 = vpack.c.bf16 %v2506, %v2500
        %v3533 = vpack.c.bf16 %v2507, %v2501
        %v3534 = vpack.c.bf16 %v2508, %v2502
        %v3535 = vpack.c.bf16 %v2515, %v2509
        %v3536 = vpack.c.bf16 %v2516, %v2510
        %v3537 = vpack.c.bf16 %v2517, %v2511
        %v3538 = vpack.c.bf16 %v2518, %v2512
        %v3539 = vpack.c.bf16 %v2519, %v2513
        %v3540 = vpack.c.bf16 %v2520, %v2514
        %v3541 = vpack.c.bf16 %v2527, %v2521
        %v3542 = vpack.c.bf16 %v2528, %v2522
        %v3543 = vpack.c.bf16 %v2529, %v2523
        %v3544 = vpack.c.bf16 %v2530, %v2524
        %v3545 = vpack.c.bf16 %v2531, %v2525
        %v3546 = vpack.c.bf16 %v2532, %v2526
        %v3547 = vpack.c.bf16 %v2539, %v2533
        %v3548 = vpack.c.bf16 %v2540, %v2534
        %v3549 = vpack.c.bf16 %v2541, %v2535
        %v3550 = vpack.c.bf16 %v2542, %v2536
        %v3551 = vpack.c.bf16 %v2543, %v2537
        %v3552 = vpack.c.bf16 %v2544, %v2538
        %v3553 = vpack.c.bf16 %v2551, %v2545
        %v3554 = vpack.c.bf16 %v2552, %v2546
        %v3555 = vpack.c.bf16 %v2553, %v2547
        %v3556 = vpack.c.bf16 %v2554, %v2548
        %v3557 = vpack.c.bf16 %v2555, %v2549
        %v3558 = vpack.c.bf16 %v2556, %v2550
        %v3559 = vpack.c.bf16 %v2563, %v2557
        %v3560 = vpack.c.bf16 %v2564, %v2558
        %v3561 = vpack.c.bf16 %v2565, %v2559
        %v3562 = vpack.c.bf16 %v2566, %v2560
        %v3563 = vpack.c.bf16 %v2567, %v2561
        %v3564 = vpack.c.bf16 %v2568, %v2562
        %v3565 = vpack.c.bf16 %v2575, %v2569
        %v3566 = vpack.c.bf16 %v2576, %v2570
        %v3567 = vpack.c.bf16 %v2577, %v2571
        %v3568 = vpack.c.bf16 %v2578, %v2572
        %v3569 = vpack.c.bf16 %v2579, %v2573
        %v3570 = vpack.c.bf16 %v2580, %v2574
        %v3571 = vpack.c.bf16 %v2587, %v2581
        %v3572 = vpack.c.bf16 %v2588, %v2582
        %v3573 = vpack.c.bf16 %v2589, %v2583
        %v3574 = vpack.c.bf16 %v2590, %v2584
        %v3575 = vpack.c.bf16 %v2591, %v2585
        %v3576 = vpack.c.bf16 %v2592, %v2586
        %v3577 = vpack.c.bf16 %v2599, %v2593
        %v3578 = vpack.c.bf16 %v2600, %v2594
        %v3579 = vpack.c.bf16 %v2601, %v2595
        %v3580 = vpack.c.bf16 %v2602, %v2596
        %v3581 = vpack.c.bf16 %v2603, %v2597
        %v3582 = vpack.c.bf16 %v2604, %v2598
        %v3583 = vpack.c.bf16 %v2611, %v2605
        %v3584 = vpack.c.bf16 %v2612, %v2606
        %v3585 = vpack.c.bf16 %v2613, %v2607
        %v3586 = vpack.c.bf16 %v2614, %v2608
        %v3587 = vpack.c.bf16 %v2615, %v2609
        %v3588 = vpack.c.bf16 %v2616, %v2610
        %v3589 = vpack.c.bf16 %v2623, %v2617
        %v3590 = vpack.c.bf16 %v2624, %v2618
        %v3591 = vpack.c.bf16 %v2625, %v2619
        %v3592 = vpack.c.bf16 %v2626, %v2620
        %v3593 = vpack.c.bf16 %v2627, %v2621
        %v3594 = vpack.c.bf16 %v2628, %v2622
        %v3595 = vpack.c.bf16 %v2635, %v2629
        %v3596 = vpack.c.bf16 %v2636, %v2630
        %v3597 = vpack.c.bf16 %v2637, %v2631
        %v3598 = vpack.c.bf16 %v2638, %v2632
        %v3599 = vpack.c.bf16 %v2639, %v2633
        %v3600 = vpack.c.bf16 %v2640, %v2634
        %v3601 = vpack.c.bf16 %v2647, %v2641
        %v3602 = vpack.c.bf16 %v2648, %v2642
        %v3603 = vpack.c.bf16 %v2649, %v2643
        %v3604 = vpack.c.bf16 %v2650, %v2644
        %v3605 = vpack.c.bf16 %v2651, %v2645
        %v3606 = vpack.c.bf16 %v2652, %v2646
        %v3607 = vpack.c.bf16 %v2659, %v2653
        %v3608 = vpack.c.bf16 %v2660, %v2654
        %v3609 = vpack.c.bf16 %v2661, %v2655
        %v3610 = vpack.c.bf16 %v2662, %v2656
        %v3611 = vpack.c.bf16 %v2663, %v2657
        %v3612 = vpack.c.bf16 %v2664, %v2658
        %v3613 = vpack.c.bf16 %v2671, %v2665
        %v3614 = vpack.c.bf16 %v2672, %v2666
        %v3615 = vpack.c.bf16 %v2673, %v2667
        %v3616 = vpack.c.bf16 %v2674, %v2668
        %v3617 = vpack.c.bf16 %v2675, %v2669
        %v3618 = vpack.c.bf16 %v2676, %v2670
        %v3619 = vpack.c.bf16 %v2683, %v2677
        %v3620 = vpack.c.bf16 %v2684, %v2678
        %v3621 = vpack.c.bf16 %v2685, %v2679
        %v3622 = vpack.c.bf16 %v2686, %v2680
        %v3623 = vpack.c.bf16 %v2687, %v2681
        %v3624 = vpack.c.bf16 %v2688, %v2682
        %v3625 = vpack.c.bf16 %v2695, %v2689
        %v3626 = vpack.c.bf16 %v2696, %v2690
        %v3627 = vpack.c.bf16 %v2697, %v2691
        %v3628 = vpack.c.bf16 %v2698, %v2692
        %v3629 = vpack.c.bf16 %v2699, %v2693
        %v3630 = vpack.c.bf16 %v2700, %v2694
        %v3631 = vpack.c.bf16 %v2707, %v2701
        %v3632 = vpack.c.bf16 %v2708, %v2702
        %v3633 = vpack.c.bf16 %v2709, %v2703
        %v3634 = vpack.c.bf16 %v2710, %v2704
        %v3635 = vpack.c.bf16 %v2711, %v2705
        %v3636 = vpack.c.bf16 %v2712, %v2706
        %v3637 = vpack.c.bf16 %v2719, %v2713
        %v3638 = vpack.c.bf16 %v2720, %v2714
        %v3639 = vpack.c.bf16 %v2721, %v2715
        %v3640 = vpack.c.bf16 %v2722, %v2716
        %v3641 = vpack.c.bf16 %v2723, %v2717
        %v3642 = vpack.c.bf16 %v2724, %v2718
        %v3643 = vpack.c.bf16 %v2731, %v2725
        %v3644 = vpack.c.bf16 %v2732, %v2726
        %v3645 = vpack.c.bf16 %v2733, %v2727
        %v3646 = vpack.c.bf16 %v2734, %v2728
        %v3647 = vpack.c.bf16 %v2735, %v2729
        %v3648 = vpack.c.bf16 %v2736, %v2730
        %v3649 = vpack.c.bf16 %v2743, %v2737
        %v3650 = vpack.c.bf16 %v2744, %v2738
        %v3651 = vpack.c.bf16 %v2745, %v2739
        %v3652 = vpack.c.bf16 %v2746, %v2740
        %v3653 = vpack.c.bf16 %v2747, %v2741
        %v3654 = vpack.c.bf16 %v2748, %v2742
        %v3655 = vpack.c.bf16 %v2755, %v2749
        %v3656 = vpack.c.bf16 %v2756, %v2750
        %v3657 = vpack.c.bf16 %v2757, %v2751
        %v3658 = vpack.c.bf16 %v2758, %v2752
        %v3659 = vpack.c.bf16 %v2759, %v2753
        %v3660 = vpack.c.bf16 %v2760, %v2754
        %v3661 = vpack.c.bf16 %v2767, %v2761
        %v3662 = vpack.c.bf16 %v2768, %v2762
        %v3663 = vpack.c.bf16 %v2769, %v2763
        %v3664 = vpack.c.bf16 %v2770, %v2764
        %v3665 = vpack.c.bf16 %v2771, %v2765
        %v3666 = vpack.c.bf16 %v2772, %v2766
        %v3667 = vpack.c.bf16 %v2779, %v2773
        %v3668 = vpack.c.bf16 %v2780, %v2774
        %v3669 = vpack.c.bf16 %v2781, %v2775
        %v3670 = vpack.c.bf16 %v2782, %v2776
        %v3671 = vpack.c.bf16 %v2783, %v2777
        %v3672 = vpack.c.bf16 %v2784, %v2778
        %v3673 = vpack.c.bf16 %v2791, %v2785
        %v3674 = vpack.c.bf16 %v2792, %v2786
        %v3675 = vpack.c.bf16 %v2793, %v2787
        %v3676 = vpack.c.bf16 %v2794, %v2788
        %v3677 = vpack.c.bf16 %v2795, %v2789
        %v3678 = vpack.c.bf16 %v2796, %v2790
        %v3679 = vpack.c.bf16 %v2803, %v2797
        %v3680 = vpack.c.bf16 %v2804, %v2798
        %v3681 = vpack.c.bf16 %v2805, %v2799
        %v3682 = vpack.c.bf16 %v2806, %v2800
        %v3683 = vpack.c.bf16 %v2807, %v2801
        %v3684 = vpack.c.bf16 %v2808, %v2802
        %v3685 = vpack.c.bf16 %v2815, %v2809
        %v3686 = vpack.c.bf16 %v2816, %v2810
        %v3687 = vpack.c.bf16 %v2817, %v2811
        %v3688 = vpack.c.bf16 %v2818, %v2812
        %v3689 = vpack.c.bf16 %v2819, %v2813
        %v3690 = vpack.c.bf16 %v2820, %v2814
        %v3691 = vpack.c.bf16 %v2827, %v2821
        %v3692 = vpack.c.bf16 %v2828, %v2822
        %v3693 = vpack.c.bf16 %v2829, %v2823
        %v3694 = vpack.c.bf16 %v2830, %v2824
        %v3695 = vpack.c.bf16 %v2831, %v2825
        %v3696 = vpack.c.bf16 %v2832, %v2826
        %v3697 = vpack.c.bf16 %v2839, %v2833
        %v3698 = vpack.c.bf16 %v2840, %v2834
        %v3699 = vpack.c.bf16 %v2841, %v2835
        %v3700 = vpack.c.bf16 %v2842, %v2836
        %v3701 = vpack.c.bf16 %v2843, %v2837
        %v3702 = vpack.c.bf16 %v2844, %v2838
        %v3703 = vpack.c.bf16 %v2851, %v2845
        %v3704 = vpack.c.bf16 %v2852, %v2846
        %v3705 = vpack.c.bf16 %v2853, %v2847
        %v3706 = vpack.c.bf16 %v2854, %v2848
        %v3707 = vpack.c.bf16 %v2855, %v2849
        %v3708 = vpack.c.bf16 %v2856, %v2850
        %v3709 = vpack.c.bf16 %v2863, %v2857
        %v3710 = vpack.c.bf16 %v2864, %v2858
        %v3711 = vpack.c.bf16 %v2865, %v2859
        %v3712 = vpack.c.bf16 %v2866, %v2860
        %v3713 = vpack.c.bf16 %v2867, %v2861
        %v3714 = vpack.c.bf16 %v2868, %v2862
        %v3715 = vpack.c.bf16 %v2875, %v2869
        %v3716 = vpack.c.bf16 %v2876, %v2870
        %v3717 = vpack.c.bf16 %v2877, %v2871
        %v3718 = vpack.c.bf16 %v2878, %v2872
        %v3719 = vpack.c.bf16 %v2879, %v2873
        %v3720 = vpack.c.bf16 %v2880, %v2874
        %v3721 = vpack.c.bf16 %v2887, %v2881
        %v3722 = vpack.c.bf16 %v2888, %v2882
        %v3723 = vpack.c.bf16 %v2889, %v2883
        %v3724 = vpack.c.bf16 %v2890, %v2884
        %v3725 = vpack.c.bf16 %v2891, %v2885
        %v3726 = vpack.c.bf16 %v2892, %v2886
        %v3727 = vpack.c.bf16 %v2899, %v2893
        %v3728 = vpack.c.bf16 %v2900, %v2894
        %v3729 = vpack.c.bf16 %v2901, %v2895
        %v3730 = vpack.c.bf16 %v2902, %v2896
        %v3731 = vpack.c.bf16 %v2903, %v2897
        %v3732 = vpack.c.bf16 %v2904, %v2898
        %v3733 = vpack.c.bf16 %v2911, %v2905
        %v3734 = vpack.c.bf16 %v2912, %v2906
        %v3735 = vpack.c.bf16 %v2913, %v2907
        %v3736 = vpack.c.bf16 %v2914, %v2908
        %v3737 = vpack.c.bf16 %v2915, %v2909
        %v3738 = vpack.c.bf16 %v2916, %v2910
        %v3739 = vpack.c.bf16 %v2923, %v2917
        %v3740 = vpack.c.bf16 %v2924, %v2918
        %v3741 = vpack.c.bf16 %v2925, %v2919
        %v3742 = vpack.c.bf16 %v2926, %v2920
        %v3743 = vpack.c.bf16 %v2927, %v2921
        %v3744 = vpack.c.bf16 %v2928, %v2922
        %v3745 = vpack.c.bf16 %v2935, %v2929
        %v3746 = vpack.c.bf16 %v2936, %v2930
        %v3747 = vpack.c.bf16 %v2937, %v2931
        %v3748 = vpack.c.bf16 %v2938, %v2932
        %v3749 = vpack.c.bf16 %v2939, %v2933
        %v3750 = vpack.c.bf16 %v2940, %v2934
        %v3751 = vpack.c.bf16 %v2947, %v2941
        %v3752 = vpack.c.bf16 %v2948, %v2942
        %v3753 = vpack.c.bf16 %v2949, %v2943
        %v3754 = vpack.c.bf16 %v2950, %v2944
        %v3755 = vpack.c.bf16 %v2951, %v2945
        %v3756 = vpack.c.bf16 %v2952, %v2946
        %v3757 = vpack.c.bf16 %v2959, %v2953
        %v3758 = vpack.c.bf16 %v2960, %v2954
        %v3759 = vpack.c.bf16 %v2961, %v2955
        %v3760 = vpack.c.bf16 %v2962, %v2956
        %v3761 = vpack.c.bf16 %v2963, %v2957
        %v3762 = vpack.c.bf16 %v2964, %v2958
        %v3763 = vpack.c.bf16 %v2971, %v2965
        %v3764 = vpack.c.bf16 %v2972, %v2966
        %v3765 = vpack.c.bf16 %v2973, %v2967
        %v3766 = vpack.c.bf16 %v2974, %v2968
        %v3767 = vpack.c.bf16 %v2975, %v2969
        %v3768 = vpack.c.bf16 %v2976, %v2970
        %v3769 = vpack.c.bf16 %v2983, %v2977
        %v3770 = vpack.c.bf16 %v2984, %v2978
        %v3771 = vpack.c.bf16 %v2985, %v2979
        %v3772 = vpack.c.bf16 %v2986, %v2980
        %v3773 = vpack.c.bf16 %v2987, %v2981
        %v3774 = vpack.c.bf16 %v2988, %v2982
        %v3775 = vpack.c.bf16 %v2995, %v2989
        %v3776 = vpack.c.bf16 %v2996, %v2990
        %v3777 = vpack.c.bf16 %v2997, %v2991
        %v3778 = vpack.c.bf16 %v2998, %v2992
        %v3779 = vpack.c.bf16 %v2999, %v2993
        %v3780 = vpack.c.bf16 %v3000, %v2994
        %v3781 = vpack.c.bf16 %v3007, %v3001
        %v3782 = vpack.c.bf16 %v3008, %v3002
        %v3783 = vpack.c.bf16 %v3009, %v3003
        %v3784 = vpack.c.bf16 %v3010, %v3004
        %v3785 = vpack.c.bf16 %v3011, %v3005
        %v3786 = vpack.c.bf16 %v3012, %v3006
        %v3787 = vpack.c.bf16 %v3019, %v3013
        %v3788 = vpack.c.bf16 %v3020, %v3014
        %v3789 = vpack.c.bf16 %v3021, %v3015
        %v3790 = vpack.c.bf16 %v3022, %v3016
        %v3791 = vpack.c.bf16 %v3023, %v3017
        %v3792 = vpack.c.bf16 %v3024, %v3018
        %v3793 = vpack.c.bf16 %v3031, %v3025
        %v3794 = vpack.c.bf16 %v3032, %v3026
        %v3795 = vpack.c.bf16 %v3033, %v3027
        %v3796 = vpack.c.bf16 %v3034, %v3028
        %v3797 = vpack.c.bf16 %v3035, %v3029
        %v3798 = vpack.c.bf16 %v3036, %v3030
        %v3799 = vpack.c.bf16 %v3043, %v3037
        %v3800 = vpack.c.bf16 %v3044, %v3038
        %v3801 = vpack.c.bf16 %v3045, %v3039
        %v3802 = vpack.c.bf16 %v3046, %v3040
        %v3803 = vpack.c.bf16 %v3047, %v3041
        %v3804 = vpack.c.bf16 %v3048, %v3042
        %v3805 = vpack.c.bf16 %v3055, %v3049
        %v3806 = vpack.c.bf16 %v3056, %v3050
        %v3807 = vpack.c.bf16 %v3057, %v3051
        %v3808 = vpack.c.bf16 %v3058, %v3052
        %v3809 = vpack.c.bf16 %v3059, %v3053
        %v3810 = vpack.c.bf16 %v3060, %v3054
        %v3811 = vpack.c.bf16 %v3067, %v3061
        %v3812 = vpack.c.bf16 %v3068, %v3062
        %v3813 = vpack.c.bf16 %v3069, %v3063
        %v3814 = vpack.c.bf16 %v3070, %v3064
        %v3815 = vpack.c.bf16 %v3071, %v3065
        %v3816 = vpack.c.bf16 %v3072, %v3066
        %v3817 = vpack.c.bf16 %v3079, %v3073
        %v3818 = vpack.c.bf16 %v3080, %v3074
        %v3819 = vpack.c.bf16 %v3081, %v3075
        %v3820 = vpack.c.bf16 %v3082, %v3076
        %v3821 = vpack.c.bf16 %v3083, %v3077
        %v3822 = vpack.c.bf16 %v3084, %v3078
        %v3823 = vpack.c.bf16 %v3091, %v3085
        %v3824 = vpack.c.bf16 %v3092, %v3086
        %v3825 = vpack.c.bf16 %v3093, %v3087
        %v3826 = vpack.c.bf16 %v3094, %v3088
        %v3827 = vpack.c.bf16 %v3095, %v3089
        %v3828 = vpack.c.bf16 %v3096, %v3090
        %v3829 = vpack.c.bf16 %v3103, %v3097
        %v3830 = vpack.c.bf16 %v3104, %v3098
        %v3831 = vpack.c.bf16 %v3105, %v3099
        %v3832 = vpack.c.bf16 %v3106, %v3100
        %v3833 = vpack.c.bf16 %v3107, %v3101
        %v3834 = vpack.c.bf16 %v3108, %v3102
        %v3835 = vpack.c.bf16 %v3115, %v3109
        %v3836 = vpack.c.bf16 %v3116, %v3110
        %v3837 = vpack.c.bf16 %v3117, %v3111
        %v3838 = vpack.c.bf16 %v3118, %v3112
        %v3839 = vpack.c.bf16 %v3119, %v3113
        %v3840 = vpack.c.bf16 %v3120, %v3114
        %v3841 = vpack.c.bf16 %v3127, %v3121
        %v3842 = vpack.c.bf16 %v3128, %v3122
        %v3843 = vpack.c.bf16 %v3129, %v3123
        %v3844 = vpack.c.bf16 %v3130, %v3124
        %v3845 = vpack.c.bf16 %v3131, %v3125
        %v3846 = vpack.c.bf16 %v3132, %v3126
        %v3847 = vpack.c.bf16 %v3139, %v3133
        %v3848 = vpack.c.bf16 %v3140, %v3134
        %v3849 = vpack.c.bf16 %v3141, %v3135
        %v3850 = vpack.c.bf16 %v3142, %v3136
        %v3851 = vpack.c.bf16 %v3143, %v3137
        %v3852 = vpack.c.bf16 %v3144, %v3138
        %v3853 = vpack.c.bf16 %v3151, %v3145
        %v3854 = vpack.c.bf16 %v3152, %v3146
        %v3855 = vpack.c.bf16 %v3153, %v3147
        %v3856 = vpack.c.bf16 %v3154, %v3148
        %v3857 = vpack.c.bf16 %v3155, %v3149
        %v3858 = vpack.c.bf16 %v3156, %v3150
        %v3859 = vpack.c.bf16 %v3163, %v3157
        %v3860 = vpack.c.bf16 %v3164, %v3158
        %v3861 = vpack.c.bf16 %v3165, %v3159
        %v3862 = vpack.c.bf16 %v3166, %v3160
        %v3863 = vpack.c.bf16 %v3167, %v3161
        %v3864 = vpack.c.bf16 %v3168, %v3162
        %v3865 = vpack.c.bf16 %v3175, %v3169
        %v3866 = vpack.c.bf16 %v3176, %v3170
        %v3867 = vpack.c.bf16 %v3177, %v3171
        %v3868 = vpack.c.bf16 %v3178, %v3172
        %v3869 = vpack.c.bf16 %v3179, %v3173
        %v3870 = vpack.c.bf16 %v3180, %v3174
        %v3871 = vpack.c.bf16 %v3187, %v3181
        %v3872 = vpack.c.bf16 %v3188, %v3182
        %v3873 = vpack.c.bf16 %v3189, %v3183
        %v3874 = vpack.c.bf16 %v3190, %v3184
        %v3875 = vpack.c.bf16 %v3191, %v3185
        %v3876 = vpack.c.bf16 %v3192, %v3186
        %v3877 = vpack.c.bf16 %v3199, %v3193
        %v3878 = vpack.c.bf16 %v3200, %v3194
        %v3879 = vpack.c.bf16 %v3201, %v3195
        %v3880 = vpack.c.bf16 %v3202, %v3196
        %v3881 = vpack.c.bf16 %v3203, %v3197
        %v3882 = vpack.c.bf16 %v3204, %v3198
        %v3883 = vpack.c.bf16 %v3211, %v3205
        %v3884 = vpack.c.bf16 %v3212, %v3206
        %v3885 = vpack.c.bf16 %v3213, %v3207
        %v3886 = vpack.c.bf16 %v3214, %v3208
        %v3887 = vpack.c.bf16 %v3215, %v3209
        %v3888 = vpack.c.bf16 %v3216, %v3210
        %v3889 = vpack.c.bf16 %v3223, %v3217
        %v3890 = vpack.c.bf16 %v3224, %v3218
        %v3891 = vpack.c.bf16 %v3225, %v3219
        %v3892 = vpack.c.bf16 %v3226, %v3220
        %v3893 = vpack.c.bf16 %v3227, %v3221
        %v3894 = vpack.c.bf16 %v3228, %v3222
        %v3895 = vpack.c.bf16 %v3235, %v3229
        %v3896 = vpack.c.bf16 %v3236, %v3230
        %v3897 = vpack.c.bf16 %v3237, %v3231
        %v3898 = vpack.c.bf16 %v3238, %v3232
        %v3899 = vpack.c.bf16 %v3239, %v3233
        %v3900 = vpack.c.bf16 %v3240, %v3234
        %v3901 = vpack.c.bf16 %v3247, %v3241
        %v3902 = vpack.c.bf16 %v3248, %v3242
        %v3903 = vpack.c.bf16 %v3249, %v3243
        %v3904 = vpack.c.bf16 %v3250, %v3244
        %v3905 = vpack.c.bf16 %v3251, %v3245
        %v3906 = vpack.c.bf16 %v3252, %v3246
        %v3907 = vpack.c.bf16 %v3259, %v3253
        %v3908 = vpack.c.bf16 %v3260, %v3254
        %v3909 = vpack.c.bf16 %v3261, %v3255
        %v3910 = vpack.c.bf16 %v3262, %v3256
        %v3911 = vpack.c.bf16 %v3263, %v3257
        %v3912 = vpack.c.bf16 %v3264, %v3258
        %v3913 = vpack.c.bf16 %v3271, %v3265
        %v3914 = vpack.c.bf16 %v3272, %v3266
        %v3915 = vpack.c.bf16 %v3273, %v3267
        %v3916 = vpack.c.bf16 %v3274, %v3268
        %v3917 = vpack.c.bf16 %v3275, %v3269
        %v3918 = vpack.c.bf16 %v3276, %v3270
        %v3919 = vpack.c.bf16 %v3283, %v3277
        %v3920 = vpack.c.bf16 %v3284, %v3278
        %v3921 = vpack.c.bf16 %v3285, %v3279
        %v3922 = vpack.c.bf16 %v3286, %v3280
        %v3923 = vpack.c.bf16 %v3287, %v3281
        %v3924 = vpack.c.bf16 %v3288, %v3282
        %v3925 = vpack.c.bf16 %v3295, %v3289
        %v3926 = vpack.c.bf16 %v3296, %v3290
        %v3927 = vpack.c.bf16 %v3297, %v3291
        %v3928 = vpack.c.bf16 %v3298, %v3292
        %v3929 = vpack.c.bf16 %v3299, %v3293
        %v3930 = vpack.c.bf16 %v3300, %v3294
        %v3931 = vpack.c.bf16 %v3307, %v3301
        %v3932 = vpack.c.bf16 %v3308, %v3302
        %v3933 = vpack.c.bf16 %v3309, %v3303
        %v3934 = vpack.c.bf16 %v3310, %v3304
        %v3935 = vpack.c.bf16 %v3311, %v3305
        %v3936 = vpack.c.bf16 %v3312, %v3306
        %v3937 = vpack.c.bf16 %v3319, %v3313
        %v3938 = vpack.c.bf16 %v3320, %v3314
        %v3939 = vpack.c.bf16 %v3321, %v3315
        %v3940 = vpack.c.bf16 %v3322, %v3316
        %v3941 = vpack.c.bf16 %v3323, %v3317
        %v3942 = vpack.c.bf16 %v3324, %v3318
        %v3943 = vpack.c.bf16 %v3331, %v3325
        %v3944 = vpack.c.bf16 %v3332, %v3326
        %v3945 = vpack.c.bf16 %v3333, %v3327
        %v3946 = vpack.c.bf16 %v3334, %v3328
        %v3947 = vpack.c.bf16 %v3335, %v3329
        %v3948 = vpack.c.bf16 %v3336, %v3330
        %v3949 = vpack.c.bf16 %v3343, %v3337
        %v3950 = vpack.c.bf16 %v3344, %v3338
        %v3951 = vpack.c.bf16 %v3345, %v3339
        %v3952 = vpack.c.bf16 %v3346, %v3340
        %v3953 = vpack.c.bf16 %v3347, %v3341
        %v3954 = vpack.c.bf16 %v3348, %v3342
        %v3955 = vpack.c.bf16 %v3355, %v3349
        %v3956 = vpack.c.bf16 %v3356, %v3350
        %v3957 = vpack.c.bf16 %v3357, %v3351
        %v3958 = vpack.c.bf16 %v3358, %v3352
        %v3959 = vpack.c.bf16 %v3359, %v3353
        %v3960 = vpack.c.bf16 %v3360, %v3354
        %v3961 = vpack.c.bf16 %v3367, %v3361
        %v3962 = vpack.c.bf16 %v3368, %v3362
        %v3963 = vpack.c.bf16 %v3369, %v3363
        %v3964 = vpack.c.bf16 %v3370, %v3364
        %v3965 = vpack.c.bf16 %v3371, %v3365
        %v3966 = vpack.c.bf16 %v3372, %v3366
        %v3967 = vpack.c.bf16 %v3379, %v3373
        %v3968 = vpack.c.bf16 %v3380, %v3374
        %v3969 = vpack.c.bf16 %v3381, %v3375
        %v3970 = vpack.c.bf16 %v3382, %v3376
        %v3971 = vpack.c.bf16 %v3383, %v3377
        %v3972 = vpack.c.bf16 %v3384, %v3378
        %v3973 = vpack.c.bf16 %v3391, %v3385
        %v3974 = vpack.c.bf16 %v3392, %v3386
        %v3975 = vpack.c.bf16 %v3393, %v3387
        %v3976 = vpack.c.bf16 %v3394, %v3388
        %v3977 = vpack.c.bf16 %v3395, %v3389
        %v3978 = vpack.c.bf16 %v3396, %v3390
        %v3979 = vpack.c.bf16 %v3403, %v3397
        %v3980 = vpack.c.bf16 %v3404, %v3398
        %v3981 = vpack.c.bf16 %v3405, %v3399
        %v3982 = vpack.c.bf16 %v3406, %v3400
        %v3983 = vpack.c.bf16 %v3407, %v3401
        %v3984 = vpack.c.bf16 %v3408, %v3402
        %3985 = vmatpush.bf16.msra.mxu0 %v3451
        %3986 = vmatpush.bf16.msra.mxu0 %v3445
        %3987 = vmatpush.bf16.msra.mxu0 %v3439
        %3988 = vmatpush.bf16.msra.mxu0 %v3433
        %3989 = vmatpush.bf16.msra.mxu0 %v3427
        %3990 = vmatpush.bf16.msra.mxu0 %v3421
        %3991 = vmatpush.bf16.msra.mxu0 %v3415
        %3992 = vmatpush.bf16.msra.mxu0 %v3409
        %3993 = vmatmul.bf16.gmra.mxu0 %v805
        %v3994 = vpop.f32.mrf.mxu0
        %v3995 = vadd.f32 0.0, %v3994
        %v3996 = vpop.f32.mrf.mxu0
        %3997 = vdwg.mxu0
        %3998 = vmatpush.bf16.msra.mxu0 %v3499
        %3999 = vmatpush.bf16.msra.mxu0 %v3493
        %4000 = vmatpush.bf16.msra.mxu0 %v3487
        %4001 = vmatpush.bf16.msra.mxu0 %v3481
        %4002 = vmatpush.bf16.msra.mxu0 %v3475
        %4003 = vmatpush.bf16.msra.mxu0 %v3469
        %4004 = vmatpush.bf16.msra.mxu0 %v3463
        %4005 = vmatpush.bf16.msra.mxu0 %v3457
        %4006 = vmatmul.bf16.gmra.mxu0 %v806
        %v4007 = vpop.f32.mrf.mxu0
        %v4008 = vadd.f32 %v3995, %v4007
        %v4009 = vpop.f32.mrf.mxu0
        %4010 = vdwg.mxu0
        %4011 = vmatpush.bf16.msra.mxu0 %v3547
        %4012 = vmatpush.bf16.msra.mxu0 %v3541
        %4013 = vmatpush.bf16.msra.mxu0 %v3535
        %4014 = vmatpush.bf16.msra.mxu0 %v3529
        %4015 = vmatpush.bf16.msra.mxu0 %v3523
        %4016 = vmatpush.bf16.msra.mxu0 %v3517
        %4017 = vmatpush.bf16.msra.mxu0 %v3511
        %4018 = vmatpush.bf16.msra.mxu0 %v3505
        %4019 = vmatmul.bf16.gmra.mxu0 %v807
        %v4020 = vpop.f32.mrf.mxu0
        %v4021 = vadd.f32 %v4008, %v4020
        %v4022 = vpop.f32.mrf.mxu0
        %4023 = vdwg.mxu0
        %4024 = vmatpush.bf16.msra.mxu0 %v3595
        %4025 = vmatpush.bf16.msra.mxu0 %v3589
        %4026 = vmatpush.bf16.msra.mxu0 %v3583
        %4027 = vmatpush.bf16.msra.mxu0 %v3577
        %4028 = vmatpush.bf16.msra.mxu0 %v3571
        %4029 = vmatpush.bf16.msra.mxu0 %v3565
        %4030 = vmatpush.bf16.msra.mxu0 %v3559
        %4031 = vmatpush.bf16.msra.mxu0 %v3553
        %4032 = vmatmul.bf16.gmra.mxu0 %v808
        %v4033 = vpop.f32.mrf.mxu0
        %v4034 = vadd.f32 %v4021, %v4033
        %v4035 = vpop.f32.mrf.mxu0
        %4036 = vdwg.mxu0
        %4037 = vmatpush.bf16.msra.mxu0 %v3643
        %4038 = vmatpush.bf16.msra.mxu0 %v3637
        %4039 = vmatpush.bf16.msra.mxu0 %v3631
        %4040 = vmatpush.bf16.msra.mxu0 %v3625
        %4041 = vmatpush.bf16.msra.mxu0 %v3619
        %4042 = vmatpush.bf16.msra.mxu0 %v3613
        %4043 = vmatpush.bf16.msra.mxu0 %v3607
        %4044 = vmatpush.bf16.msra.mxu0 %v3601
        %4045 = vmatmul.bf16.gmra.mxu0 %v809
        %v4046 = vpop.f32.mrf.mxu0
        %v4047 = vadd.f32 %v4034, %v4046
        %v4048 = vpop.f32.mrf.mxu0
        %4049 = vdwg.mxu0
        %4050 = vmatpush.bf16.msra.mxu0 %v3691
        %4051 = vmatpush.bf16.msra.mxu0 %v3685
        %4052 = vmatpush.bf16.msra.mxu0 %v3679
        %4053 = vmatpush.bf16.msra.mxu0 %v3673
        %4054 = vmatpush.bf16.msra.mxu0 %v3667
        %4055 = vmatpush.bf16.msra.mxu0 %v3661
        %4056 = vmatpush.bf16.msra.mxu0 %v3655
        %4057 = vmatpush.bf16.msra.mxu0 %v3649
        %4058 = vmatmul.bf16.gmra.mxu0 %v810
        %v4059 = vpop.f32.mrf.mxu0
        %v4060 = vadd.f32 %v4047, %v4059
        %v4061 = vpop.f32.mrf.mxu0
        %4062 = vdwg.mxu0
        %4063 = vmatpush.bf16.msra.mxu0 %v3739
        %4064 = vmatpush.bf16.msra.mxu0 %v3733
        %4065 = vmatpush.bf16.msra.mxu0 %v3727
        %4066 = vmatpush.bf16.msra.mxu0 %v3721
        %4067 = vmatpush.bf16.msra.mxu0 %v3715
        %4068 = vmatpush.bf16.msra.mxu0 %v3709
        %4069 = vmatpush.bf16.msra.mxu0 %v3703
        %4070 = vmatpush.bf16.msra.mxu0 %v3697
        %4071 = vmatmul.bf16.gmra.mxu0 %v811
        %v4072 = vpop.f32.mrf.mxu0
        %v4073 = vadd.f32 %v4060, %v4072
        %v4074 = vpop.f32.mrf.mxu0
        %4075 = vdwg.mxu0
        %4076 = vmatpush.bf16.msra.mxu0 %v3787
        %4077 = vmatpush.bf16.msra.mxu0 %v3781
        %4078 = vmatpush.bf16.msra.mxu0 %v3775
        %4079 = vmatpush.bf16.msra.mxu0 %v3769
        %4080 = vmatpush.bf16.msra.mxu0 %v3763
        %4081 = vmatpush.bf16.msra.mxu0 %v3757
        %4082 = vmatpush.bf16.msra.mxu0 %v3751
        %4083 = vmatpush.bf16.msra.mxu0 %v3745
        %4084 = vmatmul.bf16.gmra.mxu0 %v812
        %v4085 = vpop.f32.mrf.mxu0
        %v4086 = vadd.f32 %v4073, %v4085
        %v4087 = vpop.f32.mrf.mxu0
        %4088 = vdwg.mxu0
        %4089 = vmatpush.bf16.msra.mxu0 %v3835
        %4090 = vmatpush.bf16.msra.mxu0 %v3829
        %4091 = vmatpush.bf16.msra.mxu0 %v3823
        %4092 = vmatpush.bf16.msra.mxu0 %v3817
        %4093 = vmatpush.bf16.msra.mxu0 %v3811
        %4094 = vmatpush.bf16.msra.mxu0 %v3805
        %4095 = vmatpush.bf16.msra.mxu0 %v3799
        %4096 = vmatpush.bf16.msra.mxu0 %v3793
        %4097 = vmatmul.bf16.gmra.mxu0 %v813
        %v4098 = vpop.f32.mrf.mxu0
        %v4099 = vadd.f32 %v4086, %v4098
        %v4100 = vpop.f32.mrf.mxu0
        %4101 = vdwg.mxu0
        %4102 = vmatpush.bf16.msra.mxu0 %v3883
        %4103 = vmatpush.bf16.msra.mxu0 %v3877
        %4104 = vmatpush.bf16.msra.mxu0 %v3871
        %4105 = vmatpush.bf16.msra.mxu0 %v3865
        %4106 = vmatpush.bf16.msra.mxu0 %v3859
        %4107 = vmatpush.bf16.msra.mxu0 %v3853
        %4108 = vmatpush.bf16.msra.mxu0 %v3847
        %4109 = vmatpush.bf16.msra.mxu0 %v3841
        %4110 = vmatmul.bf16.gmra.mxu0 %v814
        %v4111 = vpop.f32.mrf.mxu0
        %v4112 = vadd.f32 %v4099, %v4111
        %v4113 = vpop.f32.mrf.mxu0
        %4114 = vdwg.mxu0
        %4115 = vmatpush.bf16.msra.mxu0 %v3931
        %4116 = vmatpush.bf16.msra.mxu0 %v3925
        %4117 = vmatpush.bf16.msra.mxu0 %v3919
        %4118 = vmatpush.bf16.msra.mxu0 %v3913
        %4119 = vmatpush.bf16.msra.mxu0 %v3907
        %4120 = vmatpush.bf16.msra.mxu0 %v3901
        %4121 = vmatpush.bf16.msra.mxu0 %v3895
        %4122 = vmatpush.bf16.msra.mxu0 %v3889
        %4123 = vmatmul.bf16.gmra.mxu0 %v815
        %v4124 = vpop.f32.mrf.mxu0
        %v4125 = vadd.f32 %v4112, %v4124
        %v4126 = vpop.f32.mrf.mxu0
        %4127 = vdwg.mxu0
        %4128 = vmatpush.bf16.msra.mxu0 %v3979
        %4129 = vmatpush.bf16.msra.mxu0 %v3973
        %4130 = vmatpush.bf16.msra.mxu0 %v3967
        %4131 = vmatpush.bf16.msra.mxu0 %v3961
        %4132 = vmatpush.bf16.msra.mxu0 %v3955
        %4133 = vmatpush.bf16.msra.mxu0 %v3949
        %4134 = vmatpush.bf16.msra.mxu0 %v3943
        %4135 = vmatpush.bf16.msra.mxu0 %v3937
        %4136 = vmatmul.bf16.gmra.mxu0 %v816
        %v4137 = vpop.f32.mrf.mxu0
        %v4138 = vadd.f32 %v4125, %v4137
        %v4139 = vpop.f32.mrf.mxu0
        %4140 = vdwg.mxu0
        %4141 = vmatpush.bf16.msra.mxu0 %v3452
        %4142 = vmatpush.bf16.msra.mxu0 %v3446
        %4143 = vmatpush.bf16.msra.mxu0 %v3440
        %4144 = vmatpush.bf16.msra.mxu0 %v3434
        %4145 = vmatpush.bf16.msra.mxu0 %v3428
        %4146 = vmatpush.bf16.msra.mxu0 %v3422
        %4147 = vmatpush.bf16.msra.mxu0 %v3416
        %4148 = vmatpush.bf16.msra.mxu0 %v3410
        %4149 = vmatmul.bf16.gmra.mxu0 %v805
        %v4150 = vpop.f32.mrf.mxu0
        %v4151 = vadd.f32 0.0, %v4150
        %v4152 = vpop.f32.mrf.mxu0
        %4153 = vdwg.mxu0
        %4154 = vmatpush.bf16.msra.mxu0 %v3500
        %4155 = vmatpush.bf16.msra.mxu0 %v3494
        %4156 = vmatpush.bf16.msra.mxu0 %v3488
        %4157 = vmatpush.bf16.msra.mxu0 %v3482
        %4158 = vmatpush.bf16.msra.mxu0 %v3476
        %4159 = vmatpush.bf16.msra.mxu0 %v3470
        %4160 = vmatpush.bf16.msra.mxu0 %v3464
        %4161 = vmatpush.bf16.msra.mxu0 %v3458
        %4162 = vmatmul.bf16.gmra.mxu0 %v806
        %v4163 = vpop.f32.mrf.mxu0
        %v4164 = vadd.f32 %v4151, %v4163
        %v4165 = vpop.f32.mrf.mxu0
        %4166 = vdwg.mxu0
        %4167 = vmatpush.bf16.msra.mxu0 %v3548
        %4168 = vmatpush.bf16.msra.mxu0 %v3542
        %4169 = vmatpush.bf16.msra.mxu0 %v3536
        %4170 = vmatpush.bf16.msra.mxu0 %v3530
        %4171 = vmatpush.bf16.msra.mxu0 %v3524
        %4172 = vmatpush.bf16.msra.mxu0 %v3518
        %4173 = vmatpush.bf16.msra.mxu0 %v3512
        %4174 = vmatpush.bf16.msra.mxu0 %v3506
        %4175 = vmatmul.bf16.gmra.mxu0 %v807
        %v4176 = vpop.f32.mrf.mxu0
        %v4177 = vadd.f32 %v4164, %v4176
        %v4178 = vpop.f32.mrf.mxu0
        %4179 = vdwg.mxu0
        %4180 = vmatpush.bf16.msra.mxu0 %v3596
        %4181 = vmatpush.bf16.msra.mxu0 %v3590
        %4182 = vmatpush.bf16.msra.mxu0 %v3584
        %4183 = vmatpush.bf16.msra.mxu0 %v3578
        %4184 = vmatpush.bf16.msra.mxu0 %v3572
        %4185 = vmatpush.bf16.msra.mxu0 %v3566
        %4186 = vmatpush.bf16.msra.mxu0 %v3560
        %4187 = vmatpush.bf16.msra.mxu0 %v3554
        %4188 = vmatmul.bf16.gmra.mxu0 %v808
        %v4189 = vpop.f32.mrf.mxu0
        %v4190 = vadd.f32 %v4177, %v4189
        %v4191 = vpop.f32.mrf.mxu0
        %4192 = vdwg.mxu0
        %4193 = vmatpush.bf16.msra.mxu0 %v3644
        %4194 = vmatpush.bf16.msra.mxu0 %v3638
        %4195 = vmatpush.bf16.msra.mxu0 %v3632
        %4196 = vmatpush.bf16.msra.mxu0 %v3626
        %4197 = vmatpush.bf16.msra.mxu0 %v3620
        %4198 = vmatpush.bf16.msra.mxu0 %v3614
        %4199 = vmatpush.bf16.msra.mxu0 %v3608
        %4200 = vmatpush.bf16.msra.mxu0 %v3602
        %4201 = vmatmul.bf16.gmra.mxu0 %v809
        %v4202 = vpop.f32.mrf.mxu0
        %v4203 = vadd.f32 %v4190, %v4202
        %v4204 = vpop.f32.mrf.mxu0
        %4205 = vdwg.mxu0
        %4206 = vmatpush.bf16.msra.mxu0 %v3692
        %4207 = vmatpush.bf16.msra.mxu0 %v3686
        %4208 = vmatpush.bf16.msra.mxu0 %v3680
        %4209 = vmatpush.bf16.msra.mxu0 %v3674
        %4210 = vmatpush.bf16.msra.mxu0 %v3668
        %4211 = vmatpush.bf16.msra.mxu0 %v3662
        %4212 = vmatpush.bf16.msra.mxu0 %v3656
        %4213 = vmatpush.bf16.msra.mxu0 %v3650
        %4214 = vmatmul.bf16.gmra.mxu0 %v810
        %v4215 = vpop.f32.mrf.mxu0
        %v4216 = vadd.f32 %v4203, %v4215
        %v4217 = vpop.f32.mrf.mxu0
        %4218 = vdwg.mxu0
        %4219 = vmatpush.bf16.msra.mxu0 %v3740
        %4220 = vmatpush.bf16.msra.mxu0 %v3734
        %4221 = vmatpush.bf16.msra.mxu0 %v3728
        %4222 = vmatpush.bf16.msra.mxu0 %v3722
        %4223 = vmatpush.bf16.msra.mxu0 %v3716
        %4224 = vmatpush.bf16.msra.mxu0 %v3710
        %4225 = vmatpush.bf16.msra.mxu0 %v3704
        %4226 = vmatpush.bf16.msra.mxu0 %v3698
        %4227 = vmatmul.bf16.gmra.mxu0 %v811
        %v4228 = vpop.f32.mrf.mxu0
        %v4229 = vadd.f32 %v4216, %v4228
        %v4230 = vpop.f32.mrf.mxu0
        %4231 = vdwg.mxu0
        %4232 = vmatpush.bf16.msra.mxu0 %v3788
        %4233 = vmatpush.bf16.msra.mxu0 %v3782
        %4234 = vmatpush.bf16.msra.mxu0 %v3776
        %4235 = vmatpush.bf16.msra.mxu0 %v3770
        %4236 = vmatpush.bf16.msra.mxu0 %v3764
        %4237 = vmatpush.bf16.msra.mxu0 %v3758
        %4238 = vmatpush.bf16.msra.mxu0 %v3752
        %4239 = vmatpush.bf16.msra.mxu0 %v3746
        %4240 = vmatmul.bf16.gmra.mxu0 %v812
        %v4241 = vpop.f32.mrf.mxu0
        %v4242 = vadd.f32 %v4229, %v4241
        %v4243 = vpop.f32.mrf.mxu0
        %4244 = vdwg.mxu0
        %4245 = vmatpush.bf16.msra.mxu0 %v3836
        %4246 = vmatpush.bf16.msra.mxu0 %v3830
        %4247 = vmatpush.bf16.msra.mxu0 %v3824
        %4248 = vmatpush.bf16.msra.mxu0 %v3818
        %4249 = vmatpush.bf16.msra.mxu0 %v3812
        %4250 = vmatpush.bf16.msra.mxu0 %v3806
        %4251 = vmatpush.bf16.msra.mxu0 %v3800
        %4252 = vmatpush.bf16.msra.mxu0 %v3794
        %4253 = vmatmul.bf16.gmra.mxu0 %v813
        %v4254 = vpop.f32.mrf.mxu0
        %v4255 = vadd.f32 %v4242, %v4254
        %v4256 = vpop.f32.mrf.mxu0
        %4257 = vdwg.mxu0
        %4258 = vmatpush.bf16.msra.mxu0 %v3884
        %4259 = vmatpush.bf16.msra.mxu0 %v3878
        %4260 = vmatpush.bf16.msra.mxu0 %v3872
        %4261 = vmatpush.bf16.msra.mxu0 %v3866
        %4262 = vmatpush.bf16.msra.mxu0 %v3860
        %4263 = vmatpush.bf16.msra.mxu0 %v3854
        %4264 = vmatpush.bf16.msra.mxu0 %v3848
        %4265 = vmatpush.bf16.msra.mxu0 %v3842
        %4266 = vmatmul.bf16.gmra.mxu0 %v814
        %v4267 = vpop.f32.mrf.mxu0
        %v4268 = vadd.f32 %v4255, %v4267
        %v4269 = vpop.f32.mrf.mxu0
        %4270 = vdwg.mxu0
        %4271 = vmatpush.bf16.msra.mxu0 %v3932
        %4272 = vmatpush.bf16.msra.mxu0 %v3926
        %4273 = vmatpush.bf16.msra.mxu0 %v3920
        %4274 = vmatpush.bf16.msra.mxu0 %v3914
        %4275 = vmatpush.bf16.msra.mxu0 %v3908
        %4276 = vmatpush.bf16.msra.mxu0 %v3902
        %4277 = vmatpush.bf16.msra.mxu0 %v3896
        %4278 = vmatpush.bf16.msra.mxu0 %v3890
        %4279 = vmatmul.bf16.gmra.mxu0 %v815
        %v4280 = vpop.f32.mrf.mxu0
        %v4281 = vadd.f32 %v4268, %v4280
        %v4282 = vpop.f32.mrf.mxu0
        %4283 = vdwg.mxu0
        %4284 = vmatpush.bf16.msra.mxu0 %v3980
        %4285 = vmatpush.bf16.msra.mxu0 %v3974
        %4286 = vmatpush.bf16.msra.mxu0 %v3968
        %4287 = vmatpush.bf16.msra.mxu0 %v3962
        %4288 = vmatpush.bf16.msra.mxu0 %v3956
        %4289 = vmatpush.bf16.msra.mxu0 %v3950
        %4290 = vmatpush.bf16.msra.mxu0 %v3944
        %4291 = vmatpush.bf16.msra.mxu0 %v3938
        %4292 = vmatmul.bf16.gmra.mxu0 %v816
        %v4293 = vpop.f32.mrf.mxu0
        %v4294 = vadd.f32 %v4281, %v4293
        %v4295 = vpop.f32.mrf.mxu0
        %4296 = vdwg.mxu0
        %4297 = vmatpush.bf16.msra.mxu0 %v3453
        %4298 = vmatpush.bf16.msra.mxu0 %v3447
        %4299 = vmatpush.bf16.msra.mxu0 %v3441
        %4300 = vmatpush.bf16.msra.mxu0 %v3435
        %4301 = vmatpush.bf16.msra.mxu0 %v3429
        %4302 = vmatpush.bf16.msra.mxu0 %v3423
        %4303 = vmatpush.bf16.msra.mxu0 %v3417
        %4304 = vmatpush.bf16.msra.mxu0 %v3411
        %4305 = vmatmul.bf16.gmra.mxu0 %v805
        %v4306 = vpop.f32.mrf.mxu0
        %v4307 = vadd.f32 0.0, %v4306
        %v4308 = vpop.f32.mrf.mxu0
        %4309 = vdwg.mxu0
        %4310 = vmatpush.bf16.msra.mxu0 %v3501
        %4311 = vmatpush.bf16.msra.mxu0 %v3495
        %4312 = vmatpush.bf16.msra.mxu0 %v3489
        %4313 = vmatpush.bf16.msra.mxu0 %v3483
        %4314 = vmatpush.bf16.msra.mxu0 %v3477
        %4315 = vmatpush.bf16.msra.mxu0 %v3471
        %4316 = vmatpush.bf16.msra.mxu0 %v3465
        %4317 = vmatpush.bf16.msra.mxu0 %v3459
        %4318 = vmatmul.bf16.gmra.mxu0 %v806
        %v4319 = vpop.f32.mrf.mxu0
        %v4320 = vadd.f32 %v4307, %v4319
        %v4321 = vpop.f32.mrf.mxu0
        %4322 = vdwg.mxu0
        %4323 = vmatpush.bf16.msra.mxu0 %v3549
        %4324 = vmatpush.bf16.msra.mxu0 %v3543
        %4325 = vmatpush.bf16.msra.mxu0 %v3537
        %4326 = vmatpush.bf16.msra.mxu0 %v3531
        %4327 = vmatpush.bf16.msra.mxu0 %v3525
        %4328 = vmatpush.bf16.msra.mxu0 %v3519
        %4329 = vmatpush.bf16.msra.mxu0 %v3513
        %4330 = vmatpush.bf16.msra.mxu0 %v3507
        %4331 = vmatmul.bf16.gmra.mxu0 %v807
        %v4332 = vpop.f32.mrf.mxu0
        %v4333 = vadd.f32 %v4320, %v4332
        %v4334 = vpop.f32.mrf.mxu0
        %4335 = vdwg.mxu0
        %4336 = vmatpush.bf16.msra.mxu0 %v3597
        %4337 = vmatpush.bf16.msra.mxu0 %v3591
        %4338 = vmatpush.bf16.msra.mxu0 %v3585
        %4339 = vmatpush.bf16.msra.mxu0 %v3579
        %4340 = vmatpush.bf16.msra.mxu0 %v3573
        %4341 = vmatpush.bf16.msra.mxu0 %v3567
        %4342 = vmatpush.bf16.msra.mxu0 %v3561
        %4343 = vmatpush.bf16.msra.mxu0 %v3555
        %4344 = vmatmul.bf16.gmra.mxu0 %v808
        %v4345 = vpop.f32.mrf.mxu0
        %v4346 = vadd.f32 %v4333, %v4345
        %v4347 = vpop.f32.mrf.mxu0
        %4348 = vdwg.mxu0
        %4349 = vmatpush.bf16.msra.mxu0 %v3645
        %4350 = vmatpush.bf16.msra.mxu0 %v3639
        %4351 = vmatpush.bf16.msra.mxu0 %v3633
        %4352 = vmatpush.bf16.msra.mxu0 %v3627
        %4353 = vmatpush.bf16.msra.mxu0 %v3621
        %4354 = vmatpush.bf16.msra.mxu0 %v3615
        %4355 = vmatpush.bf16.msra.mxu0 %v3609
        %4356 = vmatpush.bf16.msra.mxu0 %v3603
        %4357 = vmatmul.bf16.gmra.mxu0 %v809
        %v4358 = vpop.f32.mrf.mxu0
        %v4359 = vadd.f32 %v4346, %v4358
        %v4360 = vpop.f32.mrf.mxu0
        %4361 = vdwg.mxu0
        %4362 = vmatpush.bf16.msra.mxu0 %v3693
        %4363 = vmatpush.bf16.msra.mxu0 %v3687
        %4364 = vmatpush.bf16.msra.mxu0 %v3681
        %4365 = vmatpush.bf16.msra.mxu0 %v3675
        %4366 = vmatpush.bf16.msra.mxu0 %v3669
        %4367 = vmatpush.bf16.msra.mxu0 %v3663
        %4368 = vmatpush.bf16.msra.mxu0 %v3657
        %4369 = vmatpush.bf16.msra.mxu0 %v3651
        %4370 = vmatmul.bf16.gmra.mxu0 %v810
        %v4371 = vpop.f32.mrf.mxu0
        %v4372 = vadd.f32 %v4359, %v4371
        %v4373 = vpop.f32.mrf.mxu0
        %4374 = vdwg.mxu0
        %4375 = vmatpush.bf16.msra.mxu0 %v3741
        %4376 = vmatpush.bf16.msra.mxu0 %v3735
        %4377 = vmatpush.bf16.msra.mxu0 %v3729
        %4378 = vmatpush.bf16.msra.mxu0 %v3723
        %4379 = vmatpush.bf16.msra.mxu0 %v3717
        %4380 = vmatpush.bf16.msra.mxu0 %v3711
        %4381 = vmatpush.bf16.msra.mxu0 %v3705
        %4382 = vmatpush.bf16.msra.mxu0 %v3699
        %4383 = vmatmul.bf16.gmra.mxu0 %v811
        %v4384 = vpop.f32.mrf.mxu0
        %v4385 = vadd.f32 %v4372, %v4384
        %v4386 = vpop.f32.mrf.mxu0
        %4387 = vdwg.mxu0
        %4388 = vmatpush.bf16.msra.mxu0 %v3789
        %4389 = vmatpush.bf16.msra.mxu0 %v3783
        %4390 = vmatpush.bf16.msra.mxu0 %v3777
        %4391 = vmatpush.bf16.msra.mxu0 %v3771
        %4392 = vmatpush.bf16.msra.mxu0 %v3765
        %4393 = vmatpush.bf16.msra.mxu0 %v3759
        %4394 = vmatpush.bf16.msra.mxu0 %v3753
        %4395 = vmatpush.bf16.msra.mxu0 %v3747
        %4396 = vmatmul.bf16.gmra.mxu0 %v812
        %v4397 = vpop.f32.mrf.mxu0
        %v4398 = vadd.f32 %v4385, %v4397
        %v4399 = vpop.f32.mrf.mxu0
        %4400 = vdwg.mxu0
        %4401 = vmatpush.bf16.msra.mxu0 %v3837
        %4402 = vmatpush.bf16.msra.mxu0 %v3831
        %4403 = vmatpush.bf16.msra.mxu0 %v3825
        %4404 = vmatpush.bf16.msra.mxu0 %v3819
        %4405 = vmatpush.bf16.msra.mxu0 %v3813
        %4406 = vmatpush.bf16.msra.mxu0 %v3807
        %4407 = vmatpush.bf16.msra.mxu0 %v3801
        %4408 = vmatpush.bf16.msra.mxu0 %v3795
        %4409 = vmatmul.bf16.gmra.mxu0 %v813
        %v4410 = vpop.f32.mrf.mxu0
        %v4411 = vadd.f32 %v4398, %v4410
        %v4412 = vpop.f32.mrf.mxu0
        %4413 = vdwg.mxu0
        %4414 = vmatpush.bf16.msra.mxu0 %v3885
        %4415 = vmatpush.bf16.msra.mxu0 %v3879
        %4416 = vmatpush.bf16.msra.mxu0 %v3873
        %4417 = vmatpush.bf16.msra.mxu0 %v3867
        %4418 = vmatpush.bf16.msra.mxu0 %v3861
        %4419 = vmatpush.bf16.msra.mxu0 %v3855
        %4420 = vmatpush.bf16.msra.mxu0 %v3849
        %4421 = vmatpush.bf16.msra.mxu0 %v3843
        %4422 = vmatmul.bf16.gmra.mxu0 %v814
        %v4423 = vpop.f32.mrf.mxu0
        %v4424 = vadd.f32 %v4411, %v4423
        %v4425 = vpop.f32.mrf.mxu0
        %4426 = vdwg.mxu0
        %4427 = vmatpush.bf16.msra.mxu0 %v3933
        %4428 = vmatpush.bf16.msra.mxu0 %v3927
        %4429 = vmatpush.bf16.msra.mxu0 %v3921
        %4430 = vmatpush.bf16.msra.mxu0 %v3915
        %4431 = vmatpush.bf16.msra.mxu0 %v3909
        %4432 = vmatpush.bf16.msra.mxu0 %v3903
        %4433 = vmatpush.bf16.msra.mxu0 %v3897
        %4434 = vmatpush.bf16.msra.mxu0 %v3891
        %4435 = vmatmul.bf16.gmra.mxu0 %v815
        %v4436 = vpop.f32.mrf.mxu0
        %v4437 = vadd.f32 %v4424, %v4436
        %v4438 = vpop.f32.mrf.mxu0
        %4439 = vdwg.mxu0
        %4440 = vmatpush.bf16.msra.mxu0 %v3981
        %4441 = vmatpush.bf16.msra.mxu0 %v3975
        %4442 = vmatpush.bf16.msra.mxu0 %v3969
        %4443 = vmatpush.bf16.msra.mxu0 %v3963
        %4444 = vmatpush.bf16.msra.mxu0 %v3957
        %4445 = vmatpush.bf16.msra.mxu0 %v3951
        %4446 = vmatpush.bf16.msra.mxu0 %v3945
        %4447 = vmatpush.bf16.msra.mxu0 %v3939
        %4448 = vmatmul.bf16.gmra.mxu0 %v816
        %v4449 = vpop.f32.mrf.mxu0
        %v4450 = vadd.f32 %v4437, %v4449
        %v4451 = vpop.f32.mrf.mxu0
        %4452 = vdwg.mxu0
        %4453 = vmatpush.bf16.msra.mxu0 %v3454
        %4454 = vmatpush.bf16.msra.mxu0 %v3448
        %4455 = vmatpush.bf16.msra.mxu0 %v3442
        %4456 = vmatpush.bf16.msra.mxu0 %v3436
        %4457 = vmatpush.bf16.msra.mxu0 %v3430
        %4458 = vmatpush.bf16.msra.mxu0 %v3424
        %4459 = vmatpush.bf16.msra.mxu0 %v3418
        %4460 = vmatpush.bf16.msra.mxu0 %v3412
        %4461 = vmatmul.bf16.gmra.mxu0 %v805
        %v4462 = vpop.f32.mrf.mxu0
        %v4463 = vadd.f32 0.0, %v4462
        %v4464 = vpop.f32.mrf.mxu0
        %4465 = vdwg.mxu0
        %4466 = vmatpush.bf16.msra.mxu0 %v3502
        %4467 = vmatpush.bf16.msra.mxu0 %v3496
        %4468 = vmatpush.bf16.msra.mxu0 %v3490
        %4469 = vmatpush.bf16.msra.mxu0 %v3484
        %4470 = vmatpush.bf16.msra.mxu0 %v3478
        %4471 = vmatpush.bf16.msra.mxu0 %v3472
        %4472 = vmatpush.bf16.msra.mxu0 %v3466
        %4473 = vmatpush.bf16.msra.mxu0 %v3460
        %4474 = vmatmul.bf16.gmra.mxu0 %v806
        %v4475 = vpop.f32.mrf.mxu0
        %v4476 = vadd.f32 %v4463, %v4475
        %v4477 = vpop.f32.mrf.mxu0
        %4478 = vdwg.mxu0
        %4479 = vmatpush.bf16.msra.mxu0 %v3550
        %4480 = vmatpush.bf16.msra.mxu0 %v3544
        %4481 = vmatpush.bf16.msra.mxu0 %v3538
        %4482 = vmatpush.bf16.msra.mxu0 %v3532
        %4483 = vmatpush.bf16.msra.mxu0 %v3526
        %4484 = vmatpush.bf16.msra.mxu0 %v3520
        %4485 = vmatpush.bf16.msra.mxu0 %v3514
        %4486 = vmatpush.bf16.msra.mxu0 %v3508
        %4487 = vmatmul.bf16.gmra.mxu0 %v807
        %v4488 = vpop.f32.mrf.mxu0
        %v4489 = vadd.f32 %v4476, %v4488
        %v4490 = vpop.f32.mrf.mxu0
        %4491 = vdwg.mxu0
        %4492 = vmatpush.bf16.msra.mxu0 %v3598
        %4493 = vmatpush.bf16.msra.mxu0 %v3592
        %4494 = vmatpush.bf16.msra.mxu0 %v3586
        %4495 = vmatpush.bf16.msra.mxu0 %v3580
        %4496 = vmatpush.bf16.msra.mxu0 %v3574
        %4497 = vmatpush.bf16.msra.mxu0 %v3568
        %4498 = vmatpush.bf16.msra.mxu0 %v3562
        %4499 = vmatpush.bf16.msra.mxu0 %v3556
        %4500 = vmatmul.bf16.gmra.mxu0 %v808
        %v4501 = vpop.f32.mrf.mxu0
        %v4502 = vadd.f32 %v4489, %v4501
        %v4503 = vpop.f32.mrf.mxu0
        %4504 = vdwg.mxu0
        %4505 = vmatpush.bf16.msra.mxu0 %v3646
        %4506 = vmatpush.bf16.msra.mxu0 %v3640
        %4507 = vmatpush.bf16.msra.mxu0 %v3634
        %4508 = vmatpush.bf16.msra.mxu0 %v3628
        %4509 = vmatpush.bf16.msra.mxu0 %v3622
        %4510 = vmatpush.bf16.msra.mxu0 %v3616
        %4511 = vmatpush.bf16.msra.mxu0 %v3610
        %4512 = vmatpush.bf16.msra.mxu0 %v3604
        %4513 = vmatmul.bf16.gmra.mxu0 %v809
        %v4514 = vpop.f32.mrf.mxu0
        %v4515 = vadd.f32 %v4502, %v4514
        %v4516 = vpop.f32.mrf.mxu0
        %4517 = vdwg.mxu0
        %4518 = vmatpush.bf16.msra.mxu0 %v3694
        %4519 = vmatpush.bf16.msra.mxu0 %v3688
        %4520 = vmatpush.bf16.msra.mxu0 %v3682
        %4521 = vmatpush.bf16.msra.mxu0 %v3676
        %4522 = vmatpush.bf16.msra.mxu0 %v3670
        %4523 = vmatpush.bf16.msra.mxu0 %v3664
        %4524 = vmatpush.bf16.msra.mxu0 %v3658
        %4525 = vmatpush.bf16.msra.mxu0 %v3652
        %4526 = vmatmul.bf16.gmra.mxu0 %v810
        %v4527 = vpop.f32.mrf.mxu0
        %v4528 = vadd.f32 %v4515, %v4527
        %v4529 = vpop.f32.mrf.mxu0
        %4530 = vdwg.mxu0
        %4531 = vmatpush.bf16.msra.mxu0 %v3742
        %4532 = vmatpush.bf16.msra.mxu0 %v3736
        %4533 = vmatpush.bf16.msra.mxu0 %v3730
        %4534 = vmatpush.bf16.msra.mxu0 %v3724
        %4535 = vmatpush.bf16.msra.mxu0 %v3718
        %4536 = vmatpush.bf16.msra.mxu0 %v3712
        %4537 = vmatpush.bf16.msra.mxu0 %v3706
        %4538 = vmatpush.bf16.msra.mxu0 %v3700
        %4539 = vmatmul.bf16.gmra.mxu0 %v811
        %v4540 = vpop.f32.mrf.mxu0
        %v4541 = vadd.f32 %v4528, %v4540
        %v4542 = vpop.f32.mrf.mxu0
        %4543 = vdwg.mxu0
        %4544 = vmatpush.bf16.msra.mxu0 %v3790
        %4545 = vmatpush.bf16.msra.mxu0 %v3784
        %4546 = vmatpush.bf16.msra.mxu0 %v3778
        %4547 = vmatpush.bf16.msra.mxu0 %v3772
        %4548 = vmatpush.bf16.msra.mxu0 %v3766
        %4549 = vmatpush.bf16.msra.mxu0 %v3760
        %4550 = vmatpush.bf16.msra.mxu0 %v3754
        %4551 = vmatpush.bf16.msra.mxu0 %v3748
        %4552 = vmatmul.bf16.gmra.mxu0 %v812
        %v4553 = vpop.f32.mrf.mxu0
        %v4554 = vadd.f32 %v4541, %v4553
        %v4555 = vpop.f32.mrf.mxu0
        %4556 = vdwg.mxu0
        %4557 = vmatpush.bf16.msra.mxu0 %v3838
        %4558 = vmatpush.bf16.msra.mxu0 %v3832
        %4559 = vmatpush.bf16.msra.mxu0 %v3826
        %4560 = vmatpush.bf16.msra.mxu0 %v3820
        %4561 = vmatpush.bf16.msra.mxu0 %v3814
        %4562 = vmatpush.bf16.msra.mxu0 %v3808
        %4563 = vmatpush.bf16.msra.mxu0 %v3802
        %4564 = vmatpush.bf16.msra.mxu0 %v3796
        %4565 = vmatmul.bf16.gmra.mxu0 %v813
        %v4566 = vpop.f32.mrf.mxu0
        %v4567 = vadd.f32 %v4554, %v4566
        %v4568 = vpop.f32.mrf.mxu0
        %4569 = vdwg.mxu0
        %4570 = vmatpush.bf16.msra.mxu0 %v3886
        %4571 = vmatpush.bf16.msra.mxu0 %v3880
        %4572 = vmatpush.bf16.msra.mxu0 %v3874
        %4573 = vmatpush.bf16.msra.mxu0 %v3868
        %4574 = vmatpush.bf16.msra.mxu0 %v3862
        %4575 = vmatpush.bf16.msra.mxu0 %v3856
        %4576 = vmatpush.bf16.msra.mxu0 %v3850
        %4577 = vmatpush.bf16.msra.mxu0 %v3844
        %4578 = vmatmul.bf16.gmra.mxu0 %v814
        %v4579 = vpop.f32.mrf.mxu0
        %v4580 = vadd.f32 %v4567, %v4579
        %v4581 = vpop.f32.mrf.mxu0
        %4582 = vdwg.mxu0
        %4583 = vmatpush.bf16.msra.mxu0 %v3934
        %4584 = vmatpush.bf16.msra.mxu0 %v3928
        %4585 = vmatpush.bf16.msra.mxu0 %v3922
        %4586 = vmatpush.bf16.msra.mxu0 %v3916
        %4587 = vmatpush.bf16.msra.mxu0 %v3910
        %4588 = vmatpush.bf16.msra.mxu0 %v3904
        %4589 = vmatpush.bf16.msra.mxu0 %v3898
        %4590 = vmatpush.bf16.msra.mxu0 %v3892
        %4591 = vmatmul.bf16.gmra.mxu0 %v815
        %v4592 = vpop.f32.mrf.mxu0
        %v4593 = vadd.f32 %v4580, %v4592
        %v4594 = vpop.f32.mrf.mxu0
        %4595 = vdwg.mxu0
        %4596 = vmatpush.bf16.msra.mxu0 %v3982
        %4597 = vmatpush.bf16.msra.mxu0 %v3976
        %4598 = vmatpush.bf16.msra.mxu0 %v3970
        %4599 = vmatpush.bf16.msra.mxu0 %v3964
        %4600 = vmatpush.bf16.msra.mxu0 %v3958
        %4601 = vmatpush.bf16.msra.mxu0 %v3952
        %4602 = vmatpush.bf16.msra.mxu0 %v3946
        %4603 = vmatpush.bf16.msra.mxu0 %v3940
        %4604 = vmatmul.bf16.gmra.mxu0 %v816
        %v4605 = vpop.f32.mrf.mxu0
        %v4606 = vadd.f32 %v4593, %v4605
        %v4607 = vpop.f32.mrf.mxu0
        %4608 = vdwg.mxu0
        %4609 = vmatpush.bf16.msra.mxu0 %v3455
        %4610 = vmatpush.bf16.msra.mxu0 %v3449
        %4611 = vmatpush.bf16.msra.mxu0 %v3443
        %4612 = vmatpush.bf16.msra.mxu0 %v3437
        %4613 = vmatpush.bf16.msra.mxu0 %v3431
        %4614 = vmatpush.bf16.msra.mxu0 %v3425
        %4615 = vmatpush.bf16.msra.mxu0 %v3419
        %4616 = vmatpush.bf16.msra.mxu0 %v3413
        %4617 = vmatmul.bf16.gmra.mxu0 %v805
        %v4618 = vpop.f32.mrf.mxu0
        %v4619 = vadd.f32 0.0, %v4618
        %v4620 = vpop.f32.mrf.mxu0
        %4621 = vdwg.mxu0
        %4622 = vmatpush.bf16.msra.mxu0 %v3503
        %4623 = vmatpush.bf16.msra.mxu0 %v3497
        %4624 = vmatpush.bf16.msra.mxu0 %v3491
        %4625 = vmatpush.bf16.msra.mxu0 %v3485
        %4626 = vmatpush.bf16.msra.mxu0 %v3479
        %4627 = vmatpush.bf16.msra.mxu0 %v3473
        %4628 = vmatpush.bf16.msra.mxu0 %v3467
        %4629 = vmatpush.bf16.msra.mxu0 %v3461
        %4630 = vmatmul.bf16.gmra.mxu0 %v806
        %v4631 = vpop.f32.mrf.mxu0
        %v4632 = vadd.f32 %v4619, %v4631
        %v4633 = vpop.f32.mrf.mxu0
        %4634 = vdwg.mxu0
        %4635 = vmatpush.bf16.msra.mxu0 %v3551
        %4636 = vmatpush.bf16.msra.mxu0 %v3545
        %4637 = vmatpush.bf16.msra.mxu0 %v3539
        %4638 = vmatpush.bf16.msra.mxu0 %v3533
        %4639 = vmatpush.bf16.msra.mxu0 %v3527
        %4640 = vmatpush.bf16.msra.mxu0 %v3521
        %4641 = vmatpush.bf16.msra.mxu0 %v3515
        %4642 = vmatpush.bf16.msra.mxu0 %v3509
        %4643 = vmatmul.bf16.gmra.mxu0 %v807
        %v4644 = vpop.f32.mrf.mxu0
        %v4645 = vadd.f32 %v4632, %v4644
        %v4646 = vpop.f32.mrf.mxu0
        %4647 = vdwg.mxu0
        %4648 = vmatpush.bf16.msra.mxu0 %v3599
        %4649 = vmatpush.bf16.msra.mxu0 %v3593
        %4650 = vmatpush.bf16.msra.mxu0 %v3587
        %4651 = vmatpush.bf16.msra.mxu0 %v3581
        %4652 = vmatpush.bf16.msra.mxu0 %v3575
        %4653 = vmatpush.bf16.msra.mxu0 %v3569
        %4654 = vmatpush.bf16.msra.mxu0 %v3563
        %4655 = vmatpush.bf16.msra.mxu0 %v3557
        %4656 = vmatmul.bf16.gmra.mxu0 %v808
        %v4657 = vpop.f32.mrf.mxu0
        %v4658 = vadd.f32 %v4645, %v4657
        %v4659 = vpop.f32.mrf.mxu0
        %4660 = vdwg.mxu0
        %4661 = vmatpush.bf16.msra.mxu0 %v3647
        %4662 = vmatpush.bf16.msra.mxu0 %v3641
        %4663 = vmatpush.bf16.msra.mxu0 %v3635
        %4664 = vmatpush.bf16.msra.mxu0 %v3629
        %4665 = vmatpush.bf16.msra.mxu0 %v3623
        %4666 = vmatpush.bf16.msra.mxu0 %v3617
        %4667 = vmatpush.bf16.msra.mxu0 %v3611
        %4668 = vmatpush.bf16.msra.mxu0 %v3605
        %4669 = vmatmul.bf16.gmra.mxu0 %v809
        %v4670 = vpop.f32.mrf.mxu0
        %v4671 = vadd.f32 %v4658, %v4670
        %v4672 = vpop.f32.mrf.mxu0
        %4673 = vdwg.mxu0
        %4674 = vmatpush.bf16.msra.mxu0 %v3695
        %4675 = vmatpush.bf16.msra.mxu0 %v3689
        %4676 = vmatpush.bf16.msra.mxu0 %v3683
        %4677 = vmatpush.bf16.msra.mxu0 %v3677
        %4678 = vmatpush.bf16.msra.mxu0 %v3671
        %4679 = vmatpush.bf16.msra.mxu0 %v3665
        %4680 = vmatpush.bf16.msra.mxu0 %v3659
        %4681 = vmatpush.bf16.msra.mxu0 %v3653
        %4682 = vmatmul.bf16.gmra.mxu0 %v810
        %v4683 = vpop.f32.mrf.mxu0
        %v4684 = vadd.f32 %v4671, %v4683
        %v4685 = vpop.f32.mrf.mxu0
        %4686 = vdwg.mxu0
        %4687 = vmatpush.bf16.msra.mxu0 %v3743
        %4688 = vmatpush.bf16.msra.mxu0 %v3737
        %4689 = vmatpush.bf16.msra.mxu0 %v3731
        %4690 = vmatpush.bf16.msra.mxu0 %v3725
        %4691 = vmatpush.bf16.msra.mxu0 %v3719
        %4692 = vmatpush.bf16.msra.mxu0 %v3713
        %4693 = vmatpush.bf16.msra.mxu0 %v3707
        %4694 = vmatpush.bf16.msra.mxu0 %v3701
        %4695 = vmatmul.bf16.gmra.mxu0 %v811
        %v4696 = vpop.f32.mrf.mxu0
        %v4697 = vadd.f32 %v4684, %v4696
        %v4698 = vpop.f32.mrf.mxu0
        %4699 = vdwg.mxu0
        %4700 = vmatpush.bf16.msra.mxu0 %v3791
        %4701 = vmatpush.bf16.msra.mxu0 %v3785
        %4702 = vmatpush.bf16.msra.mxu0 %v3779
        %4703 = vmatpush.bf16.msra.mxu0 %v3773
        %4704 = vmatpush.bf16.msra.mxu0 %v3767
        %4705 = vmatpush.bf16.msra.mxu0 %v3761
        %4706 = vmatpush.bf16.msra.mxu0 %v3755
        %4707 = vmatpush.bf16.msra.mxu0 %v3749
        %4708 = vmatmul.bf16.gmra.mxu0 %v812
        %v4709 = vpop.f32.mrf.mxu0
        %v4710 = vadd.f32 %v4697, %v4709
        %v4711 = vpop.f32.mrf.mxu0
        %4712 = vdwg.mxu0
        %4713 = vmatpush.bf16.msra.mxu0 %v3839
        %4714 = vmatpush.bf16.msra.mxu0 %v3833
        %4715 = vmatpush.bf16.msra.mxu0 %v3827
        %4716 = vmatpush.bf16.msra.mxu0 %v3821
        %4717 = vmatpush.bf16.msra.mxu0 %v3815
        %4718 = vmatpush.bf16.msra.mxu0 %v3809
        %4719 = vmatpush.bf16.msra.mxu0 %v3803
        %4720 = vmatpush.bf16.msra.mxu0 %v3797
        %4721 = vmatmul.bf16.gmra.mxu0 %v813
        %v4722 = vpop.f32.mrf.mxu0
        %v4723 = vadd.f32 %v4710, %v4722
        %v4724 = vpop.f32.mrf.mxu0
        %4725 = vdwg.mxu0
        %4726 = vmatpush.bf16.msra.mxu0 %v3887
        %4727 = vmatpush.bf16.msra.mxu0 %v3881
        %4728 = vmatpush.bf16.msra.mxu0 %v3875
        %4729 = vmatpush.bf16.msra.mxu0 %v3869
        %4730 = vmatpush.bf16.msra.mxu0 %v3863
        %4731 = vmatpush.bf16.msra.mxu0 %v3857
        %4732 = vmatpush.bf16.msra.mxu0 %v3851
        %4733 = vmatpush.bf16.msra.mxu0 %v3845
        %4734 = vmatmul.bf16.gmra.mxu0 %v814
        %v4735 = vpop.f32.mrf.mxu0
        %v4736 = vadd.f32 %v4723, %v4735
        %v4737 = vpop.f32.mrf.mxu0
        %4738 = vdwg.mxu0
        %4739 = vmatpush.bf16.msra.mxu0 %v3935
        %4740 = vmatpush.bf16.msra.mxu0 %v3929
        %4741 = vmatpush.bf16.msra.mxu0 %v3923
        %4742 = vmatpush.bf16.msra.mxu0 %v3917
        %4743 = vmatpush.bf16.msra.mxu0 %v3911
        %4744 = vmatpush.bf16.msra.mxu0 %v3905
        %4745 = vmatpush.bf16.msra.mxu0 %v3899
        %4746 = vmatpush.bf16.msra.mxu0 %v3893
        %4747 = vmatmul.bf16.gmra.mxu0 %v815
        %v4748 = vpop.f32.mrf.mxu0
        %v4749 = vadd.f32 %v4736, %v4748
        %v4750 = vpop.f32.mrf.mxu0
        %4751 = vdwg.mxu0
        %4752 = vmatpush.bf16.msra.mxu0 %v3983
        %4753 = vmatpush.bf16.msra.mxu0 %v3977
        %4754 = vmatpush.bf16.msra.mxu0 %v3971
        %4755 = vmatpush.bf16.msra.mxu0 %v3965
        %4756 = vmatpush.bf16.msra.mxu0 %v3959
        %4757 = vmatpush.bf16.msra.mxu0 %v3953
        %4758 = vmatpush.bf16.msra.mxu0 %v3947
        %4759 = vmatpush.bf16.msra.mxu0 %v3941
        %4760 = vmatmul.bf16.gmra.mxu0 %v816
        %v4761 = vpop.f32.mrf.mxu0
        %v4762 = vadd.f32 %v4749, %v4761
        %v4763 = vpop.f32.mrf.mxu0
        %4764 = vdwg.mxu0
        %4765 = vmatpush.bf16.msra.mxu0 %v3456
        %4766 = vmatpush.bf16.msra.mxu0 %v3450
        %4767 = vmatpush.bf16.msra.mxu0 %v3444
        %4768 = vmatpush.bf16.msra.mxu0 %v3438
        %4769 = vmatpush.bf16.msra.mxu0 %v3432
        %4770 = vmatpush.bf16.msra.mxu0 %v3426
        %4771 = vmatpush.bf16.msra.mxu0 %v3420
        %4772 = vmatpush.bf16.msra.mxu0 %v3414
        %4773 = vmatmul.bf16.gmra.mxu0 %v805
        %v4774 = vpop.f32.mrf.mxu0
        %v4775 = vadd.f32 0.0, %v4774
        %v4776 = vpop.f32.mrf.mxu0
        %4777 = vdwg.mxu0
        %4778 = vmatpush.bf16.msra.mxu0 %v3504
        %4779 = vmatpush.bf16.msra.mxu0 %v3498
        %4780 = vmatpush.bf16.msra.mxu0 %v3492
        %4781 = vmatpush.bf16.msra.mxu0 %v3486
        %4782 = vmatpush.bf16.msra.mxu0 %v3480
        %4783 = vmatpush.bf16.msra.mxu0 %v3474
        %4784 = vmatpush.bf16.msra.mxu0 %v3468
        %4785 = vmatpush.bf16.msra.mxu0 %v3462
        %4786 = vmatmul.bf16.gmra.mxu0 %v806
        %v4787 = vpop.f32.mrf.mxu0
        %v4788 = vadd.f32 %v4775, %v4787
        %v4789 = vpop.f32.mrf.mxu0
        %4790 = vdwg.mxu0
        %4791 = vmatpush.bf16.msra.mxu0 %v3552
        %4792 = vmatpush.bf16.msra.mxu0 %v3546
        %4793 = vmatpush.bf16.msra.mxu0 %v3540
        %4794 = vmatpush.bf16.msra.mxu0 %v3534
        %4795 = vmatpush.bf16.msra.mxu0 %v3528
        %4796 = vmatpush.bf16.msra.mxu0 %v3522
        %4797 = vmatpush.bf16.msra.mxu0 %v3516
        %4798 = vmatpush.bf16.msra.mxu0 %v3510
        %4799 = vmatmul.bf16.gmra.mxu0 %v807
        %v4800 = vpop.f32.mrf.mxu0
        %v4801 = vadd.f32 %v4788, %v4800
        %v4802 = vpop.f32.mrf.mxu0
        %4803 = vdwg.mxu0
        %4804 = vmatpush.bf16.msra.mxu0 %v3600
        %4805 = vmatpush.bf16.msra.mxu0 %v3594
        %4806 = vmatpush.bf16.msra.mxu0 %v3588
        %4807 = vmatpush.bf16.msra.mxu0 %v3582
        %4808 = vmatpush.bf16.msra.mxu0 %v3576
        %4809 = vmatpush.bf16.msra.mxu0 %v3570
        %4810 = vmatpush.bf16.msra.mxu0 %v3564
        %4811 = vmatpush.bf16.msra.mxu0 %v3558
        %4812 = vmatmul.bf16.gmra.mxu0 %v808
        %v4813 = vpop.f32.mrf.mxu0
        %v4814 = vadd.f32 %v4801, %v4813
        %v4815 = vpop.f32.mrf.mxu0
        %4816 = vdwg.mxu0
        %4817 = vmatpush.bf16.msra.mxu0 %v3648
        %4818 = vmatpush.bf16.msra.mxu0 %v3642
        %4819 = vmatpush.bf16.msra.mxu0 %v3636
        %4820 = vmatpush.bf16.msra.mxu0 %v3630
        %4821 = vmatpush.bf16.msra.mxu0 %v3624
        %4822 = vmatpush.bf16.msra.mxu0 %v3618
        %4823 = vmatpush.bf16.msra.mxu0 %v3612
        %4824 = vmatpush.bf16.msra.mxu0 %v3606
        %4825 = vmatmul.bf16.gmra.mxu0 %v809
        %v4826 = vpop.f32.mrf.mxu0
        %v4827 = vadd.f32 %v4814, %v4826
        %v4828 = vpop.f32.mrf.mxu0
        %4829 = vdwg.mxu0
        %4830 = vmatpush.bf16.msra.mxu0 %v3696
        %4831 = vmatpush.bf16.msra.mxu0 %v3690
        %4832 = vmatpush.bf16.msra.mxu0 %v3684
        %4833 = vmatpush.bf16.msra.mxu0 %v3678
        %4834 = vmatpush.bf16.msra.mxu0 %v3672
        %4835 = vmatpush.bf16.msra.mxu0 %v3666
        %4836 = vmatpush.bf16.msra.mxu0 %v3660
        %4837 = vmatpush.bf16.msra.mxu0 %v3654
        %4838 = vmatmul.bf16.gmra.mxu0 %v810
        %v4839 = vpop.f32.mrf.mxu0
        %v4840 = vadd.f32 %v4827, %v4839
        %v4841 = vpop.f32.mrf.mxu0
        %4842 = vdwg.mxu0
        %4843 = vmatpush.bf16.msra.mxu0 %v3744
        %4844 = vmatpush.bf16.msra.mxu0 %v3738
        %4845 = vmatpush.bf16.msra.mxu0 %v3732
        %4846 = vmatpush.bf16.msra.mxu0 %v3726
        %4847 = vmatpush.bf16.msra.mxu0 %v3720
        %4848 = vmatpush.bf16.msra.mxu0 %v3714
        %4849 = vmatpush.bf16.msra.mxu0 %v3708
        %4850 = vmatpush.bf16.msra.mxu0 %v3702
        %4851 = vmatmul.bf16.gmra.mxu0 %v811
        %v4852 = vpop.f32.mrf.mxu0
        %v4853 = vadd.f32 %v4840, %v4852
        %v4854 = vpop.f32.mrf.mxu0
        %4855 = vdwg.mxu0
        %4856 = vmatpush.bf16.msra.mxu0 %v3792
        %4857 = vmatpush.bf16.msra.mxu0 %v3786
        %4858 = vmatpush.bf16.msra.mxu0 %v3780
        %4859 = vmatpush.bf16.msra.mxu0 %v3774
        %4860 = vmatpush.bf16.msra.mxu0 %v3768
        %4861 = vmatpush.bf16.msra.mxu0 %v3762
        %4862 = vmatpush.bf16.msra.mxu0 %v3756
        %4863 = vmatpush.bf16.msra.mxu0 %v3750
        %4864 = vmatmul.bf16.gmra.mxu0 %v812
        %v4865 = vpop.f32.mrf.mxu0
        %v4866 = vadd.f32 %v4853, %v4865
        %v4867 = vpop.f32.mrf.mxu0
        %4868 = vdwg.mxu0
        %4869 = vmatpush.bf16.msra.mxu0 %v3840
        %4870 = vmatpush.bf16.msra.mxu0 %v3834
        %4871 = vmatpush.bf16.msra.mxu0 %v3828
        %4872 = vmatpush.bf16.msra.mxu0 %v3822
        %4873 = vmatpush.bf16.msra.mxu0 %v3816
        %4874 = vmatpush.bf16.msra.mxu0 %v3810
        %4875 = vmatpush.bf16.msra.mxu0 %v3804
        %4876 = vmatpush.bf16.msra.mxu0 %v3798
        %4877 = vmatmul.bf16.gmra.mxu0 %v813
        %v4878 = vpop.f32.mrf.mxu0
        %v4879 = vadd.f32 %v4866, %v4878
        %v4880 = vpop.f32.mrf.mxu0
        %4881 = vdwg.mxu0
        %4882 = vmatpush.bf16.msra.mxu0 %v3888
        %4883 = vmatpush.bf16.msra.mxu0 %v3882
        %4884 = vmatpush.bf16.msra.mxu0 %v3876
        %4885 = vmatpush.bf16.msra.mxu0 %v3870
        %4886 = vmatpush.bf16.msra.mxu0 %v3864
        %4887 = vmatpush.bf16.msra.mxu0 %v3858
        %4888 = vmatpush.bf16.msra.mxu0 %v3852
        %4889 = vmatpush.bf16.msra.mxu0 %v3846
        %4890 = vmatmul.bf16.gmra.mxu0 %v814
        %v4891 = vpop.f32.mrf.mxu0
        %v4892 = vadd.f32 %v4879, %v4891
        %v4893 = vpop.f32.mrf.mxu0
        %4894 = vdwg.mxu0
        %4895 = vmatpush.bf16.msra.mxu0 %v3936
        %4896 = vmatpush.bf16.msra.mxu0 %v3930
        %4897 = vmatpush.bf16.msra.mxu0 %v3924
        %4898 = vmatpush.bf16.msra.mxu0 %v3918
        %4899 = vmatpush.bf16.msra.mxu0 %v3912
        %4900 = vmatpush.bf16.msra.mxu0 %v3906
        %4901 = vmatpush.bf16.msra.mxu0 %v3900
        %4902 = vmatpush.bf16.msra.mxu0 %v3894
        %4903 = vmatmul.bf16.gmra.mxu0 %v815
        %v4904 = vpop.f32.mrf.mxu0
        %v4905 = vadd.f32 %v4892, %v4904
        %v4906 = vpop.f32.mrf.mxu0
        %4907 = vdwg.mxu0
        %4908 = vmatpush.bf16.msra.mxu0 %v3984
        %4909 = vmatpush.bf16.msra.mxu0 %v3978
        %4910 = vmatpush.bf16.msra.mxu0 %v3972
        %4911 = vmatpush.bf16.msra.mxu0 %v3966
        %4912 = vmatpush.bf16.msra.mxu0 %v3960
        %4913 = vmatpush.bf16.msra.mxu0 %v3954
        %4914 = vmatpush.bf16.msra.mxu0 %v3948
        %4915 = vmatpush.bf16.msra.mxu0 %v3942
        %4916 = vmatmul.bf16.gmra.mxu0 %v816
        %v4917 = vpop.f32.mrf.mxu0
        %v4918 = vadd.f32 %v4905, %v4917
        %v4919 = vpop.f32.mrf.mxu0
        %4920 = vdwg.mxu0
        %v4921 = vld [vmem:[%s386] sm:$0x3f]
        %v4923 = vperm.slane %v4921, 0
        %v4924 = vperm.slane %v4921, 1
        %v4925 = vperm.slane %v4921, 2
        %v4926 = vperm.slane %v4921, 3
        %v4927 = vperm.slane %v4921, 4
        %v4928 = vperm.slane %v4921, 5
        %v4935 = vmul.f32 %v4138, %v4923
        %v4936 = vmul.f32 %v4294, %v4924
        %v4937 = vmul.f32 %v4450, %v4925
        %v4938 = vmul.f32 %v4606, %v4926
        %v4939 = vmul.f32 %v4762, %v4927
        %v4940 = vmul.f32 %v4918, %v4928
        %v4941 = vld [vmem:[%s396] sm:$0x3f]
        %v4943 = vperm.slane %v4941, 0
        %v4944 = vperm.slane %v4941, 1
        %v4945 = vperm.slane %v4941, 2
        %v4946 = vperm.slane %v4941, 3
        %v4947 = vperm.slane %v4941, 4
        %v4948 = vperm.slane %v4941, 5
        %v4955 = vadd.f32 %v4935, %v4943
        %v4956 = vadd.f32 %v4936, %v4944
        %v4957 = vadd.f32 %v4937, %v4945
        %v4958 = vadd.f32 %v4938, %v4946
        %v4959 = vadd.f32 %v4939, %v4947
        %v4960 = vadd.f32 %v4940, %v4948
        %v4961 = vsub.f32 0.0, %v4955
        %v4962 = vsub.f32 0.0, %v4956
        %v4963 = vsub.f32 0.0, %v4957
        %v4964 = vsub.f32 0.0, %v4958
        %v4965 = vsub.f32 0.0, %v4959
        %v4966 = vsub.f32 0.0, %v4960
        %v4967 = vmul.f32 %v4961, 1.442695
        %v4968 = vpow.pop %v4967
        %v4969 = vmul.f32 %v4962, 1.442695
        %v4970 = vpow.pop %v4969
        %v4971 = vmul.f32 %v4963, 1.442695
        %v4972 = vpow.pop %v4971
        %v4973 = vmul.f32 %v4964, 1.442695
        %v4974 = vpow.pop %v4973
        %v4975 = vmul.f32 %v4965, 1.442695
        %v4976 = vpow.pop %v4975
        %v4977 = vmul.f32 %v4966, 1.442695
        %v4978 = vpow.pop %v4977
        %v4979 = vadd.f32 %v4968, 1.0
        %v4980 = vadd.f32 %v4970, 1.0
        %v4981 = vadd.f32 %v4972, 1.0
        %v4982 = vadd.f32 %v4974, 1.0
        %v4983 = vadd.f32 %v4976, 1.0
        %v4984 = vadd.f32 %v4978, 1.0
        %v4985 = vrcp.pop %v4979
        %v4986 = vmul.f32 %v4979, %v4985
        %v4987 = vsub.f32 1.0, %v4986
        %v4988 = vmul.f32 %v4985, %v4987
        %v4989 = vadd.f32 %v4985, %v4988
        %vm4990 = vweird.f32 %v4979
        %vm4991 = vweird.f32 %v4985
        %vm4992 = vmor %vm4990, %vm4991
        %v4993 = vsel %vm4992, %v4985, %v4989
        %v4994 = vand.u32 2147483647, %v4979
        %vm4995 = vcmp.eq.f32.partialorder %v4994, 8.507059e+37
        %v4996 = vand.u32 %v4979, 2147483648
        %v4997 = vor.u32 1.1754944e-38, %v4996
        %v4998 = vsel %vm4995, %v4997, %v4993
        %v4999 = vmul.f32 1.0, %v4998
        %v5000 = vrcp.pop %v4980
        %v5001 = vmul.f32 %v4980, %v5000
        %v5002 = vsub.f32 1.0, %v5001
        %v5003 = vmul.f32 %v5000, %v5002
        %v5004 = vadd.f32 %v5000, %v5003
        %vm5005 = vweird.f32 %v4980
        %vm5006 = vweird.f32 %v5000
        %vm5007 = vmor %vm5005, %vm5006
        %v5008 = vsel %vm5007, %v5000, %v5004
        %v5009 = vand.u32 2147483647, %v4980
        %vm5010 = vcmp.eq.f32.partialorder %v5009, 8.507059e+37
        %v5011 = vand.u32 %v4980, 2147483648
        %v5012 = vor.u32 1.1754944e-38, %v5011
        %v5013 = vsel %vm5010, %v5012, %v5008
        %v5014 = vmul.f32 1.0, %v5013
        %v5015 = vrcp.pop %v4981
        %v5016 = vmul.f32 %v4981, %v5015
        %v5017 = vsub.f32 1.0, %v5016
        %v5018 = vmul.f32 %v5015, %v5017
        %v5019 = vadd.f32 %v5015, %v5018
        %vm5020 = vweird.f32 %v4981
        %vm5021 = vweird.f32 %v5015
        %vm5022 = vmor %vm5020, %vm5021
        %v5023 = vsel %vm5022, %v5015, %v5019
        %v5024 = vand.u32 2147483647, %v4981
        %vm5025 = vcmp.eq.f32.partialorder %v5024, 8.507059e+37
        %v5026 = vand.u32 %v4981, 2147483648
        %v5027 = vor.u32 1.1754944e-38, %v5026
        %v5028 = vsel %vm5025, %v5027, %v5023
        %v5029 = vmul.f32 1.0, %v5028
        %v5030 = vrcp.pop %v4982
        %v5031 = vmul.f32 %v4982, %v5030
        %v5032 = vsub.f32 1.0, %v5031
        %v5033 = vmul.f32 %v5030, %v5032
        %v5034 = vadd.f32 %v5030, %v5033
        %vm5035 = vweird.f32 %v4982
        %vm5036 = vweird.f32 %v5030
        %vm5037 = vmor %vm5035, %vm5036
        %v5038 = vsel %vm5037, %v5030, %v5034
        %v5039 = vand.u32 2147483647, %v4982
        %vm5040 = vcmp.eq.f32.partialorder %v5039, 8.507059e+37
        %v5041 = vand.u32 %v4982, 2147483648
        %v5042 = vor.u32 1.1754944e-38, %v5041
        %v5043 = vsel %vm5040, %v5042, %v5038
        %v5044 = vmul.f32 1.0, %v5043
        %v5045 = vrcp.pop %v4983
        %v5046 = vmul.f32 %v4983, %v5045
        %v5047 = vsub.f32 1.0, %v5046
        %v5048 = vmul.f32 %v5045, %v5047
        %v5049 = vadd.f32 %v5045, %v5048
        %vm5050 = vweird.f32 %v4983
        %vm5051 = vweird.f32 %v5045
        %vm5052 = vmor %vm5050, %vm5051
        %v5053 = vsel %vm5052, %v5045, %v5049
        %v5054 = vand.u32 2147483647, %v4983
        %vm5055 = vcmp.eq.f32.partialorder %v5054, 8.507059e+37
        %v5056 = vand.u32 %v4983, 2147483648
        %v5057 = vor.u32 1.1754944e-38, %v5056
        %v5058 = vsel %vm5055, %v5057, %v5053
        %v5059 = vmul.f32 1.0, %v5058
        %v5060 = vrcp.pop %v4984
        %v5061 = vmul.f32 %v4984, %v5060
        %v5062 = vsub.f32 1.0, %v5061
        %v5063 = vmul.f32 %v5060, %v5062
        %v5064 = vadd.f32 %v5060, %v5063
        %vm5065 = vweird.f32 %v4984
        %vm5066 = vweird.f32 %v5060
        %vm5067 = vmor %vm5065, %vm5066
        %v5068 = vsel %vm5067, %v5060, %v5064
        %v5069 = vand.u32 2147483647, %v4984
        %vm5070 = vcmp.eq.f32.partialorder %v5069, 8.507059e+37
        %v5071 = vand.u32 %v4984, 2147483648
        %v5072 = vor.u32 1.1754944e-38, %v5071
        %v5073 = vsel %vm5070, %v5072, %v5068
        %v5074 = vmul.f32 1.0, %v5073
        %v5075 = vld [vmem:[%s406] sm:$0x3f]
        %v5077 = vperm.slane %v5075, 0
        %v5078 = vperm.slane %v5075, 1
        %v5079 = vperm.slane %v5075, 2
        %v5080 = vperm.slane %v5075, 3
        %v5081 = vperm.slane %v5075, 4
        %v5082 = vperm.slane %v5075, 5
        %v5089 = vmul.f32 %v4999, %v5077
        %v5090 = vmul.f32 %v5014, %v5078
        %v5091 = vmul.f32 %v5029, %v5079
        %v5092 = vmul.f32 %v5044, %v5080
        %v5093 = vmul.f32 %v5059, %v5081
        %v5094 = vmul.f32 %v5074, %v5082
        %v5095 = vadd.f32 %v5089, %v5090
        %v5096 = vadd.f32 %v5095, %v5091
        %v5097 = vadd.f32 %v5096, %v5092
        %v5098 = vadd.f32 %v5097, %v5093
        %v5099 = vadd.f32 %v5098, %v5094
        %5100 = vadd.xlane.f32.xlu0 %v5099
        %v5101 = vpop.xlane.xlu0 %5100
        %vm5102 = vcmask 7168
        %5103 = vst.msk [vmem:[%s458] sm:$0xff] %vm5102, %v5101
        %p5104 = scmp.lt.s32.totalorder %s26, 1
        %s5105 = scalar_select %p5104, %s26, 1
        %s5106 = smul.addr %s5105, 8
        %s5107 = scalar_lea.vmem %s7, %s5106
        // Predicated region
        $region77: #{net_forward.1} parent=47 // pred_check
          %p5108 = pneg %p211
        $region78: #{net_forward.1} parent=47 // pred_check_branch
          %5110 = sbr.rel (%p5108) target = $region80
        $region79: #{net_forward.1} parent=47 // pred_region
          _
        $region80: #{net_forward.1} parent=47 // pred_fallthru
          _
      $region48: #{net_forward.1} parent=5 // pred_fallthru
        _
      %p5111 = scmp.le.s32.totalorder 2, %s21
      // Predicated region
      $region81: #{net_forward.1} parent=5 // pred_check
        %p5112 = pneg %p5111
      $region82: #{net_forward.1} parent=5 // pred_check_branch
        %5114 = sbr.rel (%p5112) target = $region84
      $region83: #{net_forward.1} parent=5 // pred_region
        %s5115 = ssub.s32 %s21, 2
        // Predicated region
        $region85: #{net_forward.1} parent=83 // pred_check
          %p5116 = pneg %p217
        $region86: #{net_forward.1} parent=83 // pred_check_branch
          %5118 = sbr.rel (%p5116) target = $region88
        $region87: #{net_forward.1} parent=83 // pred_region
          %p5119 = scmp.lt.s32.totalorder %s27, 1
          %s5120 = scalar_select %p5119, %s27, 1
          %s5121 = smul.addr %s5120, 8
          %s5122 = scalar_lea.vmem %s7, %s5121
        $region88: #{net_forward.1} parent=83 // pred_fallthru
          _
      $region84: #{net_forward.1} parent=5 // pred_fallthru
        _
    $region6: #{net_forward.1} parent=1 // loop_footer
      %s25 = sadd.s32 1, %s21
    $region7: #{net_forward.1} parent=1 // loop_footer_branch
      %20 = sbr.rel target = $region3
    $region8: #{net_forward.1} parent=1 // loop_exit
      _
    %5123 = vsyncpa [#allocation3], 1
    %s5124 = scalar_lea.sflag [#allocation3], 1
    %5125 = vsyncpa %s5124, 1
    %5126 = vsyncpa [#allocation5], 1
    %5127 = vsyncpa [#allocation8], 1
    %s5128 = scalar_lea.sflag [#allocation8], 1
    %5129 = vsyncpa %s5128, 1
    %5130 = vsyncpa [#allocation11], 1
    %s5131 = scalar_lea.sflag [#allocation11], 1
    %5132 = vsyncpa %s5131, 1

</llo_original>
